<compile_context>
chip_gen: v5e
topology: v5e:2x2
jax: 0.10.0
libtpu: 0.0.40
codegen_flags: <defaults>
</compile_context>

<pallas_src>
import functools

import jax
import jax.numpy as jnp
from jax import lax
from jax.experimental import pallas as pl
from jax.experimental.pallas import tpu as pltpu

_BN_EPS = 1e-5
_VMEM_LIMIT = 32 * 1024 * 1024          # fits every generation incl. v7x (64 MiB)


def _round_up(x, m):
    return (x + m - 1) // m * m


def _pick_tile(dim, prefs):
    for t in prefs:
        if dim % t == 0:
            return t
    return dim                          # full-extent block (allowed by Pallas)


# ----------------------------------------------------------------------------
# Pallas kernel 1: tiled bf16 GEMM, fused BN shift + optional residual + ReLU
# ----------------------------------------------------------------------------
def _gemm_kernel(a_ref, w_ref, shift_ref, o_ref, acc_ref, *, relu):
    @pl.when(pl.program_id(2) == 0)
    def _():
        acc_ref[...] = jnp.zeros_like(acc_ref)

    acc_ref[...] += jnp.dot(a_ref[...], w_ref[...],
                            preferred_element_type=jnp.float32)

    @pl.when(pl.program_id(2) == pl.num_programs(2) - 1)
    def _():
        y = acc_ref[...] + shift_ref[...]
        if relu:
            y = jnp.maximum(y, 0.0)
        o_ref[...] = y.astype(o_ref.dtype)


def _gemm_res_kernel(a_ref, w_ref, shift_ref, r_ref, o_ref, acc_ref, *, relu):
    @pl.when(pl.program_id(2) == 0)
    def _():
        acc_ref[...] = jnp.zeros_like(acc_ref)

    acc_ref[...] += jnp.dot(a_ref[...], w_ref[...],
                            preferred_element_type=jnp.float32)

    @pl.when(pl.program_id(2) == pl.num_programs(2) - 1)
    def _():
        y = acc_ref[...] + shift_ref[...] + r_ref[...].astype(jnp.float32)
        if relu:
            y = jnp.maximum(y, 0.0)
        o_ref[...] = y.astype(o_ref.dtype)


def _gemm_tiles(M, N, K):
    """Tile heuristic tuned per the perf review (all divisors or full extents)."""
    # Full-K tiles for small-M / large-K layers -> no reduction grid axis.
    if M <= 1024 and K >= 1024 and M * K * 2 <= (4 << 20):
        tk = K
    else:
        tk = _pick_tile(K, (512, 384, 256, 128))
    tn = _pick_tile(N, (512, 256, 128))
    # Bigger tm for the HBM-bound small-K/N GEMMs (stage 1/2 1x1s, stem).
    if K <= 256 and N <= 256 and M >= 8192 and M % 2048 == 0:
        tm = 2048
    elif K <= 512 and N <= 512 and M >= 4096 and M % 1024 == 0:
        tm = 1024
    elif M >= 2048 and M % 512 == 0:
        tm = 512
    else:
        tm = _pick_tile(M, (256, 128, 64, 32, 16, 8))
    # If all parallel axes would be extent-1, split N (feeds v7x's 2nd TC).
    if M // tm == 1 and N // tn == 1 and N >= 512 and N % 256 == 0:
        tn = 256
    return tm, tn, tk


@functools.partial(jax.jit, static_argnames=("relu", "out_dtype"))
def fused_matmul(a, w, shift, residual=None, *, relu, out_dtype=jnp.bfloat16):
    """out = act(a @ w + shift [+ residual]); shift is per output column (f32)."""
    M, K = a.shape
    Kw, N = w.shape
    assert K == Kw, (K, Kw)
    a = a.astype(jnp.bfloat16)

    tm, tn, tk = _gemm_tiles(M, N, K)
    grid = (M // tm, N // tn, K // tk)

    in_specs = [
        pl.BlockSpec((tm, tk), lambda i, j, k: (i, k)),
        pl.BlockSpec((tk, tn), lambda i, j, k: (k, j)),
        pl.BlockSpec((1, tn), lambda i, j, k: (0, j)),
    ]
    args = [a, w, shift]
    bytes_res = 0
    if residual is None:
        kernel = functools.partial(_gemm_kernel, relu=relu)
    else:
        in_specs.append(pl.BlockSpec((tm, tn), lambda i, j, k: (i, j)))
        args.append(residual.astype(jnp.bfloat16))
        bytes_res = M * N * 2
        kernel = functools.partial(_gemm_res_kernel, relu=relu)

    return pl.pallas_call(
        kernel,
        out_shape=jax.ShapeDtypeStruct((M, N), out_dtype),
        grid_spec=pltpu.PrefetchScalarGridSpec(
            num_scalar_prefetch=0,
            grid=grid,
            in_specs=in_specs,
            out_specs=pl.BlockSpec((tm, tn), lambda i, j, k: (i, j)),
            scratch_shapes=[pltpu.VMEM((tm, tn), jnp.float32)],
        ),
        compiler_params=pltpu.CompilerParams(
            dimension_semantics=("parallel", "parallel", "arbitrary"),
            vmem_limit_bytes=_VMEM_LIMIT),
        cost_estimate=pl.CostEstimate(
            flops=2 * M * N * K,
            transcendentals=0,
            bytes_accessed=2 * (M * K + K * N) + bytes_res
                           + M * N * jnp.dtype(out_dtype).itemsize),
    )(*args)


# ----------------------------------------------------------------------------
# Pallas kernel 2: stride-1 3x3 conv without im2col in HBM.
#   - width-only partial im2col (3 shifted copies) built in a VMEM scratch
#   - 3 deep MXU pushes (K = 3*Cin) instead of 9 shallow ones
#   - width crop fused into the epilogue (no post-kernel XLA slice)
# ----------------------------------------------------------------------------
def _conv3x3_kernel(a_ref, w_ref, shift_ref, o_ref, col_ref, *, wp, wout, hout,
                    relu):
    c = a_ref.shape[2]
    cout = o_ref.shape[3]
    mout = hout * wp
    rows = (hout + 2) * wp

    # Width-direction partial im2col: 3 column-shifted copies of the flat slab.
    for dw in range(3):
        col_ref[:, dw * c:(dw + 1) * c] = a_ref[0, dw:dw + rows, :]

    # 3 MXU pushes, one per kernel row.  wp is a multiple of 8, so every row
    # offset (0, wp, 2*wp) is sublane-aligned.
    acc = jnp.dot(col_ref[0:mout, :], w_ref[0],
                  preferred_element_type=jnp.float32)
    acc = acc + jnp.dot(col_ref[wp:wp + mout, :], w_ref[1],
                        preferred_element_type=jnp.float32)
    acc = acc + jnp.dot(col_ref[2 * wp:2 * wp + mout, :], w_ref[2],
                        preferred_element_type=jnp.float32)

    y = acc + shift_ref[...]
    if relu:
        y = jnp.maximum(y, 0.0)
    # wp % 8 == 0 -> this regrouping is layout-preserving; then drop the
    # padded/garbage columns (>= wout) right here in the epilogue.
    y = y.astype(o_ref.dtype).reshape(hout, wp, cout)
    o_ref[0] = y[:, :wout, :]


@functools.partial(jax.jit, static_argnames=("relu",))
def conv3x3_flat(x, p, *, relu=True):
    """3x3 / stride 1 / pad 1 conv + folded BN + ReLU, no im2col in HBM."""
    n, h, w, c = x.shape
    cout = p["w"].shape[2]
    wp = _round_up(w + 2, 8)            # padded width, multiple of 8
    # rows padded by (1, 2): the worst-case wrapped tap read (garbage columns
    # only, which are dropped in the epilogue) stays inside the slab.
    xp = jnp.pad(x.astype(jnp.bfloat16),
                 ((0, 0), (1, 2), (1, wp - w - 1), (0, 0)))
    slab = xp.reshape(n, (h + 3) * wp, c)

    return pl.pallas_call(
        functools.partial(_conv3x3_kernel, wp=wp, wout=w, hout=h, relu=relu),
        out_shape=jax.ShapeDtypeStruct((n, h, w, cout), jnp.bfloat16),
        grid_spec=pltpu.PrefetchScalarGridSpec(
            num_scalar_prefetch=0,
            grid=(n,),
            in_specs=[
                pl.BlockSpec((1, (h + 3) * wp, c), lambda b: (b, 0, 0)),
                pl.BlockSpec((3, 3 * c, cout), lambda b: (0, 0, 0)),
                pl.BlockSpec((1, cout), lambda b: (0, 0)),
            ],
            out_specs=pl.BlockSpec((1, h, w, cout), lambda b: (b, 0, 0, 0)),
            scratch_shapes=[pltpu.VMEM(((h + 2) * wp, 3 * c), jnp.bfloat16)],
        ),
        compiler_params=pltpu.CompilerParams(
            dimension_semantics=("parallel",),
            vmem_limit_bytes=_VMEM_LIMIT),
        cost_estimate=pl.CostEstimate(
            flops=2 * n * h * wp * 9 * c * cout,
            transcendentals=0,
            bytes_accessed=n * (h + 3) * wp * c * 2 + 9 * c * cout * 2
                           + n * h * w * cout * 2),
    )(slab, p["w"], p["shift"])


# ----------------------------------------------------------------------------
# Generic conv = (im2col if spatial) + fused Pallas GEMM.  Used for 1x1 convs,
# the 7x7/2 stem, the three stride-2 3x3 convs and the 4x4/2 head conv.
# ----------------------------------------------------------------------------
def _im2col(x, kh, kw, stride, pad, k_target=None):
    n, h, w, c = x.shape
    xp = jnp.pad(x, ((0, 0), (pad, pad), (pad, pad), (0, 0)))
    ho = (h + 2 * pad - kh) // stride + 1
    wo = (w + 2 * pad - kw) // stride + 1
    cols = []
    for dh in range(kh):
        for dw in range(kw):
            cols.append(xp[:, dh:dh + stride * ho:stride,
                           dw:dw + stride * wo:stride, :])
    k0 = kh * kw * c
    if k_target is not None and k_target > k0:
        # Zero-pad the contraction dim inside the same concat (no extra pass).
        cols.append(jnp.zeros((n, ho, wo, k_target - k0), x.dtype))
    return jnp.concatenate(cols, axis=-1), ho, wo


@functools.partial(jax.jit, static_argnames=("kh", "kw", "stride", "pad", "relu"))
def conv_gemm(x, p, *, kh, kw, stride, pad, relu):
    n, h, w, c = x.shape
    cout = p["w"].shape[1]
    if kh == 1 and kw == 1 and pad == 0:
        xs = x[:, ::stride, ::stride, :] if stride > 1 else x
        ho, wo = xs.shape[1], xs.shape[2]
        a = xs.reshape(-1, c)
    else:
        patches, ho, wo = _im2col(x.astype(jnp.bfloat16), kh, kw, stride, pad,
                                  k_target=p["w"].shape[0])
        a = patches.reshape(-1, p["w"].shape[0])
    y = fused_matmul(a, p["w"], p["shift"], relu=relu)
    return y.reshape(n, ho, wo, cout)


# ----------------------------------------------------------------------------
# Deterministic parameter construction (synthetic weights; no checkpoint load)
# ----------------------------------------------------------------------------
class _KeyGen:
    def __init__(self, key):
        self._key = key
        self._i = 0

    def __call__(self):
        self._i += 1
        return jax.random.fold_in(self._key, self._i)


def _conv_bn_params(key, kh, kw, cin, cout, *, flat3=False, kpad=None):
    std = (2.0 / (kh * kw * cin)) ** 0.5                   # He-normal init
    w = jax.random.normal(key, (kh, kw, cin, cout), jnp.float32) * std
    # eval-mode BatchNorm2d with default params/stats (gamma=1, beta=0,
    # running_mean=0, running_var=1), folded with the (zero) conv bias.
    gamma = jnp.ones((cout,), jnp.float32)
    beta = jnp.zeros((cout,), jnp.float32)
    mean = jnp.zeros((cout,), jnp.float32)
    var = jnp.ones((cout,), jnp.float32)
    bias = jnp.zeros((cout,), jnp.float32)
    scale = gamma / jnp.sqrt(var + _BN_EPS)
    shift = (beta + (bias - mean) * scale).reshape(1, cout)
    w = w * scale                                          # fold BN scale into W
    if flat3:
        # per kernel-row blocks ordered (dw, cin): matches the in-kernel
        # width-im2col column layout.
        w = w.reshape(3, 3 * cin, cout)
    else:
        w = w.reshape(kh * kw * cin, cout)                 # GEMM layout
        if kpad is not None and kpad > w.shape[0]:
            w = jnp.pad(w, ((0, kpad - w.shape[0]), (0, 0)))
    return {"w": w.astype(jnp.bfloat16), "shift": shift}


def _linear_params(key, cin, cout, *, npad=None):
    std = (1.0 / cin) ** 0.5
    w = jax.random.normal(key, (cin, cout), jnp.float32) * std
    nout = cout if npad is None else max(npad, cout)
    if nout > cout:
        w = jnp.pad(w, ((0, 0), (0, nout - cout)))
    return {"w": w.astype(jnp.bfloat16),
            "shift": jnp.zeros((1, nout), jnp.float32),
            "nout": cout}


def init_landmarknet_params(key):
    kg = _KeyGen(key)
    # --- ResNet-101 feature extractor (torchvision children()[:-2]) ---
    stem = _conv_bn_params(kg(), 7, 7, 3, 64, kpad=160)    # K 147 -> 160
    stages = []
    in_c = 64
    for stage_idx, (n_blocks, mid) in enumerate([(3, 64), (4, 128), (23, 256), (3, 512)]):
        out_c = mid * 4
        blocks = []
        for b in range(n_blocks):
            stride = 2 if (stage_idx > 0 and b == 0) else 1
            blocks.append({
                "c1": _conv_bn_params(kg(), 1, 1, in_c, mid),
                "c2": _conv_bn_params(kg(), 3, 3, mid, mid, flat3=(stride == 1)),
                "c3": _conv_bn_params(kg(), 1, 1, mid, out_c),
                "ds": _conv_bn_params(kg(), 1, 1, in_c, out_c) if b == 0 else None,
            })
            in_c = out_c
        stages.append(blocks)
    # --- deep classifier head (get_classifier_deep) ---
    head = {
        "cls1": _conv_bn_params(kg(), 1, 1, 2048, 512),
        "cls2": _conv_bn_params(kg(), 3, 3, 512, 512, flat3=True),
        "cls3": _conv_bn_params(kg(), 1, 1, 512, 128),
        "cls4": _conv_bn_params(kg(), 3, 3, 128, 128, flat3=True),
        "cls5": _conv_bn_params(kg(), 4, 4, 128, 128),
        "fc1": _linear_params(kg(), 8 * 4 * 128, 1024),
        "fc2": _linear_params(kg(), 1024, 136, npad=256),  # N 136 -> 256
    }
    return {"stem": stem, "stages": stages, "head": head}


# ----------------------------------------------------------------------------
# Forward pass (mirrors LandmarkNet.forward, eval mode)
# ----------------------------------------------------------------------------
def _bottleneck(x, blk, stride):
    n, h, w, cin = x.shape
    mid = blk["c1"]["w"].shape[1]
    cout = blk["c3"]["w"].shape[1]
    # conv1 1x1 + BN + ReLU
    h1 = fused_matmul(x.reshape(-1, cin), blk["c1"]["w"], blk["c1"]["shift"],
                      relu=True).reshape(n, h, w, mid)
    # conv2 3x3 (torchvision puts the stride here) + BN + ReLU
    # TODO(synk): conv1 could additionally be fused into the conv3x3 kernel to
    # save one dispatch + HBM handoff per bottleneck; not done here.
    if stride == 1:
        h2 = conv3x3_flat(h1, blk["c2"])
    else:
        h2 = conv_gemm(h1, blk["c2"], kh=3, kw=3, stride=stride, pad=1, relu=True)
    ho, wo = h2.shape[1], h2.shape[2]
    # identity / downsample path
    if blk["ds"] is not None:
        xs = x[:, ::stride, ::stride, :] if stride > 1 else x
        iden = fused_matmul(xs.reshape(-1, cin), blk["ds"]["w"], blk["ds"]["shift"],
                            relu=False)
    else:
        iden = x.reshape(-1, cin)
    # conv3 1x1 + BN with the residual add + ReLU fused into the GEMM epilogue
    out = fused_matmul(h2.reshape(-1, mid), blk["c3"]["w"], blk["c3"]["shift"],
                       residual=iden, relu=True)
    return out.reshape(n, ho, wo, cout)


def landmarknet_forward(params, x_nchw):
    # x_nchw: (N, 1 or 3, 512, 256) float32
    if x_nchw.shape[1] == 1:
        x_nchw = jnp.tile(x_nchw, (1, 3, 1, 1))            # x.repeat((1, 3, 1, 1))
    x = jnp.transpose(x_nchw, (0, 2, 3, 1)).astype(jnp.bfloat16)   # NCHW -> NHWC

    # ResNet-101 stem: conv7x7/2 + BN + ReLU, maxpool 3x3/2 pad 1
    x = conv_gemm(x, params["stem"], kh=7, kw=7, stride=2, pad=3, relu=True)
    # TODO(synk): maxpool stays lax.reduce_window glue (no Pallas kernel needed).
    x = lax.reduce_window(x, jnp.array(-jnp.inf, x.dtype), lax.max,
                          (1, 3, 3, 1), (1, 2, 2, 1),
                          ((0, 0), (1, 1), (1, 1), (0, 0)))

    # ResNet-101 bottleneck stages [3, 4, 23, 3]
    for stage_idx, blocks in enumerate(params["stages"]):
        for block_idx, blk in enumerate(blocks):
            stride = 2 if (stage_idx > 0 and block_idx == 0) else 1
            x = _bottleneck(x, blk, stride)                # ends at (N, 16, 8, 2048)

    # deep classifier head
    head = params["head"]
    x = conv_gemm(x, head["cls1"], kh=1, kw=1, stride=1, pad=0, relu=True)
    x = conv3x3_flat(x, head["cls2"])
    x = conv_gemm(x, head["cls3"], kh=1, kw=1, stride=1, pad=0, relu=True)
    x = conv3x3_flat(x, head["cls4"])
    x = conv_gemm(x, head["cls5"], kh=4, kw=4, stride=2, pad=1, relu=True)  # (N, 8, 4, 128)

    # nn.Flatten in PyTorch NCHW order: (N, 128, 8, 4) -> (N, 4096)
    n = x.shape[0]
    flat = jnp.transpose(x, (0, 3, 1, 2)).reshape(n, -1)
    h = fused_matmul(flat, head["fc1"]["w"], head["fc1"]["shift"], relu=True)
    # TODO(synk): nn.Dropout(0.5) is identity in eval mode; train-mode dropout not implemented.
    out = fused_matmul(h, head["fc2"]["w"], head["fc2"]["shift"], relu=False,
                       out_dtype=jnp.float32)
    return out[:, :head["fc2"]["nout"]]                    # drop the N-padding -> (N, 136)


if __name__ == "__main__":
    root = jax.random.PRNGKey(0)
    params = init_landmarknet_params(root)
    # Grayscale input exercises the repeat-to-3-channels branch; 512x256 is the
    # smallest spatial size compatible with the classifier's Linear(8*4*128).
    x = jax.random.normal(jax.random.fold_in(root, 12345),
                          (1, 1, 512, 256), jnp.float32)
    out = landmarknet_forward(params, x)
    out = jax.block_until_ready(out)
    assert out.shape == (1, 136), out.shape
    assert bool(jnp.all(jnp.isfinite(out)))
    print("KERNEL_OK")
</pallas_src>

<mosaic_0001>
module attributes {stable_mosaic.version = 11 : i64} {
  func.func @_gemm_kernel(%arg0: i32, %arg1: i32, %arg2: i32, %arg3: memref<2048x160xbf16, #tpu.memory_space<vmem>>, %arg4: memref<160x64xbf16, #tpu.memory_space<vmem>>, %arg5: memref<1x64xf32, #tpu.memory_space<vmem>>, %arg6: memref<2048x64xbf16, #tpu.memory_space<vmem>>, %arg7: memref<2048x64xf32, #tpu.memory_space<vmem>>) attributes {dimension_semantics = [#tpu.dimension_semantics<parallel>, #tpu.dimension_semantics<parallel>, #tpu.dimension_semantics<arbitrary>], iteration_bounds = array<i64: 16, 1, 1>, scalar_prefetch = 0 : i64, scratch_operands = 1 : i64, tpu.core_type = #tpu.core_type<tc>, window_params = [{transform_indices = @transform_0, window_bounds = array<i64: 2048, 160>}, {transform_indices = @transform_1, window_bounds = array<i64: 160, 64>}, {transform_indices = @transform_2, window_bounds = array<i64: 1, 64>}, {transform_indices = @transform_3, window_bounds = array<i64: 2048, 64>}]} {
    %c0_i32 = arith.constant 0 : i32
    %0 = arith.cmpi eq, %arg2, %c0_i32 : i32
    %1 = arith.extui %0 : i1 to i32
    %c0_i32_0 = arith.constant 0 : i32
    %2 = arith.cmpi ne, %1, %c0_i32_0 : i32
    scf.if %2 {
      %cst_10 = arith.constant 0.000000e+00 : f32
      %12 = vector.broadcast %cst_10 : f32 to vector<2048x64xf32>
      %c0_11 = arith.constant 0 : index
      %c0_12 = arith.constant 0 : index
      %13 = vector.load %arg7[%c0_11, %c0_12] : memref<2048x64xf32, #tpu.memory_space<vmem>>, vector<2048x64xf32>
      tpu.vector_store %arg7[%c0_11, %c0_12], %12 {strides = array<i32>} : memref<2048x64xf32, #tpu.memory_space<vmem>>, vector<2048x64xf32>,
    } else {
    }
    %c0 = arith.constant 0 : index
    %c0_1 = arith.constant 0 : index
    %3 = vector.load %arg7[%c0, %c0_1] : memref<2048x64xf32, #tpu.memory_space<vmem>>, vector<2048x64xf32>
    %c0_2 = arith.constant 0 : index
    %c0_3 = arith.constant 0 : index
    %4 = vector.load %arg3[%c0_2, %c0_3] : memref<2048x160xbf16, #tpu.memory_space<vmem>>, vector<2048x160xbf16>
    %c0_4 = arith.constant 0 : index
    %c0_5 = arith.constant 0 : index
    %5 = vector.load %arg4[%c0_4, %c0_5] : memref<160x64xbf16, #tpu.memory_space<vmem>>, vector<160x64xbf16>
    %cst = arith.constant dense<0.000000e+00> : vector<2048x64xf32>
    %6 = tpu.matmul %4, %5, %cst {dimension_numbers = #tpu.dot_dimension_numbers<[1], [0], [0], [1], [0, 0, 1, 1], [], []>} : vector<2048x160xbf16>, vector<160x64xbf16>, vector<2048x64xf32> -> vector<2048x64xf32>
    %7 = arith.addf %3, %6 : vector<2048x64xf32>
    %c0_6 = arith.constant 0 : index
    %c0_7 = arith.constant 0 : index
    %8 = vector.load %arg7[%c0_6, %c0_7] : memref<2048x64xf32, #tpu.memory_space<vmem>>, vector<2048x64xf32>
    tpu.vector_store %arg7[%c0_6, %c0_7], %7 {strides = array<i32>} : memref<2048x64xf32, #tpu.memory_space<vmem>>, vector<2048x64xf32>,
    %c0_i32_8 = arith.constant 0 : i32
    %9 = arith.cmpi eq, %arg2, %c0_i32_8 : i32
    %10 = arith.extui %9 : i1 to i32
    %c0_i32_9 = arith.constant 0 : i32
    %11 = arith.cmpi ne, %10, %c0_i32_9 : i32
    scf.if %11 {
      %c0_10 = arith.constant 0 : index
      %c0_11 = arith.constant 0 : index
      %12 = vector.load %arg7[%c0_10, %c0_11] : memref<2048x64xf32, #tpu.memory_space<vmem>>, vector<2048x64xf32>
      %c0_12 = arith.constant 0 : index
      %c0_13 = arith.constant 0 : index
      %13 = vector.load %arg5[%c0_12, %c0_13] : memref<1x64xf32, #tpu.memory_space<vmem>>, vector<1x64xf32>
      %14 = vector.broadcast %13 : vector<1x64xf32> to vector<2048x64xf32>
      %15 = arith.addf %12, %14 : vector<2048x64xf32>
      %cst_14 = arith.constant 0.000000e+00 : f32
      %16 = vector.broadcast %cst_14 : f32 to vector<2048x64xf32>
      %17 = arith.maximumf %15, %16 : vector<2048x64xf32>
      %18 = arith.truncf %17 : vector<2048x64xf32> to vector<2048x64xbf16>
      %c0_15 = arith.constant 0 : index
      %c0_16 = arith.constant 0 : index
      %19 = vector.load %arg6[%c0_15, %c0_16] : memref<2048x64xbf16, #tpu.memory_space<vmem>>, vector<2048x64xbf16>
      tpu.vector_store %arg6[%c0_15, %c0_16], %18 {strides = array<i32>} : memref<2048x64xbf16, #tpu.memory_space<vmem>>, vector<2048x64xbf16>,
    } else {
    }
    return
  }
  func.func @transform_0(%arg0: i32, %arg1: i32, %arg2: i32) -> (i32, i32) {
    %c0_i32 = arith.constant 0 : i32
    return %arg0, %arg2 : i32, i32
  }
  func.func @transform_1(%arg0: i32, %arg1: i32, %arg2: i32) -> (i32, i32) {
    %c0_i32 = arith.constant 0 : i32
    return %arg2, %arg1 : i32, i32
  }
  func.func @transform_2(%arg0: i32, %arg1: i32, %arg2: i32) -> (i32, i32) {
    %c0_i32 = arith.constant 0 : i32
    %c0_i32_0 = arith.constant 0 : i32
    return %c0_i32, %arg1 : i32, i32
  }
  func.func @transform_3(%arg0: i32, %arg1: i32, %arg2: i32) -> (i32, i32) {
    %c0_i32 = arith.constant 0 : i32
    return %arg0, %arg1 : i32, i32
  }
}

</mosaic_0001>

<llo_original>
// kernel: fused_matmul.1
$region0: #{fused_matmul.1}
  #allocation0 [shape = 'u32[]', space=smem, size = 0x4, offset = 0x4, fixed_abs, tag = 'smem constant byte address 0x4 - core index']
  #allocation1 [shape = 'u32[72,128]{1,0:T(1,128)}', space=vmem, size = 0x9000, scoped, tag = 'internal scratch']
  #allocation2 [shape = 'f32[2048,64]{1,0:T(8,128)}', space=vmem, size = 0x100000, scoped, tag = 'scratch operand']
  %s0 = inlined_call_operand.vmem [shape: bf16[32768,160], index: 0, kind: input, shape index: {}]
  %s1 = inlined_call_operand.vmem [shape: bf16[160,64], index: 1, kind: input, shape index: {}]
  %s2 = inlined_call_operand.vmem [shape: f32[1,64], index: 2, kind: input, shape index: {}]
  %s3 = inlined_call_operand.vmem [shape: bf16[32768,64], index: 3, kind: output, shape index: {}]
  %s4 = sld [smem:[#allocation0]]
  $region53: #{fused_matmul.1} parent=0
    _
  %s6 = ssub.s32 1, %s4
  %s7 = scalar_select 0, %s6, %s4
  loop: start=0, step=1, limit=18
  $region2: #{fused_matmul.1} parent=0 // loop_pre_header
    _
  $region3: #{fused_matmul.1} parent=0 // loop_header
    %s9 = sphi 0, %s13
    %p10 = scmp.ge.s32.totalorder %s9, 18
    %s16 = sphi 0, %s35
    %s17 = sphi 0, %s31
    %s18 = sphi 0, %s27
    %s19 = sphi 0, %s16
    %s20 = sphi 0, %s17
    %s21 = sphi 0, %s18
    %s22 = sphi 0, %s19
    %s23 = sphi 0, %s20
    %s24 = sphi 0, %s21
    %s40 = sphi 0, %s42
    %s43 = sphi 0, %s40
    %s44 = sphi 0, %s43
    %s60 = sphi 0, %s44
    %s68 = sphi 0, %s70
    %s71 = sphi 0, %s68
    %s72 = sphi 0, %s71
    %s88 = sphi 0, %s72
    %s94 = sphi 0, %s96
    %s97 = sphi 0, %s94
    %s98 = sphi 0, %s97
    %s114 = sphi 0, %s98
    %s122 = sphi 0, %s124
    %s125 = sphi 0, %s122
    %s126 = sphi 0, %s125
    %s142 = sphi 0, %s126
  $region4: #{fused_matmul.1} parent=0 // loop_header_branch
    %12 = sbr.rel (%p10) target = $region8
  $region5: #{fused_matmul.1} parent=0 // loop_body
    %s14 = ssub.s32 %s9, 1
    %s15 = ssub.s32 %s9, 2
    %s25 = sadd.s32 1, %s18
    %p26 = scmp.ge.s32.totalorder %s25, 1
    %s27 = scalar_select %p26, 0, %s25
    %s28 = sadd.s32 1, %s17
    %s29 = scalar_select %p26, %s28, %s17
    %p30 = scmp.ge.s32.totalorder %s29, 1
    %s31 = scalar_select %p30, 0, %s29
    %s32 = sadd.s32 1, %s16
    %s33 = scalar_select %p30, %s32, %s16
    %p34 = scmp.ge.s32.totalorder %s33, 16
    %s35 = scalar_select %p34, 0, %s33
    %s36 = ssub.s32 %s16, %s35
    %s37 = ssub.s32 %s18, %s27
    %s38 = sor.u32 %s36, %s37
    %p39 = scmp.eq.s32.totalorder %s38, 0
    %s41 = sadd.s32 %s40, 1
    %s42 = scalar_select %p39, %s40, %s41
    %p45 = pneg %p39
    %p46 = scmp.eq.s32.totalorder %s9, 15
    %p47 = por %p45, %p46
    %p48 = scmp.ne.s32.totalorder %s40, %s43
    %p49 = scmp.eq.s32.totalorder %s9, 0
    %p50 = por %p48, %p49
    %p51 = scmp.ne.s32.totalorder %s40, %s43
    %p52 = scmp.eq.s32.totalorder %s14, 15
    %p53 = por %p51, %p52
    %p54 = scmp.ne.s32.totalorder %s43, %s44
    %p55 = scmp.eq.s32.totalorder %s14, 0
    %p56 = por %p54, %p55
    %p57 = scmp.ne.s32.totalorder %s43, %s44
    %p58 = scmp.eq.s32.totalorder %s15, 15
    %p59 = por %p57, %p58
    %p61 = scmp.ne.s32.totalorder %s44, %s60
    %p62 = scmp.eq.s32.totalorder %s15, 0
    %p63 = por %p61, %p62
    %s64 = ssub.s32 %s18, %s27
    %s65 = ssub.s32 %s17, %s31
    %s66 = sor.u32 %s64, %s65
    %p67 = scmp.eq.s32.totalorder %s66, 0
    %s69 = sadd.s32 %s68, 1
    %s70 = scalar_select %p67, %s68, %s69
    %p73 = pneg %p67
    %p74 = scmp.eq.s32.totalorder %s9, 15
    %p75 = por %p73, %p74
    %p76 = scmp.ne.s32.totalorder %s68, %s71
    %p77 = scmp.eq.s32.totalorder %s9, 0
    %p78 = por %p76, %p77
    %p79 = scmp.ne.s32.totalorder %s68, %s71
    %p80 = scmp.eq.s32.totalorder %s14, 15
    %p81 = por %p79, %p80
    %p82 = scmp.ne.s32.totalorder %s71, %s72
    %p83 = scmp.eq.s32.totalorder %s14, 0
    %p84 = por %p82, %p83
    %p85 = scmp.ne.s32.totalorder %s71, %s72
    %p86 = scmp.eq.s32.totalorder %s15, 15
    %p87 = por %p85, %p86
    %p89 = scmp.ne.s32.totalorder %s72, %s88
    %p90 = scmp.eq.s32.totalorder %s15, 0
    %p91 = por %p89, %p90
    %s92 = ssub.s32 %s17, %s31
    %p93 = scmp.eq.s32.totalorder %s92, 0
    %s95 = sadd.s32 %s94, 1
    %s96 = scalar_select %p93, %s94, %s95
    %p99 = pneg %p93
    %p100 = scmp.eq.s32.totalorder %s9, 15
    %p101 = por %p99, %p100
    %p102 = scmp.ne.s32.totalorder %s94, %s97
    %p103 = scmp.eq.s32.totalorder %s9, 0
    %p104 = por %p102, %p103
    %p105 = scmp.ne.s32.totalorder %s94, %s97
    %p106 = scmp.eq.s32.totalorder %s14, 15
    %p107 = por %p105, %p106
    %p108 = scmp.ne.s32.totalorder %s97, %s98
    %p109 = scmp.eq.s32.totalorder %s14, 0
    %p110 = por %p108, %p109
    %p111 = scmp.ne.s32.totalorder %s97, %s98
    %p112 = scmp.eq.s32.totalorder %s15, 15
    %p113 = por %p111, %p112
    %p115 = scmp.ne.s32.totalorder %s98, %s114
    %p116 = scmp.eq.s32.totalorder %s15, 0
    %p117 = por %p115, %p116
    %s118 = ssub.s32 %s16, %s35
    %s119 = ssub.s32 %s17, %s31
    %s120 = sor.u32 %s118, %s119
    %p121 = scmp.eq.s32.totalorder %s120, 0
    %s123 = sadd.s32 %s122, 1
    %s124 = scalar_select %p121, %s122, %s123
    %p127 = pneg %p121
    %p128 = scmp.eq.s32.totalorder %s9, 15
    %p129 = por %p127, %p128
    %p130 = scmp.ne.s32.totalorder %s122, %s125
    %p131 = scmp.eq.s32.totalorder %s9, 0
    %p132 = por %p130, %p131
    %p133 = scmp.ne.s32.totalorder %s122, %s125
    %p134 = scmp.eq.s32.totalorder %s14, 15
    %p135 = por %p133, %p134
    %p136 = scmp.ne.s32.totalorder %s125, %s126
    %p137 = scmp.eq.s32.totalorder %s14, 0
    %p138 = por %p136, %p137
    %p139 = scmp.ne.s32.totalorder %s125, %s126
    %p140 = scmp.eq.s32.totalorder %s15, 15
    %p141 = por %p139, %p140
    %p143 = scmp.ne.s32.totalorder %s126, %s142
    %p144 = scmp.eq.s32.totalorder %s15, 0
    %p145 = por %p143, %p144
    %p146 = scmp.le.s32.totalorder 1, %s9
    %p147 = scmp.lt.s32.totalorder %s9, 17
    %p148 = pnand %p146, %p147
    %p149 = pneg %p148
    // Predicated region
    $region9: #{fused_matmul.1} parent=5 // pred_check
      _
    $region10: #{fused_matmul.1} parent=5 // pred_check_branch
      %151 = sbr.rel (%p148) target = $region12
    $region11: #{fused_matmul.1} parent=5 // pred_region
      %s152 = ssub.s32 %s9, 1
      // Predicated region
      $region13: #{fused_matmul.1} parent=11 // pred_check
        %p153 = pneg %p84
      $region14: #{fused_matmul.1} parent=11 // pred_check_branch
        %155 = sbr.rel (%p153) target = $region16
      $region15: #{fused_matmul.1} parent=11 // pred_region
        %s156 = smul.u32 20, %s21
        %p157 = scmp.lt.s32.totalorder %s156, 19
        %s158 = scalar_select %p157, %s156, 19
        %p159 = scmp.lt.s32.totalorder %s20, 0
        %s160 = scalar_select %p159, %s20, 0
        %s161 = sadd.s32 %s160, %s158
        %s162 = smul.addr %s161, 4
        %s163 = scalar_lea.vmem %s1, %s162
        %s164 = smul.u32 20, %s21
      $region16: #{fused_matmul.1} parent=11 // pred_fallthru
        _
      // Predicated region
      $region17: #{fused_matmul.1} parent=11 // pred_check
        %p165 = pneg %p110
      $region18: #{fused_matmul.1} parent=11 // pred_check_branch
        %167 = sbr.rel (%p165) target = $region20
      $region19: #{fused_matmul.1} parent=11 // pred_region
        %p168 = scmp.lt.s32.totalorder %s20, 0
        %s169 = scalar_select %p168, %s20, 0
        %s170 = scalar_lea.vmem %s2, %s169
      $region20: #{fused_matmul.1} parent=11 // pred_fallthru
        _
    $region12: #{fused_matmul.1} parent=5 // pred_fallthru
      _
    %p171 = scmp.lt.s32.totalorder %s9, 16
    // Predicated region
    $region21: #{fused_matmul.1} parent=5 // pred_check
      %p172 = pneg %p171
    $region22: #{fused_matmul.1} parent=5 // pred_check_branch
      %174 = sbr.rel (%p172) target = $region24
    $region23: #{fused_matmul.1} parent=5 // pred_region
      // Predicated region
      $region25: #{fused_matmul.1} parent=23 // pred_check
        %p175 = pneg %p50
      $region26: #{fused_matmul.1} parent=23 // pred_check_branch
        %177 = sbr.rel (%p175) target = $region28
      $region27: #{fused_matmul.1} parent=23 // pred_region
        %s178 = smul.u32 256, %s16
        %s179 = smul.u32 2, %s18
        %p180 = scmp.lt.s32.totalorder %s178, 4095
        %s181 = scalar_select %p180, %s178, 4095
        %p182 = scmp.lt.s32.totalorder %s179, 1
        %s183 = scalar_select %p182, %s179, 1
        %s184 = smul.addr %s181, 2
        %s185 = sadd.s32 %s183, %s184
        %s186 = smul.addr %s185, 4
        %s187 = scalar_lea.vmem %s0, %s186
        %s188 = smul.u32 256, %s16
        %s189 = smul.u32 2, %s18
      $region28: #{fused_matmul.1} parent=23 // pred_fallthru
        _
    $region24: #{fused_matmul.1} parent=5 // pred_fallthru
      _
    %p190 = scmp.le.s32.totalorder 1, %s9
    %p191 = scmp.lt.s32.totalorder %s9, 17
    %p192 = pnand %p190, %p191
    %p193 = pneg %p192
    // Predicated region
    $region29: #{fused_matmul.1} parent=5 // pred_check
      _
    $region30: #{fused_matmul.1} parent=5 // pred_check_branch
      %195 = sbr.rel (%p192) target = $region32
    $region31: #{fused_matmul.1} parent=5 // pred_region
      %s196 = ssub.s32 %s9, 1
      %s197 = smul.u32 256, %s19
      %s198 = smul.u32 2, %s21
      %p199 = scmp.lt.s32.totalorder %s197, 4095
      %s200 = scalar_select %p199, %s197, 4095
      %p201 = scmp.lt.s32.totalorder %s198, 1
      %s202 = scalar_select %p201, %s198, 1
      %s203 = smul.addr %s200, 2
      %s204 = sadd.s32 %s202, %s203
      %s205 = smul.addr %s204, 4
      %s206 = scalar_lea.vmem %s0, %s205
      %p207 = pneg %p56
      %p208 = pneg %p53
      %s209 = smul.u32 20, %s21
      %p210 = scmp.lt.s32.totalorder %s209, 19
      %s211 = scalar_select %p210, %s209, 19
      %p212 = scmp.lt.s32.totalorder %s20, 0
      %s213 = scalar_select %p212, %s20, 0
      %s214 = sadd.s32 %s213, %s211
      %s215 = smul.addr %s214, 4
      %s216 = scalar_lea.vmem %s1, %s215
      %p217 = pneg %p84
      %p218 = pneg %p81
      %p219 = scmp.lt.s32.totalorder %s20, 0
      %s220 = scalar_select %p219, %s20, 0
      %s221 = scalar_lea.vmem %s2, %s220
      %p222 = pneg %p110
      %p223 = pneg %p107
      %p224 = pneg %p138
      %p225 = pneg %p135
      %s226 = smul.u32 256, %s19
      %p227 = scmp.lt.s32.totalorder %s226, 4095
      %s228 = scalar_select %p227, %s226, 4095
      %p229 = scmp.lt.s32.totalorder %s20, 0
      %s230 = scalar_select %p229, %s20, 0
      %s231 = sadd.s32 %s230, %s228
      %s232 = smul.addr %s231, 4
      %s233 = scalar_lea.vmem %s3, %s232
      %s234 = smul.u32 256, %s19
      %s235 = smul.u32 2, %s21
      %p236 = scmp.lt.s32.totalorder %s234, 4095
      %s237 = scalar_select %p236, %s234, 4095
      %p238 = scmp.lt.s32.totalorder %s235, 1
      %s239 = scalar_select %p238, %s235, 1
      %s240 = smul.addr %s237, 2
      %s241 = sadd.s32 %s239, %s240
      %s242 = smul.addr %s241, 4
      %s243 = scalar_lea.vmem %s0, %s242
      %s244 = smul.u32 256, %s19
      %s245 = smul.u32 2, %s21
      %s246 = smul.u32 20, %s21
      %p247 = scmp.lt.s32.totalorder %s246, 19
      %s248 = scalar_select %p247, %s246, 19
      %p249 = scmp.lt.s32.totalorder %s20, 0
      %s250 = scalar_select %p249, %s20, 0
      %s251 = sadd.s32 %s250, %s248
      %s252 = smul.addr %s251, 4
      %s253 = scalar_lea.vmem %s1, %s252
      %s254 = smul.u32 20, %s21
      %p255 = scmp.lt.s32.totalorder %s20, 0
      %s256 = scalar_select %p255, %s20, 0
      %s257 = scalar_lea.vmem %s2, %s256
      %s258 = smul.u32 256, %s19
      %p259 = scmp.lt.s32.totalorder %s258, 4095
      %s260 = scalar_select %p259, %s258, 4095
      %p261 = scmp.lt.s32.totalorder %s20, 0
      %s262 = scalar_select %p261, %s20, 0
      %s263 = sadd.s32 %s262, %s260
      %s264 = smul.addr %s263, 4
      %s265 = scalar_lea.vmem %s3, %s264
      %s266 = smul.u32 256, %s19
      %p268 = scmp.eq.s32.totalorder %s21, 0
      // Predicated region
      $region33: #{fused_matmul.1} parent=31 // pred_check
        %p269 = pneg %p268
      $region34: #{fused_matmul.1} parent=31 // pred_check_branch
        %271 = sbr.rel (%p269) target = $region36
      $region35: #{fused_matmul.1} parent=31 // pred_region
        %vm272 = vcmask 523264
        %273 = vst.msk [vmem:[#allocation2] sm:$0xff] %vm272, 0.0
        %274 = vst.msk [vmem:[#allocation2 + $0x8] sm:$0xff] %vm272, 0.0
        %275 = vst.msk [vmem:[#allocation2 + $0x10] sm:$0xff] %vm272, 0.0
        %276 = vst.msk [vmem:[#allocation2 + $0x18] sm:$0xff] %vm272, 0.0
        %277 = vst.msk [vmem:[#allocation2 + $0x20] sm:$0xff] %vm272, 0.0
        %278 = vst.msk [vmem:[#allocation2 + $0x28] sm:$0xff] %vm272, 0.0
        %279 = vst.msk [vmem:[#allocation2 + $0x30] sm:$0xff] %vm272, 0.0
        %280 = vst.msk [vmem:[#allocation2 + $0x38] sm:$0xff] %vm272, 0.0
        %281 = vst.msk [vmem:[#allocation2 + $0x40] sm:$0xff] %vm272, 0.0
        %282 = vst.msk [vmem:[#allocation2 + $0x48] sm:$0xff] %vm272, 0.0
        %283 = vst.msk [vmem:[#allocation2 + $0x50] sm:$0xff] %vm272, 0.0
        %284 = vst.msk [vmem:[#allocation2 + $0x58] sm:$0xff] %vm272, 0.0
        %285 = vst.msk [vmem:[#allocation2 + $0x60] sm:$0xff] %vm272, 0.0
        %286 = vst.msk [vmem:[#allocation2 + $0x68] sm:$0xff] %vm272, 0.0
        %287 = vst.msk [vmem:[#allocation2 + $0x70] sm:$0xff] %vm272, 0.0
        %288 = vst.msk [vmem:[#allocation2 + $0x78] sm:$0xff] %vm272, 0.0
        %289 = vst.msk [vmem:[#allocation2 + $0x80] sm:$0xff] %vm272, 0.0
        %290 = vst.msk [vmem:[#allocation2 + $0x88] sm:$0xff] %vm272, 0.0
        %291 = vst.msk [vmem:[#allocation2 + $0x90] sm:$0xff] %vm272, 0.0
        %292 = vst.msk [vmem:[#allocation2 + $0x98] sm:$0xff] %vm272, 0.0
        %293 = vst.msk [vmem:[#allocation2 + $0xa0] sm:$0xff] %vm272, 0.0
        %294 = vst.msk [vmem:[#allocation2 + $0xa8] sm:$0xff] %vm272, 0.0
        %295 = vst.msk [vmem:[#allocation2 + $0xb0] sm:$0xff] %vm272, 0.0
        %296 = vst.msk [vmem:[#allocation2 + $0xb8] sm:$0xff] %vm272, 0.0
        %297 = vst.msk [vmem:[#allocation2 + $0xc0] sm:$0xff] %vm272, 0.0
        %298 = vst.msk [vmem:[#allocation2 + $0xc8] sm:$0xff] %vm272, 0.0
        %299 = vst.msk [vmem:[#allocation2 + $0xd0] sm:$0xff] %vm272, 0.0
        %300 = vst.msk [vmem:[#allocation2 + $0xd8] sm:$0xff] %vm272, 0.0
        %301 = vst.msk [vmem:[#allocation2 + $0xe0] sm:$0xff] %vm272, 0.0
        %302 = vst.msk [vmem:[#allocation2 + $0xe8] sm:$0xff] %vm272, 0.0
        %303 = vst.msk [vmem:[#allocation2 + $0xf0] sm:$0xff] %vm272, 0.0
        %304 = vst.msk [vmem:[#allocation2 + $0xf8] sm:$0xff] %vm272, 0.0
        %305 = vst.msk [vmem:[#allocation2 + $0x100] sm:$0xff] %vm272, 0.0
        %306 = vst.msk [vmem:[#allocation2 + $0x108] sm:$0xff] %vm272, 0.0
        %307 = vst.msk [vmem:[#allocation2 + $0x110] sm:$0xff] %vm272, 0.0
        %308 = vst.msk [vmem:[#allocation2 + $0x118] sm:$0xff] %vm272, 0.0
        %309 = vst.msk [vmem:[#allocation2 + $0x120] sm:$0xff] %vm272, 0.0
        %310 = vst.msk [vmem:[#allocation2 + $0x128] sm:$0xff] %vm272, 0.0
        %311 = vst.msk [vmem:[#allocation2 + $0x130] sm:$0xff] %vm272, 0.0
        %312 = vst.msk [vmem:[#allocation2 + $0x138] sm:$0xff] %vm272, 0.0
        %313 = vst.msk [vmem:[#allocation2 + $0x140] sm:$0xff] %vm272, 0.0
        %314 = vst.msk [vmem:[#allocation2 + $0x148] sm:$0xff] %vm272, 0.0
        %315 = vst.msk [vmem:[#allocation2 + $0x150] sm:$0xff] %vm272, 0.0
        %316 = vst.msk [vmem:[#allocation2 + $0x158] sm:$0xff] %vm272, 0.0
        %317 = vst.msk [vmem:[#allocation2 + $0x160] sm:$0xff] %vm272, 0.0
        %318 = vst.msk [vmem:[#allocation2 + $0x168] sm:$0xff] %vm272, 0.0
        %319 = vst.msk [vmem:[#allocation2 + $0x170] sm:$0xff] %vm272, 0.0
        %320 = vst.msk [vmem:[#allocation2 + $0x178] sm:$0xff] %vm272, 0.0
        %321 = vst.msk [vmem:[#allocation2 + $0x180] sm:$0xff] %vm272, 0.0
        %322 = vst.msk [vmem:[#allocation2 + $0x188] sm:$0xff] %vm272, 0.0
        %323 = vst.msk [vmem:[#allocation2 + $0x190] sm:$0xff] %vm272, 0.0
        %324 = vst.msk [vmem:[#allocation2 + $0x198] sm:$0xff] %vm272, 0.0
        %325 = vst.msk [vmem:[#allocation2 + $0x1a0] sm:$0xff] %vm272, 0.0
        %326 = vst.msk [vmem:[#allocation2 + $0x1a8] sm:$0xff] %vm272, 0.0
        %327 = vst.msk [vmem:[#allocation2 + $0x1b0] sm:$0xff] %vm272, 0.0
        %328 = vst.msk [vmem:[#allocation2 + $0x1b8] sm:$0xff] %vm272, 0.0
        %329 = vst.msk [vmem:[#allocation2 + $0x1c0] sm:$0xff] %vm272, 0.0
        %330 = vst.msk [vmem:[#allocation2 + $0x1c8] sm:$0xff] %vm272, 0.0
        %331 = vst.msk [vmem:[#allocation2 + $0x1d0] sm:$0xff] %vm272, 0.0
        %332 = vst.msk [vmem:[#allocation2 + $0x1d8] sm:$0xff] %vm272, 0.0
        %333 = vst.msk [vmem:[#allocation2 + $0x1e0] sm:$0xff] %vm272, 0.0
        %334 = vst.msk [vmem:[#allocation2 + $0x1e8] sm:$0xff] %vm272, 0.0
        %335 = vst.msk [vmem:[#allocation2 + $0x1f0] sm:$0xff] %vm272, 0.0
        %336 = vst.msk [vmem:[#allocation2 + $0x1f8] sm:$0xff] %vm272, 0.0
        %337 = vst.msk [vmem:[#allocation2 + $0x200] sm:$0xff] %vm272, 0.0
        %338 = vst.msk [vmem:[#allocation2 + $0x208] sm:$0xff] %vm272, 0.0
        %339 = vst.msk [vmem:[#allocation2 + $0x210] sm:$0xff] %vm272, 0.0
        %340 = vst.msk [vmem:[#allocation2 + $0x218] sm:$0xff] %vm272, 0.0
        %341 = vst.msk [vmem:[#allocation2 + $0x220] sm:$0xff] %vm272, 0.0
        %342 = vst.msk [vmem:[#allocation2 + $0x228] sm:$0xff] %vm272, 0.0
        %343 = vst.msk [vmem:[#allocation2 + $0x230] sm:$0xff] %vm272, 0.0
        %344 = vst.msk [vmem:[#allocation2 + $0x238] sm:$0xff] %vm272, 0.0
        %345 = vst.msk [vmem:[#allocation2 + $0x240] sm:$0xff] %vm272, 0.0
        %346 = vst.msk [vmem:[#allocation2 + $0x248] sm:$0xff] %vm272, 0.0
        %347 = vst.msk [vmem:[#allocation2 + $0x250] sm:$0xff] %vm272, 0.0
        %348 = vst.msk [vmem:[#allocation2 + $0x258] sm:$0xff] %vm272, 0.0
        %349 = vst.msk [vmem:[#allocation2 + $0x260] sm:$0xff] %vm272, 0.0
        %350 = vst.msk [vmem:[#allocation2 + $0x268] sm:$0xff] %vm272, 0.0
        %351 = vst.msk [vmem:[#allocation2 + $0x270] sm:$0xff] %vm272, 0.0
        %352 = vst.msk [vmem:[#allocation2 + $0x278] sm:$0xff] %vm272, 0.0
        %353 = vst.msk [vmem:[#allocation2 + $0x280] sm:$0xff] %vm272, 0.0
        %354 = vst.msk [vmem:[#allocation2 + $0x288] sm:$0xff] %vm272, 0.0
        %355 = vst.msk [vmem:[#allocation2 + $0x290] sm:$0xff] %vm272, 0.0
        %356 = vst.msk [vmem:[#allocation2 + $0x298] sm:$0xff] %vm272, 0.0
        %357 = vst.msk [vmem:[#allocation2 + $0x2a0] sm:$0xff] %vm272, 0.0
        %358 = vst.msk [vmem:[#allocation2 + $0x2a8] sm:$0xff] %vm272, 0.0
        %359 = vst.msk [vmem:[#allocation2 + $0x2b0] sm:$0xff] %vm272, 0.0
        %360 = vst.msk [vmem:[#allocation2 + $0x2b8] sm:$0xff] %vm272, 0.0
        %361 = vst.msk [vmem:[#allocation2 + $0x2c0] sm:$0xff] %vm272, 0.0
        %362 = vst.msk [vmem:[#allocation2 + $0x2c8] sm:$0xff] %vm272, 0.0
        %363 = vst.msk [vmem:[#allocation2 + $0x2d0] sm:$0xff] %vm272, 0.0
        %364 = vst.msk [vmem:[#allocation2 + $0x2d8] sm:$0xff] %vm272, 0.0
        %365 = vst.msk [vmem:[#allocation2 + $0x2e0] sm:$0xff] %vm272, 0.0
        %366 = vst.msk [vmem:[#allocation2 + $0x2e8] sm:$0xff] %vm272, 0.0
        %367 = vst.msk [vmem:[#allocation2 + $0x2f0] sm:$0xff] %vm272, 0.0
        %368 = vst.msk [vmem:[#allocation2 + $0x2f8] sm:$0xff] %vm272, 0.0
        %369 = vst.msk [vmem:[#allocation2 + $0x300] sm:$0xff] %vm272, 0.0
        %370 = vst.msk [vmem:[#allocation2 + $0x308] sm:$0xff] %vm272, 0.0
        %371 = vst.msk [vmem:[#allocation2 + $0x310] sm:$0xff] %vm272, 0.0
        %372 = vst.msk [vmem:[#allocation2 + $0x318] sm:$0xff] %vm272, 0.0
        %373 = vst.msk [vmem:[#allocation2 + $0x320] sm:$0xff] %vm272, 0.0
        %374 = vst.msk [vmem:[#allocation2 + $0x328] sm:$0xff] %vm272, 0.0
        %375 = vst.msk [vmem:[#allocation2 + $0x330] sm:$0xff] %vm272, 0.0
        %376 = vst.msk [vmem:[#allocation2 + $0x338] sm:$0xff] %vm272, 0.0
        %377 = vst.msk [vmem:[#allocation2 + $0x340] sm:$0xff] %vm272, 0.0
        %378 = vst.msk [vmem:[#allocation2 + $0x348] sm:$0xff] %vm272, 0.0
        %379 = vst.msk [vmem:[#allocation2 + $0x350] sm:$0xff] %vm272, 0.0
        %380 = vst.msk [vmem:[#allocation2 + $0x358] sm:$0xff] %vm272, 0.0
        %381 = vst.msk [vmem:[#allocation2 + $0x360] sm:$0xff] %vm272, 0.0
        %382 = vst.msk [vmem:[#allocation2 + $0x368] sm:$0xff] %vm272, 0.0
        %383 = vst.msk [vmem:[#allocation2 + $0x370] sm:$0xff] %vm272, 0.0
        %384 = vst.msk [vmem:[#allocation2 + $0x378] sm:$0xff] %vm272, 0.0
        %385 = vst.msk [vmem:[#allocation2 + $0x380] sm:$0xff] %vm272, 0.0
        %386 = vst.msk [vmem:[#allocation2 + $0x388] sm:$0xff] %vm272, 0.0
        %387 = vst.msk [vmem:[#allocation2 + $0x390] sm:$0xff] %vm272, 0.0
        %388 = vst.msk [vmem:[#allocation2 + $0x398] sm:$0xff] %vm272, 0.0
        %389 = vst.msk [vmem:[#allocation2 + $0x3a0] sm:$0xff] %vm272, 0.0
        %390 = vst.msk [vmem:[#allocation2 + $0x3a8] sm:$0xff] %vm272, 0.0
        %391 = vst.msk [vmem:[#allocation2 + $0x3b0] sm:$0xff] %vm272, 0.0
        %392 = vst.msk [vmem:[#allocation2 + $0x3b8] sm:$0xff] %vm272, 0.0
        %393 = vst.msk [vmem:[#allocation2 + $0x3c0] sm:$0xff] %vm272, 0.0
        %394 = vst.msk [vmem:[#allocation2 + $0x3c8] sm:$0xff] %vm272, 0.0
        %395 = vst.msk [vmem:[#allocation2 + $0x3d0] sm:$0xff] %vm272, 0.0
        %396 = vst.msk [vmem:[#allocation2 + $0x3d8] sm:$0xff] %vm272, 0.0
        %397 = vst.msk [vmem:[#allocation2 + $0x3e0] sm:$0xff] %vm272, 0.0
        %398 = vst.msk [vmem:[#allocation2 + $0x3e8] sm:$0xff] %vm272, 0.0
        %399 = vst.msk [vmem:[#allocation2 + $0x3f0] sm:$0xff] %vm272, 0.0
        %400 = vst.msk [vmem:[#allocation2 + $0x3f8] sm:$0xff] %vm272, 0.0
        %401 = vst.msk [vmem:[#allocation2 + $0x400] sm:$0xff] %vm272, 0.0
        %402 = vst.msk [vmem:[#allocation2 + $0x408] sm:$0xff] %vm272, 0.0
        %403 = vst.msk [vmem:[#allocation2 + $0x410] sm:$0xff] %vm272, 0.0
        %404 = vst.msk [vmem:[#allocation2 + $0x418] sm:$0xff] %vm272, 0.0
        %405 = vst.msk [vmem:[#allocation2 + $0x420] sm:$0xff] %vm272, 0.0
        %406 = vst.msk [vmem:[#allocation2 + $0x428] sm:$0xff] %vm272, 0.0
        %407 = vst.msk [vmem:[#allocation2 + $0x430] sm:$0xff] %vm272, 0.0
        %408 = vst.msk [vmem:[#allocation2 + $0x438] sm:$0xff] %vm272, 0.0
        %409 = vst.msk [vmem:[#allocation2 + $0x440] sm:$0xff] %vm272, 0.0
        %410 = vst.msk [vmem:[#allocation2 + $0x448] sm:$0xff] %vm272, 0.0
        %411 = vst.msk [vmem:[#allocation2 + $0x450] sm:$0xff] %vm272, 0.0
        %412 = vst.msk [vmem:[#allocation2 + $0x458] sm:$0xff] %vm272, 0.0
        %413 = vst.msk [vmem:[#allocation2 + $0x460] sm:$0xff] %vm272, 0.0
        %414 = vst.msk [vmem:[#allocation2 + $0x468] sm:$0xff] %vm272, 0.0
        %415 = vst.msk [vmem:[#allocation2 + $0x470] sm:$0xff] %vm272, 0.0
        %416 = vst.msk [vmem:[#allocation2 + $0x478] sm:$0xff] %vm272, 0.0
        %417 = vst.msk [vmem:[#allocation2 + $0x480] sm:$0xff] %vm272, 0.0
        %418 = vst.msk [vmem:[#allocation2 + $0x488] sm:$0xff] %vm272, 0.0
        %419 = vst.msk [vmem:[#allocation2 + $0x490] sm:$0xff] %vm272, 0.0
        %420 = vst.msk [vmem:[#allocation2 + $0x498] sm:$0xff] %vm272, 0.0
        %421 = vst.msk [vmem:[#allocation2 + $0x4a0] sm:$0xff] %vm272, 0.0
        %422 = vst.msk [vmem:[#allocation2 + $0x4a8] sm:$0xff] %vm272, 0.0
        %423 = vst.msk [vmem:[#allocation2 + $0x4b0] sm:$0xff] %vm272, 0.0
        %424 = vst.msk [vmem:[#allocation2 + $0x4b8] sm:$0xff] %vm272, 0.0
        %425 = vst.msk [vmem:[#allocation2 + $0x4c0] sm:$0xff] %vm272, 0.0
        %426 = vst.msk [vmem:[#allocation2 + $0x4c8] sm:$0xff] %vm272, 0.0
        %427 = vst.msk [vmem:[#allocation2 + $0x4d0] sm:$0xff] %vm272, 0.0
        %428 = vst.msk [vmem:[#allocation2 + $0x4d8] sm:$0xff] %vm272, 0.0
        %429 = vst.msk [vmem:[#allocation2 + $0x4e0] sm:$0xff] %vm272, 0.0
        %430 = vst.msk [vmem:[#allocation2 + $0x4e8] sm:$0xff] %vm272, 0.0
        %431 = vst.msk [vmem:[#allocation2 + $0x4f0] sm:$0xff] %vm272, 0.0
        %432 = vst.msk [vmem:[#allocation2 + $0x4f8] sm:$0xff] %vm272, 0.0
        %433 = vst.msk [vmem:[#allocation2 + $0x500] sm:$0xff] %vm272, 0.0
        %434 = vst.msk [vmem:[#allocation2 + $0x508] sm:$0xff] %vm272, 0.0
        %435 = vst.msk [vmem:[#allocation2 + $0x510] sm:$0xff] %vm272, 0.0
        %436 = vst.msk [vmem:[#allocation2 + $0x518] sm:$0xff] %vm272, 0.0
        %437 = vst.msk [vmem:[#allocation2 + $0x520] sm:$0xff] %vm272, 0.0
        %438 = vst.msk [vmem:[#allocation2 + $0x528] sm:$0xff] %vm272, 0.0
        %439 = vst.msk [vmem:[#allocation2 + $0x530] sm:$0xff] %vm272, 0.0
        %440 = vst.msk [vmem:[#allocation2 + $0x538] sm:$0xff] %vm272, 0.0
        %441 = vst.msk [vmem:[#allocation2 + $0x540] sm:$0xff] %vm272, 0.0
        %442 = vst.msk [vmem:[#allocation2 + $0x548] sm:$0xff] %vm272, 0.0
        %443 = vst.msk [vmem:[#allocation2 + $0x550] sm:$0xff] %vm272, 0.0
        %444 = vst.msk [vmem:[#allocation2 + $0x558] sm:$0xff] %vm272, 0.0
        %445 = vst.msk [vmem:[#allocation2 + $0x560] sm:$0xff] %vm272, 0.0
        %446 = vst.msk [vmem:[#allocation2 + $0x568] sm:$0xff] %vm272, 0.0
        %447 = vst.msk [vmem:[#allocation2 + $0x570] sm:$0xff] %vm272, 0.0
        %448 = vst.msk [vmem:[#allocation2 + $0x578] sm:$0xff] %vm272, 0.0
        %449 = vst.msk [vmem:[#allocation2 + $0x580] sm:$0xff] %vm272, 0.0
        %450 = vst.msk [vmem:[#allocation2 + $0x588] sm:$0xff] %vm272, 0.0
        %451 = vst.msk [vmem:[#allocation2 + $0x590] sm:$0xff] %vm272, 0.0
        %452 = vst.msk [vmem:[#allocation2 + $0x598] sm:$0xff] %vm272, 0.0
        %453 = vst.msk [vmem:[#allocation2 + $0x5a0] sm:$0xff] %vm272, 0.0
        %454 = vst.msk [vmem:[#allocation2 + $0x5a8] sm:$0xff] %vm272, 0.0
        %455 = vst.msk [vmem:[#allocation2 + $0x5b0] sm:$0xff] %vm272, 0.0
        %456 = vst.msk [vmem:[#allocation2 + $0x5b8] sm:$0xff] %vm272, 0.0
        %457 = vst.msk [vmem:[#allocation2 + $0x5c0] sm:$0xff] %vm272, 0.0
        %458 = vst.msk [vmem:[#allocation2 + $0x5c8] sm:$0xff] %vm272, 0.0
        %459 = vst.msk [vmem:[#allocation2 + $0x5d0] sm:$0xff] %vm272, 0.0
        %460 = vst.msk [vmem:[#allocation2 + $0x5d8] sm:$0xff] %vm272, 0.0
        %461 = vst.msk [vmem:[#allocation2 + $0x5e0] sm:$0xff] %vm272, 0.0
        %462 = vst.msk [vmem:[#allocation2 + $0x5e8] sm:$0xff] %vm272, 0.0
        %463 = vst.msk [vmem:[#allocation2 + $0x5f0] sm:$0xff] %vm272, 0.0
        %464 = vst.msk [vmem:[#allocation2 + $0x5f8] sm:$0xff] %vm272, 0.0
        %465 = vst.msk [vmem:[#allocation2 + $0x600] sm:$0xff] %vm272, 0.0
        %466 = vst.msk [vmem:[#allocation2 + $0x608] sm:$0xff] %vm272, 0.0
        %467 = vst.msk [vmem:[#allocation2 + $0x610] sm:$0xff] %vm272, 0.0
        %468 = vst.msk [vmem:[#allocation2 + $0x618] sm:$0xff] %vm272, 0.0
        %469 = vst.msk [vmem:[#allocation2 + $0x620] sm:$0xff] %vm272, 0.0
        %470 = vst.msk [vmem:[#allocation2 + $0x628] sm:$0xff] %vm272, 0.0
        %471 = vst.msk [vmem:[#allocation2 + $0x630] sm:$0xff] %vm272, 0.0
        %472 = vst.msk [vmem:[#allocation2 + $0x638] sm:$0xff] %vm272, 0.0
        %473 = vst.msk [vmem:[#allocation2 + $0x640] sm:$0xff] %vm272, 0.0
        %474 = vst.msk [vmem:[#allocation2 + $0x648] sm:$0xff] %vm272, 0.0
        %475 = vst.msk [vmem:[#allocation2 + $0x650] sm:$0xff] %vm272, 0.0
        %476 = vst.msk [vmem:[#allocation2 + $0x658] sm:$0xff] %vm272, 0.0
        %477 = vst.msk [vmem:[#allocation2 + $0x660] sm:$0xff] %vm272, 0.0
        %478 = vst.msk [vmem:[#allocation2 + $0x668] sm:$0xff] %vm272, 0.0
        %479 = vst.msk [vmem:[#allocation2 + $0x670] sm:$0xff] %vm272, 0.0
        %480 = vst.msk [vmem:[#allocation2 + $0x678] sm:$0xff] %vm272, 0.0
        %481 = vst.msk [vmem:[#allocation2 + $0x680] sm:$0xff] %vm272, 0.0
        %482 = vst.msk [vmem:[#allocation2 + $0x688] sm:$0xff] %vm272, 0.0
        %483 = vst.msk [vmem:[#allocation2 + $0x690] sm:$0xff] %vm272, 0.0
        %484 = vst.msk [vmem:[#allocation2 + $0x698] sm:$0xff] %vm272, 0.0
        %485 = vst.msk [vmem:[#allocation2 + $0x6a0] sm:$0xff] %vm272, 0.0
        %486 = vst.msk [vmem:[#allocation2 + $0x6a8] sm:$0xff] %vm272, 0.0
        %487 = vst.msk [vmem:[#allocation2 + $0x6b0] sm:$0xff] %vm272, 0.0
        %488 = vst.msk [vmem:[#allocation2 + $0x6b8] sm:$0xff] %vm272, 0.0
        %489 = vst.msk [vmem:[#allocation2 + $0x6c0] sm:$0xff] %vm272, 0.0
        %490 = vst.msk [vmem:[#allocation2 + $0x6c8] sm:$0xff] %vm272, 0.0
        %491 = vst.msk [vmem:[#allocation2 + $0x6d0] sm:$0xff] %vm272, 0.0
        %492 = vst.msk [vmem:[#allocation2 + $0x6d8] sm:$0xff] %vm272, 0.0
        %493 = vst.msk [vmem:[#allocation2 + $0x6e0] sm:$0xff] %vm272, 0.0
        %494 = vst.msk [vmem:[#allocation2 + $0x6e8] sm:$0xff] %vm272, 0.0
        %495 = vst.msk [vmem:[#allocation2 + $0x6f0] sm:$0xff] %vm272, 0.0
        %496 = vst.msk [vmem:[#allocation2 + $0x6f8] sm:$0xff] %vm272, 0.0
        %497 = vst.msk [vmem:[#allocation2 + $0x700] sm:$0xff] %vm272, 0.0
        %498 = vst.msk [vmem:[#allocation2 + $0x708] sm:$0xff] %vm272, 0.0
        %499 = vst.msk [vmem:[#allocation2 + $0x710] sm:$0xff] %vm272, 0.0
        %500 = vst.msk [vmem:[#allocation2 + $0x718] sm:$0xff] %vm272, 0.0
        %501 = vst.msk [vmem:[#allocation2 + $0x720] sm:$0xff] %vm272, 0.0
        %502 = vst.msk [vmem:[#allocation2 + $0x728] sm:$0xff] %vm272, 0.0
        %503 = vst.msk [vmem:[#allocation2 + $0x730] sm:$0xff] %vm272, 0.0
        %504 = vst.msk [vmem:[#allocation2 + $0x738] sm:$0xff] %vm272, 0.0
        %505 = vst.msk [vmem:[#allocation2 + $0x740] sm:$0xff] %vm272, 0.0
        %506 = vst.msk [vmem:[#allocation2 + $0x748] sm:$0xff] %vm272, 0.0
        %507 = vst.msk [vmem:[#allocation2 + $0x750] sm:$0xff] %vm272, 0.0
        %508 = vst.msk [vmem:[#allocation2 + $0x758] sm:$0xff] %vm272, 0.0
        %509 = vst.msk [vmem:[#allocation2 + $0x760] sm:$0xff] %vm272, 0.0
        %510 = vst.msk [vmem:[#allocation2 + $0x768] sm:$0xff] %vm272, 0.0
        %511 = vst.msk [vmem:[#allocation2 + $0x770] sm:$0xff] %vm272, 0.0
        %512 = vst.msk [vmem:[#allocation2 + $0x778] sm:$0xff] %vm272, 0.0
        %513 = vst.msk [vmem:[#allocation2 + $0x780] sm:$0xff] %vm272, 0.0
        %514 = vst.msk [vmem:[#allocation2 + $0x788] sm:$0xff] %vm272, 0.0
        %515 = vst.msk [vmem:[#allocation2 + $0x790] sm:$0xff] %vm272, 0.0
        %516 = vst.msk [vmem:[#allocation2 + $0x798] sm:$0xff] %vm272, 0.0
        %517 = vst.msk [vmem:[#allocation2 + $0x7a0] sm:$0xff] %vm272, 0.0
        %518 = vst.msk [vmem:[#allocation2 + $0x7a8] sm:$0xff] %vm272, 0.0
        %519 = vst.msk [vmem:[#allocation2 + $0x7b0] sm:$0xff] %vm272, 0.0
        %520 = vst.msk [vmem:[#allocation2 + $0x7b8] sm:$0xff] %vm272, 0.0
        %521 = vst.msk [vmem:[#allocation2 + $0x7c0] sm:$0xff] %vm272, 0.0
        %522 = vst.msk [vmem:[#allocation2 + $0x7c8] sm:$0xff] %vm272, 0.0
        %523 = vst.msk [vmem:[#allocation2 + $0x7d0] sm:$0xff] %vm272, 0.0
        %524 = vst.msk [vmem:[#allocation2 + $0x7d8] sm:$0xff] %vm272, 0.0
        %525 = vst.msk [vmem:[#allocation2 + $0x7e0] sm:$0xff] %vm272, 0.0
        %526 = vst.msk [vmem:[#allocation2 + $0x7e8] sm:$0xff] %vm272, 0.0
        %527 = vst.msk [vmem:[#allocation2 + $0x7f0] sm:$0xff] %vm272, 0.0
        %528 = vst.msk [vmem:[#allocation2 + $0x7f8] sm:$0xff] %vm272, 0.0
      $region36: #{fused_matmul.1} parent=31 // pred_fallthru
        _
      %v529 = vld [vmem:[#allocation2] sm:$0xff]
      %v530 = vld [vmem:[#allocation2 + $0x8] sm:$0xff]
      %v531 = vld [vmem:[#allocation2 + $0x10] sm:$0xff]
      %v532 = vld [vmem:[#allocation2 + $0x18] sm:$0xff]
      %v533 = vld [vmem:[#allocation2 + $0x20] sm:$0xff]
      %v534 = vld [vmem:[#allocation2 + $0x28] sm:$0xff]
      %v535 = vld [vmem:[#allocation2 + $0x30] sm:$0xff]
      %v536 = vld [vmem:[#allocation2 + $0x38] sm:$0xff]
      %v537 = vld [vmem:[#allocation2 + $0x40] sm:$0xff]
      %v538 = vld [vmem:[#allocation2 + $0x48] sm:$0xff]
      %v539 = vld [vmem:[#allocation2 + $0x50] sm:$0xff]
      %v540 = vld [vmem:[#allocation2 + $0x58] sm:$0xff]
      %v541 = vld [vmem:[#allocation2 + $0x60] sm:$0xff]
      %v542 = vld [vmem:[#allocation2 + $0x68] sm:$0xff]
      %v543 = vld [vmem:[#allocation2 + $0x70] sm:$0xff]
      %v544 = vld [vmem:[#allocation2 + $0x78] sm:$0xff]
      %v545 = vld [vmem:[#allocation2 + $0x80] sm:$0xff]
      %v546 = vld [vmem:[#allocation2 + $0x88] sm:$0xff]
      %v547 = vld [vmem:[#allocation2 + $0x90] sm:$0xff]
      %v548 = vld [vmem:[#allocation2 + $0x98] sm:$0xff]
      %v549 = vld [vmem:[#allocation2 + $0xa0] sm:$0xff]
      %v550 = vld [vmem:[#allocation2 + $0xa8] sm:$0xff]
      %v551 = vld [vmem:[#allocation2 + $0xb0] sm:$0xff]
      %v552 = vld [vmem:[#allocation2 + $0xb8] sm:$0xff]
      %v553 = vld [vmem:[#allocation2 + $0xc0] sm:$0xff]
      %v554 = vld [vmem:[#allocation2 + $0xc8] sm:$0xff]
      %v555 = vld [vmem:[#allocation2 + $0xd0] sm:$0xff]
      %v556 = vld [vmem:[#allocation2 + $0xd8] sm:$0xff]
      %v557 = vld [vmem:[#allocation2 + $0xe0] sm:$0xff]
      %v558 = vld [vmem:[#allocation2 + $0xe8] sm:$0xff]
      %v559 = vld [vmem:[#allocation2 + $0xf0] sm:$0xff]
      %v560 = vld [vmem:[#allocation2 + $0xf8] sm:$0xff]
      %v561 = vld [vmem:[#allocation2 + $0x100] sm:$0xff]
      %v562 = vld [vmem:[#allocation2 + $0x108] sm:$0xff]
      %v563 = vld [vmem:[#allocation2 + $0x110] sm:$0xff]
      %v564 = vld [vmem:[#allocation2 + $0x118] sm:$0xff]
      %v565 = vld [vmem:[#allocation2 + $0x120] sm:$0xff]
      %v566 = vld [vmem:[#allocation2 + $0x128] sm:$0xff]
      %v567 = vld [vmem:[#allocation2 + $0x130] sm:$0xff]
      %v568 = vld [vmem:[#allocation2 + $0x138] sm:$0xff]
      %v569 = vld [vmem:[#allocation2 + $0x140] sm:$0xff]
      %v570 = vld [vmem:[#allocation2 + $0x148] sm:$0xff]
      %v571 = vld [vmem:[#allocation2 + $0x150] sm:$0xff]
      %v572 = vld [vmem:[#allocation2 + $0x158] sm:$0xff]
      %v573 = vld [vmem:[#allocation2 + $0x160] sm:$0xff]
      %v574 = vld [vmem:[#allocation2 + $0x168] sm:$0xff]
      %v575 = vld [vmem:[#allocation2 + $0x170] sm:$0xff]
      %v576 = vld [vmem:[#allocation2 + $0x178] sm:$0xff]
      %v577 = vld [vmem:[#allocation2 + $0x180] sm:$0xff]
      %v578 = vld [vmem:[#allocation2 + $0x188] sm:$0xff]
      %v579 = vld [vmem:[#allocation2 + $0x190] sm:$0xff]
      %v580 = vld [vmem:[#allocation2 + $0x198] sm:$0xff]
      %v581 = vld [vmem:[#allocation2 + $0x1a0] sm:$0xff]
      %v582 = vld [vmem:[#allocation2 + $0x1a8] sm:$0xff]
      %v583 = vld [vmem:[#allocation2 + $0x1b0] sm:$0xff]
      %v584 = vld [vmem:[#allocation2 + $0x1b8] sm:$0xff]
      %v585 = vld [vmem:[#allocation2 + $0x1c0] sm:$0xff]
      %v586 = vld [vmem:[#allocation2 + $0x1c8] sm:$0xff]
      %v587 = vld [vmem:[#allocation2 + $0x1d0] sm:$0xff]
      %v588 = vld [vmem:[#allocation2 + $0x1d8] sm:$0xff]
      %v589 = vld [vmem:[#allocation2 + $0x1e0] sm:$0xff]
      %v590 = vld [vmem:[#allocation2 + $0x1e8] sm:$0xff]
      %v591 = vld [vmem:[#allocation2 + $0x1f0] sm:$0xff]
      %v592 = vld [vmem:[#allocation2 + $0x1f8] sm:$0xff]
      %v593 = vld [vmem:[#allocation2 + $0x200] sm:$0xff]
      %v594 = vld [vmem:[#allocation2 + $0x208] sm:$0xff]
      %v595 = vld [vmem:[#allocation2 + $0x210] sm:$0xff]
      %v596 = vld [vmem:[#allocation2 + $0x218] sm:$0xff]
      %v597 = vld [vmem:[#allocation2 + $0x220] sm:$0xff]
      %v598 = vld [vmem:[#allocation2 + $0x228] sm:$0xff]
      %v599 = vld [vmem:[#allocation2 + $0x230] sm:$0xff]
      %v600 = vld [vmem:[#allocation2 + $0x238] sm:$0xff]
      %v601 = vld [vmem:[#allocation2 + $0x240] sm:$0xff]
      %v602 = vld [vmem:[#allocation2 + $0x248] sm:$0xff]
      %v603 = vld [vmem:[#allocation2 + $0x250] sm:$0xff]
      %v604 = vld [vmem:[#allocation2 + $0x258] sm:$0xff]
      %v605 = vld [vmem:[#allocation2 + $0x260] sm:$0xff]
      %v606 = vld [vmem:[#allocation2 + $0x268] sm:$0xff]
      %v607 = vld [vmem:[#allocation2 + $0x270] sm:$0xff]
      %v608 = vld [vmem:[#allocation2 + $0x278] sm:$0xff]
      %v609 = vld [vmem:[#allocation2 + $0x280] sm:$0xff]
      %v610 = vld [vmem:[#allocation2 + $0x288] sm:$0xff]
      %v611 = vld [vmem:[#allocation2 + $0x290] sm:$0xff]
      %v612 = vld [vmem:[#allocation2 + $0x298] sm:$0xff]
      %v613 = vld [vmem:[#allocation2 + $0x2a0] sm:$0xff]
      %v614 = vld [vmem:[#allocation2 + $0x2a8] sm:$0xff]
      %v615 = vld [vmem:[#allocation2 + $0x2b0] sm:$0xff]
      %v616 = vld [vmem:[#allocation2 + $0x2b8] sm:$0xff]
      %v617 = vld [vmem:[#allocation2 + $0x2c0] sm:$0xff]
      %v618 = vld [vmem:[#allocation2 + $0x2c8] sm:$0xff]
      %v619 = vld [vmem:[#allocation2 + $0x2d0] sm:$0xff]
      %v620 = vld [vmem:[#allocation2 + $0x2d8] sm:$0xff]
      %v621 = vld [vmem:[#allocation2 + $0x2e0] sm:$0xff]
      %v622 = vld [vmem:[#allocation2 + $0x2e8] sm:$0xff]
      %v623 = vld [vmem:[#allocation2 + $0x2f0] sm:$0xff]
      %v624 = vld [vmem:[#allocation2 + $0x2f8] sm:$0xff]
      %v625 = vld [vmem:[#allocation2 + $0x300] sm:$0xff]
      %v626 = vld [vmem:[#allocation2 + $0x308] sm:$0xff]
      %v627 = vld [vmem:[#allocation2 + $0x310] sm:$0xff]
      %v628 = vld [vmem:[#allocation2 + $0x318] sm:$0xff]
      %v629 = vld [vmem:[#allocation2 + $0x320] sm:$0xff]
      %v630 = vld [vmem:[#allocation2 + $0x328] sm:$0xff]
      %v631 = vld [vmem:[#allocation2 + $0x330] sm:$0xff]
      %v632 = vld [vmem:[#allocation2 + $0x338] sm:$0xff]
      %v633 = vld [vmem:[#allocation2 + $0x340] sm:$0xff]
      %v634 = vld [vmem:[#allocation2 + $0x348] sm:$0xff]
      %v635 = vld [vmem:[#allocation2 + $0x350] sm:$0xff]
      %v636 = vld [vmem:[#allocation2 + $0x358] sm:$0xff]
      %v637 = vld [vmem:[#allocation2 + $0x360] sm:$0xff]
      %v638 = vld [vmem:[#allocation2 + $0x368] sm:$0xff]
      %v639 = vld [vmem:[#allocation2 + $0x370] sm:$0xff]
      %v640 = vld [vmem:[#allocation2 + $0x378] sm:$0xff]
      %v641 = vld [vmem:[#allocation2 + $0x380] sm:$0xff]
      %v642 = vld [vmem:[#allocation2 + $0x388] sm:$0xff]
      %v643 = vld [vmem:[#allocation2 + $0x390] sm:$0xff]
      %v644 = vld [vmem:[#allocation2 + $0x398] sm:$0xff]
      %v645 = vld [vmem:[#allocation2 + $0x3a0] sm:$0xff]
      %v646 = vld [vmem:[#allocation2 + $0x3a8] sm:$0xff]
      %v647 = vld [vmem:[#allocation2 + $0x3b0] sm:$0xff]
      %v648 = vld [vmem:[#allocation2 + $0x3b8] sm:$0xff]
      %v649 = vld [vmem:[#allocation2 + $0x3c0] sm:$0xff]
      %v650 = vld [vmem:[#allocation2 + $0x3c8] sm:$0xff]
      %v651 = vld [vmem:[#allocation2 + $0x3d0] sm:$0xff]
      %v652 = vld [vmem:[#allocation2 + $0x3d8] sm:$0xff]
      %v653 = vld [vmem:[#allocation2 + $0x3e0] sm:$0xff]
      %v654 = vld [vmem:[#allocation2 + $0x3e8] sm:$0xff]
      %v655 = vld [vmem:[#allocation2 + $0x3f0] sm:$0xff]
      %v656 = vld [vmem:[#allocation2 + $0x3f8] sm:$0xff]
      %v657 = vld [vmem:[#allocation2 + $0x400] sm:$0xff]
      %v658 = vld [vmem:[#allocation2 + $0x408] sm:$0xff]
      %v659 = vld [vmem:[#allocation2 + $0x410] sm:$0xff]
      %v660 = vld [vmem:[#allocation2 + $0x418] sm:$0xff]
      %v661 = vld [vmem:[#allocation2 + $0x420] sm:$0xff]
      %v662 = vld [vmem:[#allocation2 + $0x428] sm:$0xff]
      %v663 = vld [vmem:[#allocation2 + $0x430] sm:$0xff]
      %v664 = vld [vmem:[#allocation2 + $0x438] sm:$0xff]
      %v665 = vld [vmem:[#allocation2 + $0x440] sm:$0xff]
      %v666 = vld [vmem:[#allocation2 + $0x448] sm:$0xff]
      %v667 = vld [vmem:[#allocation2 + $0x450] sm:$0xff]
      %v668 = vld [vmem:[#allocation2 + $0x458] sm:$0xff]
      %v669 = vld [vmem:[#allocation2 + $0x460] sm:$0xff]
      %v670 = vld [vmem:[#allocation2 + $0x468] sm:$0xff]
      %v671 = vld [vmem:[#allocation2 + $0x470] sm:$0xff]
      %v672 = vld [vmem:[#allocation2 + $0x478] sm:$0xff]
      %v673 = vld [vmem:[#allocation2 + $0x480] sm:$0xff]
      %v674 = vld [vmem:[#allocation2 + $0x488] sm:$0xff]
      %v675 = vld [vmem:[#allocation2 + $0x490] sm:$0xff]
      %v676 = vld [vmem:[#allocation2 + $0x498] sm:$0xff]
      %v677 = vld [vmem:[#allocation2 + $0x4a0] sm:$0xff]
      %v678 = vld [vmem:[#allocation2 + $0x4a8] sm:$0xff]
      %v679 = vld [vmem:[#allocation2 + $0x4b0] sm:$0xff]
      %v680 = vld [vmem:[#allocation2 + $0x4b8] sm:$0xff]
      %v681 = vld [vmem:[#allocation2 + $0x4c0] sm:$0xff]
      %v682 = vld [vmem:[#allocation2 + $0x4c8] sm:$0xff]
      %v683 = vld [vmem:[#allocation2 + $0x4d0] sm:$0xff]
      %v684 = vld [vmem:[#allocation2 + $0x4d8] sm:$0xff]
      %v685 = vld [vmem:[#allocation2 + $0x4e0] sm:$0xff]
      %v686 = vld [vmem:[#allocation2 + $0x4e8] sm:$0xff]
      %v687 = vld [vmem:[#allocation2 + $0x4f0] sm:$0xff]
      %v688 = vld [vmem:[#allocation2 + $0x4f8] sm:$0xff]
      %v689 = vld [vmem:[#allocation2 + $0x500] sm:$0xff]
      %v690 = vld [vmem:[#allocation2 + $0x508] sm:$0xff]
      %v691 = vld [vmem:[#allocation2 + $0x510] sm:$0xff]
      %v692 = vld [vmem:[#allocation2 + $0x518] sm:$0xff]
      %v693 = vld [vmem:[#allocation2 + $0x520] sm:$0xff]
      %v694 = vld [vmem:[#allocation2 + $0x528] sm:$0xff]
      %v695 = vld [vmem:[#allocation2 + $0x530] sm:$0xff]
      %v696 = vld [vmem:[#allocation2 + $0x538] sm:$0xff]
      %v697 = vld [vmem:[#allocation2 + $0x540] sm:$0xff]
      %v698 = vld [vmem:[#allocation2 + $0x548] sm:$0xff]
      %v699 = vld [vmem:[#allocation2 + $0x550] sm:$0xff]
      %v700 = vld [vmem:[#allocation2 + $0x558] sm:$0xff]
      %v701 = vld [vmem:[#allocation2 + $0x560] sm:$0xff]
      %v702 = vld [vmem:[#allocation2 + $0x568] sm:$0xff]
      %v703 = vld [vmem:[#allocation2 + $0x570] sm:$0xff]
      %v704 = vld [vmem:[#allocation2 + $0x578] sm:$0xff]
      %v705 = vld [vmem:[#allocation2 + $0x580] sm:$0xff]
      %v706 = vld [vmem:[#allocation2 + $0x588] sm:$0xff]
      %v707 = vld [vmem:[#allocation2 + $0x590] sm:$0xff]
      %v708 = vld [vmem:[#allocation2 + $0x598] sm:$0xff]
      %v709 = vld [vmem:[#allocation2 + $0x5a0] sm:$0xff]
      %v710 = vld [vmem:[#allocation2 + $0x5a8] sm:$0xff]
      %v711 = vld [vmem:[#allocation2 + $0x5b0] sm:$0xff]
      %v712 = vld [vmem:[#allocation2 + $0x5b8] sm:$0xff]
      %v713 = vld [vmem:[#allocation2 + $0x5c0] sm:$0xff]
      %v714 = vld [vmem:[#allocation2 + $0x5c8] sm:$0xff]
      %v715 = vld [vmem:[#allocation2 + $0x5d0] sm:$0xff]
      %v716 = vld [vmem:[#allocation2 + $0x5d8] sm:$0xff]
      %v717 = vld [vmem:[#allocation2 + $0x5e0] sm:$0xff]
      %v718 = vld [vmem:[#allocation2 + $0x5e8] sm:$0xff]
      %v719 = vld [vmem:[#allocation2 + $0x5f0] sm:$0xff]
      %v720 = vld [vmem:[#allocation2 + $0x5f8] sm:$0xff]
      %v721 = vld [vmem:[#allocation2 + $0x600] sm:$0xff]
      %v722 = vld [vmem:[#allocation2 + $0x608] sm:$0xff]
      %v723 = vld [vmem:[#allocation2 + $0x610] sm:$0xff]
      %v724 = vld [vmem:[#allocation2 + $0x618] sm:$0xff]
      %v725 = vld [vmem:[#allocation2 + $0x620] sm:$0xff]
      %v726 = vld [vmem:[#allocation2 + $0x628] sm:$0xff]
      %v727 = vld [vmem:[#allocation2 + $0x630] sm:$0xff]
      %v728 = vld [vmem:[#allocation2 + $0x638] sm:$0xff]
      %v729 = vld [vmem:[#allocation2 + $0x640] sm:$0xff]
      %v730 = vld [vmem:[#allocation2 + $0x648] sm:$0xff]
      %v731 = vld [vmem:[#allocation2 + $0x650] sm:$0xff]
      %v732 = vld [vmem:[#allocation2 + $0x658] sm:$0xff]
      %v733 = vld [vmem:[#allocation2 + $0x660] sm:$0xff]
      %v734 = vld [vmem:[#allocation2 + $0x668] sm:$0xff]
      %v735 = vld [vmem:[#allocation2 + $0x670] sm:$0xff]
      %v736 = vld [vmem:[#allocation2 + $0x678] sm:$0xff]
      %v737 = vld [vmem:[#allocation2 + $0x680] sm:$0xff]
      %v738 = vld [vmem:[#allocation2 + $0x688] sm:$0xff]
      %v739 = vld [vmem:[#allocation2 + $0x690] sm:$0xff]
      %v740 = vld [vmem:[#allocation2 + $0x698] sm:$0xff]
      %v741 = vld [vmem:[#allocation2 + $0x6a0] sm:$0xff]
      %v742 = vld [vmem:[#allocation2 + $0x6a8] sm:$0xff]
      %v743 = vld [vmem:[#allocation2 + $0x6b0] sm:$0xff]
      %v744 = vld [vmem:[#allocation2 + $0x6b8] sm:$0xff]
      %v745 = vld [vmem:[#allocation2 + $0x6c0] sm:$0xff]
      %v746 = vld [vmem:[#allocation2 + $0x6c8] sm:$0xff]
      %v747 = vld [vmem:[#allocation2 + $0x6d0] sm:$0xff]
      %v748 = vld [vmem:[#allocation2 + $0x6d8] sm:$0xff]
      %v749 = vld [vmem:[#allocation2 + $0x6e0] sm:$0xff]
      %v750 = vld [vmem:[#allocation2 + $0x6e8] sm:$0xff]
      %v751 = vld [vmem:[#allocation2 + $0x6f0] sm:$0xff]
      %v752 = vld [vmem:[#allocation2 + $0x6f8] sm:$0xff]
      %v753 = vld [vmem:[#allocation2 + $0x700] sm:$0xff]
      %v754 = vld [vmem:[#allocation2 + $0x708] sm:$0xff]
      %v755 = vld [vmem:[#allocation2 + $0x710] sm:$0xff]
      %v756 = vld [vmem:[#allocation2 + $0x718] sm:$0xff]
      %v757 = vld [vmem:[#allocation2 + $0x720] sm:$0xff]
      %v758 = vld [vmem:[#allocation2 + $0x728] sm:$0xff]
      %v759 = vld [vmem:[#allocation2 + $0x730] sm:$0xff]
      %v760 = vld [vmem:[#allocation2 + $0x738] sm:$0xff]
      %v761 = vld [vmem:[#allocation2 + $0x740] sm:$0xff]
      %v762 = vld [vmem:[#allocation2 + $0x748] sm:$0xff]
      %v763 = vld [vmem:[#allocation2 + $0x750] sm:$0xff]
      %v764 = vld [vmem:[#allocation2 + $0x758] sm:$0xff]
      %v765 = vld [vmem:[#allocation2 + $0x760] sm:$0xff]
      %v766 = vld [vmem:[#allocation2 + $0x768] sm:$0xff]
      %v767 = vld [vmem:[#allocation2 + $0x770] sm:$0xff]
      %v768 = vld [vmem:[#allocation2 + $0x778] sm:$0xff]
      %v769 = vld [vmem:[#allocation2 + $0x780] sm:$0xff]
      %v770 = vld [vmem:[#allocation2 + $0x788] sm:$0xff]
      %v771 = vld [vmem:[#allocation2 + $0x790] sm:$0xff]
      %v772 = vld [vmem:[#allocation2 + $0x798] sm:$0xff]
      %v773 = vld [vmem:[#allocation2 + $0x7a0] sm:$0xff]
      %v774 = vld [vmem:[#allocation2 + $0x7a8] sm:$0xff]
      %v775 = vld [vmem:[#allocation2 + $0x7b0] sm:$0xff]
      %v776 = vld [vmem:[#allocation2 + $0x7b8] sm:$0xff]
      %v777 = vld [vmem:[#allocation2 + $0x7c0] sm:$0xff]
      %v778 = vld [vmem:[#allocation2 + $0x7c8] sm:$0xff]
      %v779 = vld [vmem:[#allocation2 + $0x7d0] sm:$0xff]
      %v780 = vld [vmem:[#allocation2 + $0x7d8] sm:$0xff]
      %v781 = vld [vmem:[#allocation2 + $0x7e0] sm:$0xff]
      %v782 = vld [vmem:[#allocation2 + $0x7e8] sm:$0xff]
      %v783 = vld [vmem:[#allocation2 + $0x7f0] sm:$0xff]
      %v784 = vld [vmem:[#allocation2 + $0x7f8] sm:$0xff]
      %v785 = vld [vmem:[%s243] sm:$0xff]
      %v786 = vld [vmem:[%s243 + $0x8] sm:$0xff]
      %v787 = vld [vmem:[%s243 + $0x10] sm:$0xff]
      %v788 = vld [vmem:[%s243 + $0x18] sm:$0xff]
      %v789 = vld [vmem:[%s243 + $0x20] sm:$0xff]
      %v790 = vld [vmem:[%s243 + $0x28] sm:$0xff]
      %v791 = vld [vmem:[%s243 + $0x30] sm:$0xff]
      %v792 = vld [vmem:[%s243 + $0x38] sm:$0xff]
      %v793 = vld [vmem:[%s243 + $0x40] sm:$0xff]
      %v794 = vld [vmem:[%s243 + $0x48] sm:$0xff]
      %v795 = vld [vmem:[%s243 + $0x50] sm:$0xff]
      %v796 = vld [vmem:[%s243 + $0x58] sm:$0xff]
      %v797 = vld [vmem:[%s243 + $0x60] sm:$0xff]
      %v798 = vld [vmem:[%s243 + $0x68] sm:$0xff]
      %v799 = vld [vmem:[%s243 + $0x70] sm:$0xff]
      %v800 = vld [vmem:[%s243 + $0x78] sm:$0xff]
      %v801 = vld [vmem:[%s243 + $0x80] sm:$0xff]
      %v802 = vld [vmem:[%s243 + $0x88] sm:$0xff]
      %v803 = vld [vmem:[%s243 + $0x90] sm:$0xff]
      %v804 = vld [vmem:[%s243 + $0x98] sm:$0xff]
      %v805 = vld [vmem:[%s243 + $0xa0] sm:$0xff]
      %v806 = vld [vmem:[%s243 + $0xa8] sm:$0xff]
      %v807 = vld [vmem:[%s243 + $0xb0] sm:$0xff]
      %v808 = vld [vmem:[%s243 + $0xb8] sm:$0xff]
      %v809 = vld [vmem:[%s243 + $0xc0] sm:$0xff]
      %v810 = vld [vmem:[%s243 + $0xc8] sm:$0xff]
      %v811 = vld [vmem:[%s243 + $0xd0] sm:$0xff]
      %v812 = vld [vmem:[%s243 + $0xd8] sm:$0xff]
      %v813 = vld [vmem:[%s243 + $0xe0] sm:$0xff]
      %v814 = vld [vmem:[%s243 + $0xe8] sm:$0xff]
      %v815 = vld [vmem:[%s243 + $0xf0] sm:$0xff]
      %v816 = vld [vmem:[%s243 + $0xf8] sm:$0xff]
      %v817 = vld [vmem:[%s243 + $0x100] sm:$0xff]
      %v818 = vld [vmem:[%s243 + $0x108] sm:$0xff]
      %v819 = vld [vmem:[%s243 + $0x110] sm:$0xff]
      %v820 = vld [vmem:[%s243 + $0x118] sm:$0xff]
      %v821 = vld [vmem:[%s243 + $0x120] sm:$0xff]
      %v822 = vld [vmem:[%s243 + $0x128] sm:$0xff]
      %v823 = vld [vmem:[%s243 + $0x130] sm:$0xff]
      %v824 = vld [vmem:[%s243 + $0x138] sm:$0xff]
      %v825 = vld [vmem:[%s243 + $0x140] sm:$0xff]
      %v826 = vld [vmem:[%s243 + $0x148] sm:$0xff]
      %v827 = vld [vmem:[%s243 + $0x150] sm:$0xff]
      %v828 = vld [vmem:[%s243 + $0x158] sm:$0xff]
      %v829 = vld [vmem:[%s243 + $0x160] sm:$0xff]
      %v830 = vld [vmem:[%s243 + $0x168] sm:$0xff]
      %v831 = vld [vmem:[%s243 + $0x170] sm:$0xff]
      %v832 = vld [vmem:[%s243 + $0x178] sm:$0xff]
      %v833 = vld [vmem:[%s243 + $0x180] sm:$0xff]
      %v834 = vld [vmem:[%s243 + $0x188] sm:$0xff]
      %v835 = vld [vmem:[%s243 + $0x190] sm:$0xff]
      %v836 = vld [vmem:[%s243 + $0x198] sm:$0xff]
      %v837 = vld [vmem:[%s243 + $0x1a0] sm:$0xff]
      %v838 = vld [vmem:[%s243 + $0x1a8] sm:$0xff]
      %v839 = vld [vmem:[%s243 + $0x1b0] sm:$0xff]
      %v840 = vld [vmem:[%s243 + $0x1b8] sm:$0xff]
      %v841 = vld [vmem:[%s243 + $0x1c0] sm:$0xff]
      %v842 = vld [vmem:[%s243 + $0x1c8] sm:$0xff]
      %v843 = vld [vmem:[%s243 + $0x1d0] sm:$0xff]
      %v844 = vld [vmem:[%s243 + $0x1d8] sm:$0xff]
      %v845 = vld [vmem:[%s243 + $0x1e0] sm:$0xff]
      %v846 = vld [vmem:[%s243 + $0x1e8] sm:$0xff]
      %v847 = vld [vmem:[%s243 + $0x1f0] sm:$0xff]
      %v848 = vld [vmem:[%s243 + $0x1f8] sm:$0xff]
      %v849 = vld [vmem:[%s243 + $0x200] sm:$0xff]
      %v850 = vld [vmem:[%s243 + $0x208] sm:$0xff]
      %v851 = vld [vmem:[%s243 + $0x210] sm:$0xff]
      %v852 = vld [vmem:[%s243 + $0x218] sm:$0xff]
      %v853 = vld [vmem:[%s243 + $0x220] sm:$0xff]
      %v854 = vld [vmem:[%s243 + $0x228] sm:$0xff]
      %v855 = vld [vmem:[%s243 + $0x230] sm:$0xff]
      %v856 = vld [vmem:[%s243 + $0x238] sm:$0xff]
      %v857 = vld [vmem:[%s243 + $0x240] sm:$0xff]
      %v858 = vld [vmem:[%s243 + $0x248] sm:$0xff]
      %v859 = vld [vmem:[%s243 + $0x250] sm:$0xff]
      %v860 = vld [vmem:[%s243 + $0x258] sm:$0xff]
      %v861 = vld [vmem:[%s243 + $0x260] sm:$0xff]
      %v862 = vld [vmem:[%s243 + $0x268] sm:$0xff]
      %v863 = vld [vmem:[%s243 + $0x270] sm:$0xff]
      %v864 = vld [vmem:[%s243 + $0x278] sm:$0xff]
      %v865 = vld [vmem:[%s243 + $0x280] sm:$0xff]
      %v866 = vld [vmem:[%s243 + $0x288] sm:$0xff]
      %v867 = vld [vmem:[%s243 + $0x290] sm:$0xff]
      %v868 = vld [vmem:[%s243 + $0x298] sm:$0xff]
      %v869 = vld [vmem:[%s243 + $0x2a0] sm:$0xff]
      %v870 = vld [vmem:[%s243 + $0x2a8] sm:$0xff]
      %v871 = vld [vmem:[%s243 + $0x2b0] sm:$0xff]
      %v872 = vld [vmem:[%s243 + $0x2b8] sm:$0xff]
      %v873 = vld [vmem:[%s243 + $0x2c0] sm:$0xff]
      %v874 = vld [vmem:[%s243 + $0x2c8] sm:$0xff]
      %v875 = vld [vmem:[%s243 + $0x2d0] sm:$0xff]
      %v876 = vld [vmem:[%s243 + $0x2d8] sm:$0xff]
      %v877 = vld [vmem:[%s243 + $0x2e0] sm:$0xff]
      %v878 = vld [vmem:[%s243 + $0x2e8] sm:$0xff]
      %v879 = vld [vmem:[%s243 + $0x2f0] sm:$0xff]
      %v880 = vld [vmem:[%s243 + $0x2f8] sm:$0xff]
      %v881 = vld [vmem:[%s243 + $0x300] sm:$0xff]
      %v882 = vld [vmem:[%s243 + $0x308] sm:$0xff]
      %v883 = vld [vmem:[%s243 + $0x310] sm:$0xff]
      %v884 = vld [vmem:[%s243 + $0x318] sm:$0xff]
      %v885 = vld [vmem:[%s243 + $0x320] sm:$0xff]
      %v886 = vld [vmem:[%s243 + $0x328] sm:$0xff]
      %v887 = vld [vmem:[%s243 + $0x330] sm:$0xff]
      %v888 = vld [vmem:[%s243 + $0x338] sm:$0xff]
      %v889 = vld [vmem:[%s243 + $0x340] sm:$0xff]
      %v890 = vld [vmem:[%s243 + $0x348] sm:$0xff]
      %v891 = vld [vmem:[%s243 + $0x350] sm:$0xff]
      %v892 = vld [vmem:[%s243 + $0x358] sm:$0xff]
      %v893 = vld [vmem:[%s243 + $0x360] sm:$0xff]
      %v894 = vld [vmem:[%s243 + $0x368] sm:$0xff]
      %v895 = vld [vmem:[%s243 + $0x370] sm:$0xff]
      %v896 = vld [vmem:[%s243 + $0x378] sm:$0xff]
      %v897 = vld [vmem:[%s243 + $0x380] sm:$0xff]
      %v898 = vld [vmem:[%s243 + $0x388] sm:$0xff]
      %v899 = vld [vmem:[%s243 + $0x390] sm:$0xff]
      %v900 = vld [vmem:[%s243 + $0x398] sm:$0xff]
      %v901 = vld [vmem:[%s243 + $0x3a0] sm:$0xff]
      %v902 = vld [vmem:[%s243 + $0x3a8] sm:$0xff]
      %v903 = vld [vmem:[%s243 + $0x3b0] sm:$0xff]
      %v904 = vld [vmem:[%s243 + $0x3b8] sm:$0xff]
      %v905 = vld [vmem:[%s243 + $0x3c0] sm:$0xff]
      %v906 = vld [vmem:[%s243 + $0x3c8] sm:$0xff]
      %v907 = vld [vmem:[%s243 + $0x3d0] sm:$0xff]
      %v908 = vld [vmem:[%s243 + $0x3d8] sm:$0xff]
      %v909 = vld [vmem:[%s243 + $0x3e0] sm:$0xff]
      %v910 = vld [vmem:[%s243 + $0x3e8] sm:$0xff]
      %v911 = vld [vmem:[%s243 + $0x3f0] sm:$0xff]
      %v912 = vld [vmem:[%s243 + $0x3f8] sm:$0xff]
      %v913 = vld [vmem:[%s243 + $0x400] sm:$0xff]
      %v914 = vld [vmem:[%s243 + $0x408] sm:$0xff]
      %v915 = vld [vmem:[%s243 + $0x410] sm:$0xff]
      %v916 = vld [vmem:[%s243 + $0x418] sm:$0xff]
      %v917 = vld [vmem:[%s243 + $0x420] sm:$0xff]
      %v918 = vld [vmem:[%s243 + $0x428] sm:$0xff]
      %v919 = vld [vmem:[%s243 + $0x430] sm:$0xff]
      %v920 = vld [vmem:[%s243 + $0x438] sm:$0xff]
      %v921 = vld [vmem:[%s243 + $0x440] sm:$0xff]
      %v922 = vld [vmem:[%s243 + $0x448] sm:$0xff]
      %v923 = vld [vmem:[%s243 + $0x450] sm:$0xff]
      %v924 = vld [vmem:[%s243 + $0x458] sm:$0xff]
      %v925 = vld [vmem:[%s243 + $0x460] sm:$0xff]
      %v926 = vld [vmem:[%s243 + $0x468] sm:$0xff]
      %v927 = vld [vmem:[%s243 + $0x470] sm:$0xff]
      %v928 = vld [vmem:[%s243 + $0x478] sm:$0xff]
      %v929 = vld [vmem:[%s243 + $0x480] sm:$0xff]
      %v930 = vld [vmem:[%s243 + $0x488] sm:$0xff]
      %v931 = vld [vmem:[%s243 + $0x490] sm:$0xff]
      %v932 = vld [vmem:[%s243 + $0x498] sm:$0xff]
      %v933 = vld [vmem:[%s243 + $0x4a0] sm:$0xff]
      %v934 = vld [vmem:[%s243 + $0x4a8] sm:$0xff]
      %v935 = vld [vmem:[%s243 + $0x4b0] sm:$0xff]
      %v936 = vld [vmem:[%s243 + $0x4b8] sm:$0xff]
      %v937 = vld [vmem:[%s243 + $0x4c0] sm:$0xff]
      %v938 = vld [vmem:[%s243 + $0x4c8] sm:$0xff]
      %v939 = vld [vmem:[%s243 + $0x4d0] sm:$0xff]
      %v940 = vld [vmem:[%s243 + $0x4d8] sm:$0xff]
      %v941 = vld [vmem:[%s243 + $0x4e0] sm:$0xff]
      %v942 = vld [vmem:[%s243 + $0x4e8] sm:$0xff]
      %v943 = vld [vmem:[%s243 + $0x4f0] sm:$0xff]
      %v944 = vld [vmem:[%s243 + $0x4f8] sm:$0xff]
      %v945 = vld [vmem:[%s243 + $0x500] sm:$0xff]
      %v946 = vld [vmem:[%s243 + $0x508] sm:$0xff]
      %v947 = vld [vmem:[%s243 + $0x510] sm:$0xff]
      %v948 = vld [vmem:[%s243 + $0x518] sm:$0xff]
      %v949 = vld [vmem:[%s243 + $0x520] sm:$0xff]
      %v950 = vld [vmem:[%s243 + $0x528] sm:$0xff]
      %v951 = vld [vmem:[%s243 + $0x530] sm:$0xff]
      %v952 = vld [vmem:[%s243 + $0x538] sm:$0xff]
      %v953 = vld [vmem:[%s243 + $0x540] sm:$0xff]
      %v954 = vld [vmem:[%s243 + $0x548] sm:$0xff]
      %v955 = vld [vmem:[%s243 + $0x550] sm:$0xff]
      %v956 = vld [vmem:[%s243 + $0x558] sm:$0xff]
      %v957 = vld [vmem:[%s243 + $0x560] sm:$0xff]
      %v958 = vld [vmem:[%s243 + $0x568] sm:$0xff]
      %v959 = vld [vmem:[%s243 + $0x570] sm:$0xff]
      %v960 = vld [vmem:[%s243 + $0x578] sm:$0xff]
      %v961 = vld [vmem:[%s243 + $0x580] sm:$0xff]
      %v962 = vld [vmem:[%s243 + $0x588] sm:$0xff]
      %v963 = vld [vmem:[%s243 + $0x590] sm:$0xff]
      %v964 = vld [vmem:[%s243 + $0x598] sm:$0xff]
      %v965 = vld [vmem:[%s243 + $0x5a0] sm:$0xff]
      %v966 = vld [vmem:[%s243 + $0x5a8] sm:$0xff]
      %v967 = vld [vmem:[%s243 + $0x5b0] sm:$0xff]
      %v968 = vld [vmem:[%s243 + $0x5b8] sm:$0xff]
      %v969 = vld [vmem:[%s243 + $0x5c0] sm:$0xff]
      %v970 = vld [vmem:[%s243 + $0x5c8] sm:$0xff]
      %v971 = vld [vmem:[%s243 + $0x5d0] sm:$0xff]
      %v972 = vld [vmem:[%s243 + $0x5d8] sm:$0xff]
      %v973 = vld [vmem:[%s243 + $0x5e0] sm:$0xff]
      %v974 = vld [vmem:[%s243 + $0x5e8] sm:$0xff]
      %v975 = vld [vmem:[%s243 + $0x5f0] sm:$0xff]
      %v976 = vld [vmem:[%s243 + $0x5f8] sm:$0xff]
      %v977 = vld [vmem:[%s243 + $0x600] sm:$0xff]
      %v978 = vld [vmem:[%s243 + $0x608] sm:$0xff]
      %v979 = vld [vmem:[%s243 + $0x610] sm:$0xff]
      %v980 = vld [vmem:[%s243 + $0x618] sm:$0xff]
      %v981 = vld [vmem:[%s243 + $0x620] sm:$0xff]
      %v982 = vld [vmem:[%s243 + $0x628] sm:$0xff]
      %v983 = vld [vmem:[%s243 + $0x630] sm:$0xff]
      %v984 = vld [vmem:[%s243 + $0x638] sm:$0xff]
      %v985 = vld [vmem:[%s243 + $0x640] sm:$0xff]
      %v986 = vld [vmem:[%s243 + $0x648] sm:$0xff]
      %v987 = vld [vmem:[%s243 + $0x650] sm:$0xff]
      %v988 = vld [vmem:[%s243 + $0x658] sm:$0xff]
      %v989 = vld [vmem:[%s243 + $0x660] sm:$0xff]
      %v990 = vld [vmem:[%s243 + $0x668] sm:$0xff]
      %v991 = vld [vmem:[%s243 + $0x670] sm:$0xff]
      %v992 = vld [vmem:[%s243 + $0x678] sm:$0xff]
      %v993 = vld [vmem:[%s243 + $0x680] sm:$0xff]
      %v994 = vld [vmem:[%s243 + $0x688] sm:$0xff]
      %v995 = vld [vmem:[%s243 + $0x690] sm:$0xff]
      %v996 = vld [vmem:[%s243 + $0x698] sm:$0xff]
      %v997 = vld [vmem:[%s243 + $0x6a0] sm:$0xff]
      %v998 = vld [vmem:[%s243 + $0x6a8] sm:$0xff]
      %v999 = vld [vmem:[%s243 + $0x6b0] sm:$0xff]
      %v1000 = vld [vmem:[%s243 + $0x6b8] sm:$0xff]
      %v1001 = vld [vmem:[%s243 + $0x6c0] sm:$0xff]
      %v1002 = vld [vmem:[%s243 + $0x6c8] sm:$0xff]
      %v1003 = vld [vmem:[%s243 + $0x6d0] sm:$0xff]
      %v1004 = vld [vmem:[%s243 + $0x6d8] sm:$0xff]
      %v1005 = vld [vmem:[%s243 + $0x6e0] sm:$0xff]
      %v1006 = vld [vmem:[%s243 + $0x6e8] sm:$0xff]
      %v1007 = vld [vmem:[%s243 + $0x6f0] sm:$0xff]
      %v1008 = vld [vmem:[%s243 + $0x6f8] sm:$0xff]
      %v1009 = vld [vmem:[%s243 + $0x700] sm:$0xff]
      %v1010 = vld [vmem:[%s243 + $0x708] sm:$0xff]
      %v1011 = vld [vmem:[%s243 + $0x710] sm:$0xff]
      %v1012 = vld [vmem:[%s243 + $0x718] sm:$0xff]
      %v1013 = vld [vmem:[%s243 + $0x720] sm:$0xff]
      %v1014 = vld [vmem:[%s243 + $0x728] sm:$0xff]
      %v1015 = vld [vmem:[%s243 + $0x730] sm:$0xff]
      %v1016 = vld [vmem:[%s243 + $0x738] sm:$0xff]
      %v1017 = vld [vmem:[%s243 + $0x740] sm:$0xff]
      %v1018 = vld [vmem:[%s243 + $0x748] sm:$0xff]
      %v1019 = vld [vmem:[%s243 + $0x750] sm:$0xff]
      %v1020 = vld [vmem:[%s243 + $0x758] sm:$0xff]
      %v1021 = vld [vmem:[%s243 + $0x760] sm:$0xff]
      %v1022 = vld [vmem:[%s243 + $0x768] sm:$0xff]
      %v1023 = vld [vmem:[%s243 + $0x770] sm:$0xff]
      %v1024 = vld [vmem:[%s243 + $0x778] sm:$0xff]
      %v1025 = vld [vmem:[%s243 + $0x780] sm:$0xff]
      %v1026 = vld [vmem:[%s243 + $0x788] sm:$0xff]
      %v1027 = vld [vmem:[%s243 + $0x790] sm:$0xff]
      %v1028 = vld [vmem:[%s243 + $0x798] sm:$0xff]
      %v1029 = vld [vmem:[%s243 + $0x7a0] sm:$0xff]
      %v1030 = vld [vmem:[%s243 + $0x7a8] sm:$0xff]
      %v1031 = vld [vmem:[%s243 + $0x7b0] sm:$0xff]
      %v1032 = vld [vmem:[%s243 + $0x7b8] sm:$0xff]
      %v1033 = vld [vmem:[%s243 + $0x7c0] sm:$0xff]
      %v1034 = vld [vmem:[%s243 + $0x7c8] sm:$0xff]
      %v1035 = vld [vmem:[%s243 + $0x7d0] sm:$0xff]
      %v1036 = vld [vmem:[%s243 + $0x7d8] sm:$0xff]
      %v1037 = vld [vmem:[%s243 + $0x7e0] sm:$0xff]
      %v1038 = vld [vmem:[%s243 + $0x7e8] sm:$0xff]
      %v1039 = vld [vmem:[%s243 + $0x7f0] sm:$0xff]
      %v1040 = vld [vmem:[%s243 + $0x7f8] sm:$0xff]
      %v1041 = vld [vmem:[%s253] sm:$0xf]
      %v1042 = vld [vmem:[%s253 + $0x4] sm:$0xf]
      %v1043 = vld [vmem:[%s253 + $0x8] sm:$0xf]
      %v1044 = vld [vmem:[%s253 + $0xc] sm:$0xf]
      %v1045 = vld [vmem:[%s253 + $0x10] sm:$0xf]
      %v1046 = vld [vmem:[%s253 + $0x14] sm:$0xf]
      %v1047 = vld [vmem:[%s253 + $0x18] sm:$0xf]
      %v1048 = vld [vmem:[%s253 + $0x1c] sm:$0xf]
      %v1049 = vld [vmem:[%s253 + $0x20] sm:$0xf]
      %v1050 = vld [vmem:[%s253 + $0x24] sm:$0xf]
      %v1051 = vld [vmem:[%s253 + $0x28] sm:$0xf]
      %v1052 = vld [vmem:[%s253 + $0x2c] sm:$0xf]
      %v1053 = vld [vmem:[%s253 + $0x30] sm:$0xf]
      %v1054 = vld [vmem:[%s253 + $0x34] sm:$0xf]
      %v1055 = vld [vmem:[%s253 + $0x38] sm:$0xf]
      %v1056 = vld [vmem:[%s253 + $0x3c] sm:$0xf]
      %v1057 = vld [vmem:[%s253 + $0x40] sm:$0xf]
      %v1058 = vld [vmem:[%s253 + $0x44] sm:$0xf]
      %v1059 = vld [vmem:[%s253 + $0x48] sm:$0xf]
      %v1060 = vld [vmem:[%s253 + $0x4c] sm:$0xf]
      %v1317 = vunpack.c.l.b16 %v785
      %v1318 = vunpack.c.h.b16 %v785
      %v1319 = vunpack.c.l.b16 %v786
      %v1320 = vunpack.c.h.b16 %v786
      %v1321 = vunpack.c.l.b16 %v787
      %v1322 = vunpack.c.h.b16 %v787
      %v1323 = vunpack.c.l.b16 %v788
      %v1324 = vunpack.c.h.b16 %v788
      %v1325 = vunpack.c.l.b16 %v789
      %v1326 = vunpack.c.h.b16 %v789
      %v1327 = vunpack.c.l.b16 %v790
      %v1328 = vunpack.c.h.b16 %v790
      %v1329 = vunpack.c.l.b16 %v791
      %v1330 = vunpack.c.h.b16 %v791
      %v1331 = vunpack.c.l.b16 %v792
      %v1332 = vunpack.c.h.b16 %v792
      %v1333 = vunpack.c.l.b16 %v793
      %v1334 = vunpack.c.h.b16 %v793
      %v1335 = vunpack.c.l.b16 %v794
      %v1336 = vunpack.c.h.b16 %v794
      %v1337 = vunpack.c.l.b16 %v795
      %v1338 = vunpack.c.h.b16 %v795
      %v1339 = vunpack.c.l.b16 %v796
      %v1340 = vunpack.c.h.b16 %v796
      %v1341 = vunpack.c.l.b16 %v797
      %v1342 = vunpack.c.h.b16 %v797
      %v1343 = vunpack.c.l.b16 %v798
      %v1344 = vunpack.c.h.b16 %v798
      %v1345 = vunpack.c.l.b16 %v799
      %v1346 = vunpack.c.h.b16 %v799
      %v1347 = vunpack.c.l.b16 %v800
      %v1348 = vunpack.c.h.b16 %v800
      %v1349 = vunpack.c.l.b16 %v801
      %v1350 = vunpack.c.h.b16 %v801
      %v1351 = vunpack.c.l.b16 %v802
      %v1352 = vunpack.c.h.b16 %v802
      %v1353 = vunpack.c.l.b16 %v803
      %v1354 = vunpack.c.h.b16 %v803
      %v1355 = vunpack.c.l.b16 %v804
      %v1356 = vunpack.c.h.b16 %v804
      %v1357 = vunpack.c.l.b16 %v805
      %v1358 = vunpack.c.h.b16 %v805
      %v1359 = vunpack.c.l.b16 %v806
      %v1360 = vunpack.c.h.b16 %v806
      %v1361 = vunpack.c.l.b16 %v807
      %v1362 = vunpack.c.h.b16 %v807
      %v1363 = vunpack.c.l.b16 %v808
      %v1364 = vunpack.c.h.b16 %v808
      %v1365 = vunpack.c.l.b16 %v809
      %v1366 = vunpack.c.h.b16 %v809
      %v1367 = vunpack.c.l.b16 %v810
      %v1368 = vunpack.c.h.b16 %v810
      %v1369 = vunpack.c.l.b16 %v811
      %v1370 = vunpack.c.h.b16 %v811
      %v1371 = vunpack.c.l.b16 %v812
      %v1372 = vunpack.c.h.b16 %v812
      %v1373 = vunpack.c.l.b16 %v813
      %v1374 = vunpack.c.h.b16 %v813
      %v1375 = vunpack.c.l.b16 %v814
      %v1376 = vunpack.c.h.b16 %v814
      %v1377 = vunpack.c.l.b16 %v815
      %v1378 = vunpack.c.h.b16 %v815
      %v1379 = vunpack.c.l.b16 %v816
      %v1380 = vunpack.c.h.b16 %v816
      %v1381 = vunpack.c.l.b16 %v817
      %v1382 = vunpack.c.h.b16 %v817
      %v1383 = vunpack.c.l.b16 %v818
      %v1384 = vunpack.c.h.b16 %v818
      %v1385 = vunpack.c.l.b16 %v819
      %v1386 = vunpack.c.h.b16 %v819
      %v1387 = vunpack.c.l.b16 %v820
      %v1388 = vunpack.c.h.b16 %v820
      %v1389 = vunpack.c.l.b16 %v821
      %v1390 = vunpack.c.h.b16 %v821
      %v1391 = vunpack.c.l.b16 %v822
      %v1392 = vunpack.c.h.b16 %v822
      %v1393 = vunpack.c.l.b16 %v823
      %v1394 = vunpack.c.h.b16 %v823
      %v1395 = vunpack.c.l.b16 %v824
      %v1396 = vunpack.c.h.b16 %v824
      %v1397 = vunpack.c.l.b16 %v825
      %v1398 = vunpack.c.h.b16 %v825
      %v1399 = vunpack.c.l.b16 %v826
      %v1400 = vunpack.c.h.b16 %v826
      %v1401 = vunpack.c.l.b16 %v827
      %v1402 = vunpack.c.h.b16 %v827
      %v1403 = vunpack.c.l.b16 %v828
      %v1404 = vunpack.c.h.b16 %v828
      %v1405 = vunpack.c.l.b16 %v829
      %v1406 = vunpack.c.h.b16 %v829
      %v1407 = vunpack.c.l.b16 %v830
      %v1408 = vunpack.c.h.b16 %v830
      %v1409 = vunpack.c.l.b16 %v831
      %v1410 = vunpack.c.h.b16 %v831
      %v1411 = vunpack.c.l.b16 %v832
      %v1412 = vunpack.c.h.b16 %v832
      %v1413 = vunpack.c.l.b16 %v833
      %v1414 = vunpack.c.h.b16 %v833
      %v1415 = vunpack.c.l.b16 %v834
      %v1416 = vunpack.c.h.b16 %v834
      %v1417 = vunpack.c.l.b16 %v835
      %v1418 = vunpack.c.h.b16 %v835
      %v1419 = vunpack.c.l.b16 %v836
      %v1420 = vunpack.c.h.b16 %v836
      %v1421 = vunpack.c.l.b16 %v837
      %v1422 = vunpack.c.h.b16 %v837
      %v1423 = vunpack.c.l.b16 %v838
      %v1424 = vunpack.c.h.b16 %v838
      %v1425 = vunpack.c.l.b16 %v839
      %v1426 = vunpack.c.h.b16 %v839
      %v1427 = vunpack.c.l.b16 %v840
      %v1428 = vunpack.c.h.b16 %v840
      %v1429 = vunpack.c.l.b16 %v841
      %v1430 = vunpack.c.h.b16 %v841
      %v1431 = vunpack.c.l.b16 %v842
      %v1432 = vunpack.c.h.b16 %v842
      %v1433 = vunpack.c.l.b16 %v843
      %v1434 = vunpack.c.h.b16 %v843
      %v1435 = vunpack.c.l.b16 %v844
      %v1436 = vunpack.c.h.b16 %v844
      %v1437 = vunpack.c.l.b16 %v845
      %v1438 = vunpack.c.h.b16 %v845
      %v1439 = vunpack.c.l.b16 %v846
      %v1440 = vunpack.c.h.b16 %v846
      %v1441 = vunpack.c.l.b16 %v847
      %v1442 = vunpack.c.h.b16 %v847
      %v1443 = vunpack.c.l.b16 %v848
      %v1444 = vunpack.c.h.b16 %v848
      %v1445 = vunpack.c.l.b16 %v849
      %v1446 = vunpack.c.h.b16 %v849
      %v1447 = vunpack.c.l.b16 %v850
      %v1448 = vunpack.c.h.b16 %v850
      %v1449 = vunpack.c.l.b16 %v851
      %v1450 = vunpack.c.h.b16 %v851
      %v1451 = vunpack.c.l.b16 %v852
      %v1452 = vunpack.c.h.b16 %v852
      %v1453 = vunpack.c.l.b16 %v853
      %v1454 = vunpack.c.h.b16 %v853
      %v1455 = vunpack.c.l.b16 %v854
      %v1456 = vunpack.c.h.b16 %v854
      %v1457 = vunpack.c.l.b16 %v855
      %v1458 = vunpack.c.h.b16 %v855
      %v1459 = vunpack.c.l.b16 %v856
      %v1460 = vunpack.c.h.b16 %v856
      %v1461 = vunpack.c.l.b16 %v857
      %v1462 = vunpack.c.h.b16 %v857
      %v1463 = vunpack.c.l.b16 %v858
      %v1464 = vunpack.c.h.b16 %v858
      %v1465 = vunpack.c.l.b16 %v859
      %v1466 = vunpack.c.h.b16 %v859
      %v1467 = vunpack.c.l.b16 %v860
      %v1468 = vunpack.c.h.b16 %v860
      %v1469 = vunpack.c.l.b16 %v861
      %v1470 = vunpack.c.h.b16 %v861
      %v1471 = vunpack.c.l.b16 %v862
      %v1472 = vunpack.c.h.b16 %v862
      %v1473 = vunpack.c.l.b16 %v863
      %v1474 = vunpack.c.h.b16 %v863
      %v1475 = vunpack.c.l.b16 %v864
      %v1476 = vunpack.c.h.b16 %v864
      %v1477 = vunpack.c.l.b16 %v865
      %v1478 = vunpack.c.h.b16 %v865
      %v1479 = vunpack.c.l.b16 %v866
      %v1480 = vunpack.c.h.b16 %v866
      %v1481 = vunpack.c.l.b16 %v867
      %v1482 = vunpack.c.h.b16 %v867
      %v1483 = vunpack.c.l.b16 %v868
      %v1484 = vunpack.c.h.b16 %v868
      %v1485 = vunpack.c.l.b16 %v869
      %v1486 = vunpack.c.h.b16 %v869
      %v1487 = vunpack.c.l.b16 %v870
      %v1488 = vunpack.c.h.b16 %v870
      %v1489 = vunpack.c.l.b16 %v871
      %v1490 = vunpack.c.h.b16 %v871
      %v1491 = vunpack.c.l.b16 %v872
      %v1492 = vunpack.c.h.b16 %v872
      %v1493 = vunpack.c.l.b16 %v873
      %v1494 = vunpack.c.h.b16 %v873
      %v1495 = vunpack.c.l.b16 %v874
      %v1496 = vunpack.c.h.b16 %v874
      %v1497 = vunpack.c.l.b16 %v875
      %v1498 = vunpack.c.h.b16 %v875
      %v1499 = vunpack.c.l.b16 %v876
      %v1500 = vunpack.c.h.b16 %v876
      %v1501 = vunpack.c.l.b16 %v877
      %v1502 = vunpack.c.h.b16 %v877
      %v1503 = vunpack.c.l.b16 %v878
      %v1504 = vunpack.c.h.b16 %v878
      %v1505 = vunpack.c.l.b16 %v879
      %v1506 = vunpack.c.h.b16 %v879
      %v1507 = vunpack.c.l.b16 %v880
      %v1508 = vunpack.c.h.b16 %v880
      %v1509 = vunpack.c.l.b16 %v881
      %v1510 = vunpack.c.h.b16 %v881
      %v1511 = vunpack.c.l.b16 %v882
      %v1512 = vunpack.c.h.b16 %v882
      %v1513 = vunpack.c.l.b16 %v883
      %v1514 = vunpack.c.h.b16 %v883
      %v1515 = vunpack.c.l.b16 %v884
      %v1516 = vunpack.c.h.b16 %v884
      %v1517 = vunpack.c.l.b16 %v885
      %v1518 = vunpack.c.h.b16 %v885
      %v1519 = vunpack.c.l.b16 %v886
      %v1520 = vunpack.c.h.b16 %v886
      %v1521 = vunpack.c.l.b16 %v887
      %v1522 = vunpack.c.h.b16 %v887
      %v1523 = vunpack.c.l.b16 %v888
      %v1524 = vunpack.c.h.b16 %v888
      %v1525 = vunpack.c.l.b16 %v889
      %v1526 = vunpack.c.h.b16 %v889
      %v1527 = vunpack.c.l.b16 %v890
      %v1528 = vunpack.c.h.b16 %v890
      %v1529 = vunpack.c.l.b16 %v891
      %v1530 = vunpack.c.h.b16 %v891
      %v1531 = vunpack.c.l.b16 %v892
      %v1532 = vunpack.c.h.b16 %v892
      %v1533 = vunpack.c.l.b16 %v893
      %v1534 = vunpack.c.h.b16 %v893
      %v1535 = vunpack.c.l.b16 %v894
      %v1536 = vunpack.c.h.b16 %v894
      %v1537 = vunpack.c.l.b16 %v895
      %v1538 = vunpack.c.h.b16 %v895
      %v1539 = vunpack.c.l.b16 %v896
      %v1540 = vunpack.c.h.b16 %v896
      %v1541 = vunpack.c.l.b16 %v897
      %v1542 = vunpack.c.h.b16 %v897
      %v1543 = vunpack.c.l.b16 %v898
      %v1544 = vunpack.c.h.b16 %v898
      %v1545 = vunpack.c.l.b16 %v899
      %v1546 = vunpack.c.h.b16 %v899
      %v1547 = vunpack.c.l.b16 %v900
      %v1548 = vunpack.c.h.b16 %v900
      %v1549 = vunpack.c.l.b16 %v901
      %v1550 = vunpack.c.h.b16 %v901
      %v1551 = vunpack.c.l.b16 %v902
      %v1552 = vunpack.c.h.b16 %v902
      %v1553 = vunpack.c.l.b16 %v903
      %v1554 = vunpack.c.h.b16 %v903
      %v1555 = vunpack.c.l.b16 %v904
      %v1556 = vunpack.c.h.b16 %v904
      %v1557 = vunpack.c.l.b16 %v905
      %v1558 = vunpack.c.h.b16 %v905
      %v1559 = vunpack.c.l.b16 %v906
      %v1560 = vunpack.c.h.b16 %v906
      %v1561 = vunpack.c.l.b16 %v907
      %v1562 = vunpack.c.h.b16 %v907
      %v1563 = vunpack.c.l.b16 %v908
      %v1564 = vunpack.c.h.b16 %v908
      %v1565 = vunpack.c.l.b16 %v909
      %v1566 = vunpack.c.h.b16 %v909
      %v1567 = vunpack.c.l.b16 %v910
      %v1568 = vunpack.c.h.b16 %v910
      %v1569 = vunpack.c.l.b16 %v911
      %v1570 = vunpack.c.h.b16 %v911
      %v1571 = vunpack.c.l.b16 %v912
      %v1572 = vunpack.c.h.b16 %v912
      %v1573 = vunpack.c.l.b16 %v913
      %v1574 = vunpack.c.h.b16 %v913
      %v1575 = vunpack.c.l.b16 %v914
      %v1576 = vunpack.c.h.b16 %v914
      %v1577 = vunpack.c.l.b16 %v915
      %v1578 = vunpack.c.h.b16 %v915
      %v1579 = vunpack.c.l.b16 %v916
      %v1580 = vunpack.c.h.b16 %v916
      %v1581 = vunpack.c.l.b16 %v917
      %v1582 = vunpack.c.h.b16 %v917
      %v1583 = vunpack.c.l.b16 %v918
      %v1584 = vunpack.c.h.b16 %v918
      %v1585 = vunpack.c.l.b16 %v919
      %v1586 = vunpack.c.h.b16 %v919
      %v1587 = vunpack.c.l.b16 %v920
      %v1588 = vunpack.c.h.b16 %v920
      %v1589 = vunpack.c.l.b16 %v921
      %v1590 = vunpack.c.h.b16 %v921
      %v1591 = vunpack.c.l.b16 %v922
      %v1592 = vunpack.c.h.b16 %v922
      %v1593 = vunpack.c.l.b16 %v923
      %v1594 = vunpack.c.h.b16 %v923
      %v1595 = vunpack.c.l.b16 %v924
      %v1596 = vunpack.c.h.b16 %v924
      %v1597 = vunpack.c.l.b16 %v925
      %v1598 = vunpack.c.h.b16 %v925
      %v1599 = vunpack.c.l.b16 %v926
      %v1600 = vunpack.c.h.b16 %v926
      %v1601 = vunpack.c.l.b16 %v927
      %v1602 = vunpack.c.h.b16 %v927
      %v1603 = vunpack.c.l.b16 %v928
      %v1604 = vunpack.c.h.b16 %v928
      %v1605 = vunpack.c.l.b16 %v929
      %v1606 = vunpack.c.h.b16 %v929
      %v1607 = vunpack.c.l.b16 %v930
      %v1608 = vunpack.c.h.b16 %v930
      %v1609 = vunpack.c.l.b16 %v931
      %v1610 = vunpack.c.h.b16 %v931
      %v1611 = vunpack.c.l.b16 %v932
      %v1612 = vunpack.c.h.b16 %v932
      %v1613 = vunpack.c.l.b16 %v933
      %v1614 = vunpack.c.h.b16 %v933
      %v1615 = vunpack.c.l.b16 %v934
      %v1616 = vunpack.c.h.b16 %v934
      %v1617 = vunpack.c.l.b16 %v935
      %v1618 = vunpack.c.h.b16 %v935
      %v1619 = vunpack.c.l.b16 %v936
      %v1620 = vunpack.c.h.b16 %v936
      %v1621 = vunpack.c.l.b16 %v937
      %v1622 = vunpack.c.h.b16 %v937
      %v1623 = vunpack.c.l.b16 %v938
      %v1624 = vunpack.c.h.b16 %v938
      %v1625 = vunpack.c.l.b16 %v939
      %v1626 = vunpack.c.h.b16 %v939
      %v1627 = vunpack.c.l.b16 %v940
      %v1628 = vunpack.c.h.b16 %v940
      %v1629 = vunpack.c.l.b16 %v941
      %v1630 = vunpack.c.h.b16 %v941
      %v1631 = vunpack.c.l.b16 %v942
      %v1632 = vunpack.c.h.b16 %v942
      %v1633 = vunpack.c.l.b16 %v943
      %v1634 = vunpack.c.h.b16 %v943
      %v1635 = vunpack.c.l.b16 %v944
      %v1636 = vunpack.c.h.b16 %v944
      %v1637 = vunpack.c.l.b16 %v945
      %v1638 = vunpack.c.h.b16 %v945
      %v1639 = vunpack.c.l.b16 %v946
      %v1640 = vunpack.c.h.b16 %v946
      %v1641 = vunpack.c.l.b16 %v947
      %v1642 = vunpack.c.h.b16 %v947
      %v1643 = vunpack.c.l.b16 %v948
      %v1644 = vunpack.c.h.b16 %v948
      %v1645 = vunpack.c.l.b16 %v949
      %v1646 = vunpack.c.h.b16 %v949
      %v1647 = vunpack.c.l.b16 %v950
      %v1648 = vunpack.c.h.b16 %v950
      %v1649 = vunpack.c.l.b16 %v951
      %v1650 = vunpack.c.h.b16 %v951
      %v1651 = vunpack.c.l.b16 %v952
      %v1652 = vunpack.c.h.b16 %v952
      %v1653 = vunpack.c.l.b16 %v953
      %v1654 = vunpack.c.h.b16 %v953
      %v1655 = vunpack.c.l.b16 %v954
      %v1656 = vunpack.c.h.b16 %v954
      %v1657 = vunpack.c.l.b16 %v955
      %v1658 = vunpack.c.h.b16 %v955
      %v1659 = vunpack.c.l.b16 %v956
      %v1660 = vunpack.c.h.b16 %v956
      %v1661 = vunpack.c.l.b16 %v957
      %v1662 = vunpack.c.h.b16 %v957
      %v1663 = vunpack.c.l.b16 %v958
      %v1664 = vunpack.c.h.b16 %v958
      %v1665 = vunpack.c.l.b16 %v959
      %v1666 = vunpack.c.h.b16 %v959
      %v1667 = vunpack.c.l.b16 %v960
      %v1668 = vunpack.c.h.b16 %v960
      %v1669 = vunpack.c.l.b16 %v961
      %v1670 = vunpack.c.h.b16 %v961
      %v1671 = vunpack.c.l.b16 %v962
      %v1672 = vunpack.c.h.b16 %v962
      %v1673 = vunpack.c.l.b16 %v963
      %v1674 = vunpack.c.h.b16 %v963
      %v1675 = vunpack.c.l.b16 %v964
      %v1676 = vunpack.c.h.b16 %v964
      %v1677 = vunpack.c.l.b16 %v965
      %v1678 = vunpack.c.h.b16 %v965
      %v1679 = vunpack.c.l.b16 %v966
      %v1680 = vunpack.c.h.b16 %v966
      %v1681 = vunpack.c.l.b16 %v967
      %v1682 = vunpack.c.h.b16 %v967
      %v1683 = vunpack.c.l.b16 %v968
      %v1684 = vunpack.c.h.b16 %v968
      %v1685 = vunpack.c.l.b16 %v969
      %v1686 = vunpack.c.h.b16 %v969
      %v1687 = vunpack.c.l.b16 %v970
      %v1688 = vunpack.c.h.b16 %v970
      %v1689 = vunpack.c.l.b16 %v971
      %v1690 = vunpack.c.h.b16 %v971
      %v1691 = vunpack.c.l.b16 %v972
      %v1692 = vunpack.c.h.b16 %v972
      %v1693 = vunpack.c.l.b16 %v973
      %v1694 = vunpack.c.h.b16 %v973
      %v1695 = vunpack.c.l.b16 %v974
      %v1696 = vunpack.c.h.b16 %v974
      %v1697 = vunpack.c.l.b16 %v975
      %v1698 = vunpack.c.h.b16 %v975
      %v1699 = vunpack.c.l.b16 %v976
      %v1700 = vunpack.c.h.b16 %v976
      %v1701 = vunpack.c.l.b16 %v977
      %v1702 = vunpack.c.h.b16 %v977
      %v1703 = vunpack.c.l.b16 %v978
      %v1704 = vunpack.c.h.b16 %v978
      %v1705 = vunpack.c.l.b16 %v979
      %v1706 = vunpack.c.h.b16 %v979
      %v1707 = vunpack.c.l.b16 %v980
      %v1708 = vunpack.c.h.b16 %v980
      %v1709 = vunpack.c.l.b16 %v981
      %v1710 = vunpack.c.h.b16 %v981
      %v1711 = vunpack.c.l.b16 %v982
      %v1712 = vunpack.c.h.b16 %v982
      %v1713 = vunpack.c.l.b16 %v983
      %v1714 = vunpack.c.h.b16 %v983
      %v1715 = vunpack.c.l.b16 %v984
      %v1716 = vunpack.c.h.b16 %v984
      %v1717 = vunpack.c.l.b16 %v985
      %v1718 = vunpack.c.h.b16 %v985
      %v1719 = vunpack.c.l.b16 %v986
      %v1720 = vunpack.c.h.b16 %v986
      %v1721 = vunpack.c.l.b16 %v987
      %v1722 = vunpack.c.h.b16 %v987
      %v1723 = vunpack.c.l.b16 %v988
      %v1724 = vunpack.c.h.b16 %v988
      %v1725 = vunpack.c.l.b16 %v989
      %v1726 = vunpack.c.h.b16 %v989
      %v1727 = vunpack.c.l.b16 %v990
      %v1728 = vunpack.c.h.b16 %v990
      %v1729 = vunpack.c.l.b16 %v991
      %v1730 = vunpack.c.h.b16 %v991
      %v1731 = vunpack.c.l.b16 %v992
      %v1732 = vunpack.c.h.b16 %v992
      %v1733 = vunpack.c.l.b16 %v993
      %v1734 = vunpack.c.h.b16 %v993
      %v1735 = vunpack.c.l.b16 %v994
      %v1736 = vunpack.c.h.b16 %v994
      %v1737 = vunpack.c.l.b16 %v995
      %v1738 = vunpack.c.h.b16 %v995
      %v1739 = vunpack.c.l.b16 %v996
      %v1740 = vunpack.c.h.b16 %v996
      %v1741 = vunpack.c.l.b16 %v997
      %v1742 = vunpack.c.h.b16 %v997
      %v1743 = vunpack.c.l.b16 %v998
      %v1744 = vunpack.c.h.b16 %v998
      %v1745 = vunpack.c.l.b16 %v999
      %v1746 = vunpack.c.h.b16 %v999
      %v1747 = vunpack.c.l.b16 %v1000
      %v1748 = vunpack.c.h.b16 %v1000
      %v1749 = vunpack.c.l.b16 %v1001
      %v1750 = vunpack.c.h.b16 %v1001
      %v1751 = vunpack.c.l.b16 %v1002
      %v1752 = vunpack.c.h.b16 %v1002
      %v1753 = vunpack.c.l.b16 %v1003
      %v1754 = vunpack.c.h.b16 %v1003
      %v1755 = vunpack.c.l.b16 %v1004
      %v1756 = vunpack.c.h.b16 %v1004
      %v1757 = vunpack.c.l.b16 %v1005
      %v1758 = vunpack.c.h.b16 %v1005
      %v1759 = vunpack.c.l.b16 %v1006
      %v1760 = vunpack.c.h.b16 %v1006
      %v1761 = vunpack.c.l.b16 %v1007
      %v1762 = vunpack.c.h.b16 %v1007
      %v1763 = vunpack.c.l.b16 %v1008
      %v1764 = vunpack.c.h.b16 %v1008
      %v1765 = vunpack.c.l.b16 %v1009
      %v1766 = vunpack.c.h.b16 %v1009
      %v1767 = vunpack.c.l.b16 %v1010
      %v1768 = vunpack.c.h.b16 %v1010
      %v1769 = vunpack.c.l.b16 %v1011
      %v1770 = vunpack.c.h.b16 %v1011
      %v1771 = vunpack.c.l.b16 %v1012
      %v1772 = vunpack.c.h.b16 %v1012
      %v1773 = vunpack.c.l.b16 %v1013
      %v1774 = vunpack.c.h.b16 %v1013
      %v1775 = vunpack.c.l.b16 %v1014
      %v1776 = vunpack.c.h.b16 %v1014
      %v1777 = vunpack.c.l.b16 %v1015
      %v1778 = vunpack.c.h.b16 %v1015
      %v1779 = vunpack.c.l.b16 %v1016
      %v1780 = vunpack.c.h.b16 %v1016
      %v1781 = vunpack.c.l.b16 %v1017
      %v1782 = vunpack.c.h.b16 %v1017
      %v1783 = vunpack.c.l.b16 %v1018
      %v1784 = vunpack.c.h.b16 %v1018
      %v1785 = vunpack.c.l.b16 %v1019
      %v1786 = vunpack.c.h.b16 %v1019
      %v1787 = vunpack.c.l.b16 %v1020
      %v1788 = vunpack.c.h.b16 %v1020
      %v1789 = vunpack.c.l.b16 %v1021
      %v1790 = vunpack.c.h.b16 %v1021
      %v1791 = vunpack.c.l.b16 %v1022
      %v1792 = vunpack.c.h.b16 %v1022
      %v1793 = vunpack.c.l.b16 %v1023
      %v1794 = vunpack.c.h.b16 %v1023
      %v1795 = vunpack.c.l.b16 %v1024
      %v1796 = vunpack.c.h.b16 %v1024
      %v1797 = vunpack.c.l.b16 %v1025
      %v1798 = vunpack.c.h.b16 %v1025
      %v1799 = vunpack.c.l.b16 %v1026
      %v1800 = vunpack.c.h.b16 %v1026
      %v1801 = vunpack.c.l.b16 %v1027
      %v1802 = vunpack.c.h.b16 %v1027
      %v1803 = vunpack.c.l.b16 %v1028
      %v1804 = vunpack.c.h.b16 %v1028
      %v1805 = vunpack.c.l.b16 %v1029
      %v1806 = vunpack.c.h.b16 %v1029
      %v1807 = vunpack.c.l.b16 %v1030
      %v1808 = vunpack.c.h.b16 %v1030
      %v1809 = vunpack.c.l.b16 %v1031
      %v1810 = vunpack.c.h.b16 %v1031
      %v1811 = vunpack.c.l.b16 %v1032
      %v1812 = vunpack.c.h.b16 %v1032
      %v1813 = vunpack.c.l.b16 %v1033
      %v1814 = vunpack.c.h.b16 %v1033
      %v1815 = vunpack.c.l.b16 %v1034
      %v1816 = vunpack.c.h.b16 %v1034
      %v1817 = vunpack.c.l.b16 %v1035
      %v1818 = vunpack.c.h.b16 %v1035
      %v1819 = vunpack.c.l.b16 %v1036
      %v1820 = vunpack.c.h.b16 %v1036
      %v1821 = vunpack.c.l.b16 %v1037
      %v1822 = vunpack.c.h.b16 %v1037
      %v1823 = vunpack.c.l.b16 %v1038
      %v1824 = vunpack.c.h.b16 %v1038
      %v1825 = vunpack.c.l.b16 %v1039
      %v1826 = vunpack.c.h.b16 %v1039
      %v1827 = vunpack.c.l.b16 %v1040
      %v1828 = vunpack.c.h.b16 %v1040
      %v1829 = vpack.c.b16 %v1319, %v1317
      %v1830 = vpack.c.b16 %v1320, %v1318
      %v1831 = vpack.c.b16 %v1323, %v1321
      %v1832 = vpack.c.b16 %v1324, %v1322
      %v1833 = vpack.c.b16 %v1327, %v1325
      %v1834 = vpack.c.b16 %v1328, %v1326
      %v1835 = vpack.c.b16 %v1331, %v1329
      %v1836 = vpack.c.b16 %v1332, %v1330
      %v1837 = vpack.c.b16 %v1335, %v1333
      %v1838 = vpack.c.b16 %v1336, %v1334
      %v1839 = vpack.c.b16 %v1339, %v1337
      %v1840 = vpack.c.b16 %v1340, %v1338
      %v1841 = vpack.c.b16 %v1343, %v1341
      %v1842 = vpack.c.b16 %v1344, %v1342
      %v1843 = vpack.c.b16 %v1347, %v1345
      %v1844 = vpack.c.b16 %v1348, %v1346
      %v1845 = vpack.c.b16 %v1351, %v1349
      %v1846 = vpack.c.b16 %v1352, %v1350
      %v1847 = vpack.c.b16 %v1355, %v1353
      %v1848 = vpack.c.b16 %v1356, %v1354
      %v1849 = vpack.c.b16 %v1359, %v1357
      %v1850 = vpack.c.b16 %v1360, %v1358
      %v1851 = vpack.c.b16 %v1363, %v1361
      %v1852 = vpack.c.b16 %v1364, %v1362
      %v1853 = vpack.c.b16 %v1367, %v1365
      %v1854 = vpack.c.b16 %v1368, %v1366
      %v1855 = vpack.c.b16 %v1371, %v1369
      %v1856 = vpack.c.b16 %v1372, %v1370
      %v1857 = vpack.c.b16 %v1375, %v1373
      %v1858 = vpack.c.b16 %v1376, %v1374
      %v1859 = vpack.c.b16 %v1379, %v1377
      %v1860 = vpack.c.b16 %v1380, %v1378
      %v1861 = vpack.c.b16 %v1383, %v1381
      %v1862 = vpack.c.b16 %v1384, %v1382
      %v1863 = vpack.c.b16 %v1387, %v1385
      %v1864 = vpack.c.b16 %v1388, %v1386
      %v1865 = vpack.c.b16 %v1391, %v1389
      %v1866 = vpack.c.b16 %v1392, %v1390
      %v1867 = vpack.c.b16 %v1395, %v1393
      %v1868 = vpack.c.b16 %v1396, %v1394
      %v1869 = vpack.c.b16 %v1399, %v1397
      %v1870 = vpack.c.b16 %v1400, %v1398
      %v1871 = vpack.c.b16 %v1403, %v1401
      %v1872 = vpack.c.b16 %v1404, %v1402
      %v1873 = vpack.c.b16 %v1407, %v1405
      %v1874 = vpack.c.b16 %v1408, %v1406
      %v1875 = vpack.c.b16 %v1411, %v1409
      %v1876 = vpack.c.b16 %v1412, %v1410
      %v1877 = vpack.c.b16 %v1415, %v1413
      %v1878 = vpack.c.b16 %v1416, %v1414
      %v1879 = vpack.c.b16 %v1419, %v1417
      %v1880 = vpack.c.b16 %v1420, %v1418
      %v1881 = vpack.c.b16 %v1423, %v1421
      %v1882 = vpack.c.b16 %v1424, %v1422
      %v1883 = vpack.c.b16 %v1427, %v1425
      %v1884 = vpack.c.b16 %v1428, %v1426
      %v1885 = vpack.c.b16 %v1431, %v1429
      %v1886 = vpack.c.b16 %v1432, %v1430
      %v1887 = vpack.c.b16 %v1435, %v1433
      %v1888 = vpack.c.b16 %v1436, %v1434
      %v1889 = vpack.c.b16 %v1439, %v1437
      %v1890 = vpack.c.b16 %v1440, %v1438
      %v1891 = vpack.c.b16 %v1443, %v1441
      %v1892 = vpack.c.b16 %v1444, %v1442
      %v1893 = vpack.c.b16 %v1447, %v1445
      %v1894 = vpack.c.b16 %v1448, %v1446
      %v1895 = vpack.c.b16 %v1451, %v1449
      %v1896 = vpack.c.b16 %v1452, %v1450
      %v1897 = vpack.c.b16 %v1455, %v1453
      %v1898 = vpack.c.b16 %v1456, %v1454
      %v1899 = vpack.c.b16 %v1459, %v1457
      %v1900 = vpack.c.b16 %v1460, %v1458
      %v1901 = vpack.c.b16 %v1463, %v1461
      %v1902 = vpack.c.b16 %v1464, %v1462
      %v1903 = vpack.c.b16 %v1467, %v1465
      %v1904 = vpack.c.b16 %v1468, %v1466
      %v1905 = vpack.c.b16 %v1471, %v1469
      %v1906 = vpack.c.b16 %v1472, %v1470
      %v1907 = vpack.c.b16 %v1475, %v1473
      %v1908 = vpack.c.b16 %v1476, %v1474
      %v1909 = vpack.c.b16 %v1479, %v1477
      %v1910 = vpack.c.b16 %v1480, %v1478
      %v1911 = vpack.c.b16 %v1483, %v1481
      %v1912 = vpack.c.b16 %v1484, %v1482
      %v1913 = vpack.c.b16 %v1487, %v1485
      %v1914 = vpack.c.b16 %v1488, %v1486
      %v1915 = vpack.c.b16 %v1491, %v1489
      %v1916 = vpack.c.b16 %v1492, %v1490
      %v1917 = vpack.c.b16 %v1495, %v1493
      %v1918 = vpack.c.b16 %v1496, %v1494
      %v1919 = vpack.c.b16 %v1499, %v1497
      %v1920 = vpack.c.b16 %v1500, %v1498
      %v1921 = vpack.c.b16 %v1503, %v1501
      %v1922 = vpack.c.b16 %v1504, %v1502
      %v1923 = vpack.c.b16 %v1507, %v1505
      %v1924 = vpack.c.b16 %v1508, %v1506
      %v1925 = vpack.c.b16 %v1511, %v1509
      %v1926 = vpack.c.b16 %v1512, %v1510
      %v1927 = vpack.c.b16 %v1515, %v1513
      %v1928 = vpack.c.b16 %v1516, %v1514
      %v1929 = vpack.c.b16 %v1519, %v1517
      %v1930 = vpack.c.b16 %v1520, %v1518
      %v1931 = vpack.c.b16 %v1523, %v1521
      %v1932 = vpack.c.b16 %v1524, %v1522
      %v1933 = vpack.c.b16 %v1527, %v1525
      %v1934 = vpack.c.b16 %v1528, %v1526
      %v1935 = vpack.c.b16 %v1531, %v1529
      %v1936 = vpack.c.b16 %v1532, %v1530
      %v1937 = vpack.c.b16 %v1535, %v1533
      %v1938 = vpack.c.b16 %v1536, %v1534
      %v1939 = vpack.c.b16 %v1539, %v1537
      %v1940 = vpack.c.b16 %v1540, %v1538
      %v1941 = vpack.c.b16 %v1543, %v1541
      %v1942 = vpack.c.b16 %v1544, %v1542
      %v1943 = vpack.c.b16 %v1547, %v1545
      %v1944 = vpack.c.b16 %v1548, %v1546
      %v1945 = vpack.c.b16 %v1551, %v1549
      %v1946 = vpack.c.b16 %v1552, %v1550
      %v1947 = vpack.c.b16 %v1555, %v1553
      %v1948 = vpack.c.b16 %v1556, %v1554
      %v1949 = vpack.c.b16 %v1559, %v1557
      %v1950 = vpack.c.b16 %v1560, %v1558
      %v1951 = vpack.c.b16 %v1563, %v1561
      %v1952 = vpack.c.b16 %v1564, %v1562
      %v1953 = vpack.c.b16 %v1567, %v1565
      %v1954 = vpack.c.b16 %v1568, %v1566
      %v1955 = vpack.c.b16 %v1571, %v1569
      %v1956 = vpack.c.b16 %v1572, %v1570
      %v1957 = vpack.c.b16 %v1575, %v1573
      %v1958 = vpack.c.b16 %v1576, %v1574
      %v1959 = vpack.c.b16 %v1579, %v1577
      %v1960 = vpack.c.b16 %v1580, %v1578
      %v1961 = vpack.c.b16 %v1583, %v1581
      %v1962 = vpack.c.b16 %v1584, %v1582
      %v1963 = vpack.c.b16 %v1587, %v1585
      %v1964 = vpack.c.b16 %v1588, %v1586
      %v1965 = vpack.c.b16 %v1591, %v1589
      %v1966 = vpack.c.b16 %v1592, %v1590
      %v1967 = vpack.c.b16 %v1595, %v1593
      %v1968 = vpack.c.b16 %v1596, %v1594
      %v1969 = vpack.c.b16 %v1599, %v1597
      %v1970 = vpack.c.b16 %v1600, %v1598
      %v1971 = vpack.c.b16 %v1603, %v1601
      %v1972 = vpack.c.b16 %v1604, %v1602
      %v1973 = vpack.c.b16 %v1607, %v1605
      %v1974 = vpack.c.b16 %v1608, %v1606
      %v1975 = vpack.c.b16 %v1611, %v1609
      %v1976 = vpack.c.b16 %v1612, %v1610
      %v1977 = vpack.c.b16 %v1615, %v1613
      %v1978 = vpack.c.b16 %v1616, %v1614
      %v1979 = vpack.c.b16 %v1619, %v1617
      %v1980 = vpack.c.b16 %v1620, %v1618
      %v1981 = vpack.c.b16 %v1623, %v1621
      %v1982 = vpack.c.b16 %v1624, %v1622
      %v1983 = vpack.c.b16 %v1627, %v1625
      %v1984 = vpack.c.b16 %v1628, %v1626
      %v1985 = vpack.c.b16 %v1631, %v1629
      %v1986 = vpack.c.b16 %v1632, %v1630
      %v1987 = vpack.c.b16 %v1635, %v1633
      %v1988 = vpack.c.b16 %v1636, %v1634
      %v1989 = vpack.c.b16 %v1639, %v1637
      %v1990 = vpack.c.b16 %v1640, %v1638
      %v1991 = vpack.c.b16 %v1643, %v1641
      %v1992 = vpack.c.b16 %v1644, %v1642
      %v1993 = vpack.c.b16 %v1647, %v1645
      %v1994 = vpack.c.b16 %v1648, %v1646
      %v1995 = vpack.c.b16 %v1651, %v1649
      %v1996 = vpack.c.b16 %v1652, %v1650
      %v1997 = vpack.c.b16 %v1655, %v1653
      %v1998 = vpack.c.b16 %v1656, %v1654
      %v1999 = vpack.c.b16 %v1659, %v1657
      %v2000 = vpack.c.b16 %v1660, %v1658
      %v2001 = vpack.c.b16 %v1663, %v1661
      %v2002 = vpack.c.b16 %v1664, %v1662
      %v2003 = vpack.c.b16 %v1667, %v1665
      %v2004 = vpack.c.b16 %v1668, %v1666
      %v2005 = vpack.c.b16 %v1671, %v1669
      %v2006 = vpack.c.b16 %v1672, %v1670
      %v2007 = vpack.c.b16 %v1675, %v1673
      %v2008 = vpack.c.b16 %v1676, %v1674
      %v2009 = vpack.c.b16 %v1679, %v1677
      %v2010 = vpack.c.b16 %v1680, %v1678
      %v2011 = vpack.c.b16 %v1683, %v1681
      %v2012 = vpack.c.b16 %v1684, %v1682
      %v2013 = vpack.c.b16 %v1687, %v1685
      %v2014 = vpack.c.b16 %v1688, %v1686
      %v2015 = vpack.c.b16 %v1691, %v1689
      %v2016 = vpack.c.b16 %v1692, %v1690
      %v2017 = vpack.c.b16 %v1695, %v1693
      %v2018 = vpack.c.b16 %v1696, %v1694
      %v2019 = vpack.c.b16 %v1699, %v1697
      %v2020 = vpack.c.b16 %v1700, %v1698
      %v2021 = vpack.c.b16 %v1703, %v1701
      %v2022 = vpack.c.b16 %v1704, %v1702
      %v2023 = vpack.c.b16 %v1707, %v1705
      %v2024 = vpack.c.b16 %v1708, %v1706
      %v2025 = vpack.c.b16 %v1711, %v1709
      %v2026 = vpack.c.b16 %v1712, %v1710
      %v2027 = vpack.c.b16 %v1715, %v1713
      %v2028 = vpack.c.b16 %v1716, %v1714
      %v2029 = vpack.c.b16 %v1719, %v1717
      %v2030 = vpack.c.b16 %v1720, %v1718
      %v2031 = vpack.c.b16 %v1723, %v1721
      %v2032 = vpack.c.b16 %v1724, %v1722
      %v2033 = vpack.c.b16 %v1727, %v1725
      %v2034 = vpack.c.b16 %v1728, %v1726
      %v2035 = vpack.c.b16 %v1731, %v1729
      %v2036 = vpack.c.b16 %v1732, %v1730
      %v2037 = vpack.c.b16 %v1735, %v1733
      %v2038 = vpack.c.b16 %v1736, %v1734
      %v2039 = vpack.c.b16 %v1739, %v1737
      %v2040 = vpack.c.b16 %v1740, %v1738
      %v2041 = vpack.c.b16 %v1743, %v1741
      %v2042 = vpack.c.b16 %v1744, %v1742
      %v2043 = vpack.c.b16 %v1747, %v1745
      %v2044 = vpack.c.b16 %v1748, %v1746
      %v2045 = vpack.c.b16 %v1751, %v1749
      %v2046 = vpack.c.b16 %v1752, %v1750
      %v2047 = vpack.c.b16 %v1755, %v1753
      %v2048 = vpack.c.b16 %v1756, %v1754
      %v2049 = vpack.c.b16 %v1759, %v1757
      %v2050 = vpack.c.b16 %v1760, %v1758
      %v2051 = vpack.c.b16 %v1763, %v1761
      %v2052 = vpack.c.b16 %v1764, %v1762
      %v2053 = vpack.c.b16 %v1767, %v1765
      %v2054 = vpack.c.b16 %v1768, %v1766
      %v2055 = vpack.c.b16 %v1771, %v1769
      %v2056 = vpack.c.b16 %v1772, %v1770
      %v2057 = vpack.c.b16 %v1775, %v1773
      %v2058 = vpack.c.b16 %v1776, %v1774
      %v2059 = vpack.c.b16 %v1779, %v1777
      %v2060 = vpack.c.b16 %v1780, %v1778
      %v2061 = vpack.c.b16 %v1783, %v1781
      %v2062 = vpack.c.b16 %v1784, %v1782
      %v2063 = vpack.c.b16 %v1787, %v1785
      %v2064 = vpack.c.b16 %v1788, %v1786
      %v2065 = vpack.c.b16 %v1791, %v1789
      %v2066 = vpack.c.b16 %v1792, %v1790
      %v2067 = vpack.c.b16 %v1795, %v1793
      %v2068 = vpack.c.b16 %v1796, %v1794
      %v2069 = vpack.c.b16 %v1799, %v1797
      %v2070 = vpack.c.b16 %v1800, %v1798
      %v2071 = vpack.c.b16 %v1803, %v1801
      %v2072 = vpack.c.b16 %v1804, %v1802
      %v2073 = vpack.c.b16 %v1807, %v1805
      %v2074 = vpack.c.b16 %v1808, %v1806
      %v2075 = vpack.c.b16 %v1811, %v1809
      %v2076 = vpack.c.b16 %v1812, %v1810
      %v2077 = vpack.c.b16 %v1815, %v1813
      %v2078 = vpack.c.b16 %v1816, %v1814
      %v2079 = vpack.c.b16 %v1819, %v1817
      %v2080 = vpack.c.b16 %v1820, %v1818
      %v2081 = vpack.c.b16 %v1823, %v1821
      %v2082 = vpack.c.b16 %v1824, %v1822
      %v2083 = vpack.c.b16 %v1827, %v1825
      %v2084 = vpack.c.b16 %v1828, %v1826
      %v2233 = vunpack.c.l.b16 %v1041
      %v2234 = vunpack.c.l.b16 %v1042
      %v2235 = vunpack.c.l.b16 %v1043
      %v2236 = vunpack.c.l.b16 %v1044
      %v2237 = vunpack.c.l.b16 %v1045
      %v2238 = vunpack.c.l.b16 %v1046
      %v2239 = vunpack.c.l.b16 %v1047
      %v2240 = vunpack.c.l.b16 %v1048
      %v2241 = vunpack.c.l.b16 %v1049
      %v2242 = vunpack.c.l.b16 %v1050
      %v2243 = vunpack.c.l.b16 %v1051
      %v2244 = vunpack.c.l.b16 %v1052
      %v2245 = vunpack.c.l.b16 %v1053
      %v2246 = vunpack.c.l.b16 %v1054
      %v2247 = vunpack.c.l.b16 %v1055
      %v2248 = vunpack.c.l.b16 %v1056
      %v2249 = vunpack.c.l.b16 %v1057
      %v2250 = vunpack.c.l.b16 %v1058
      %v2251 = vunpack.c.l.b16 %v1059
      %v2252 = vunpack.c.l.b16 %v1060
      %v2253 = vpack.c.b16 %v2234, %v2233
      %v2254 = vpack.c.b16 %v2236, %v2235
      %v2255 = vpack.c.b16 %v2238, %v2237
      %v2256 = vpack.c.b16 %v2240, %v2239
      %v2257 = vpack.c.b16 %v2242, %v2241
      %v2258 = vpack.c.b16 %v2244, %v2243
      %v2259 = vpack.c.b16 %v2246, %v2245
      %v2260 = vpack.c.b16 %v2248, %v2247
      %v2261 = vpack.c.b16 %v2250, %v2249
      %v2262 = vpack.c.b16 %v2252, %v2251
      %vm2273 = vcmask 261120
      %v2275 = vsel %vm2273, %v1830, 0
      %v2278 = vsel %vm2273, %v1832, 0
      %v2281 = vsel %vm2273, %v1834, 0
      %v2284 = vsel %vm2273, %v1836, 0
      %v2287 = vsel %vm2273, %v1838, 0
      %v2290 = vsel %vm2273, %v1840, 0
      %v2293 = vsel %vm2273, %v1842, 0
      %v2296 = vsel %vm2273, %v1844, 0
      %v2299 = vsel %vm2273, %v1846, 0
      %v2302 = vsel %vm2273, %v1848, 0
      %v2305 = vsel %vm2273, %v1850, 0
      %v2308 = vsel %vm2273, %v1852, 0
      %v2311 = vsel %vm2273, %v1854, 0
      %v2314 = vsel %vm2273, %v1856, 0
      %v2317 = vsel %vm2273, %v1858, 0
      %v2320 = vsel %vm2273, %v1860, 0
      %v2323 = vsel %vm2273, %v1862, 0
      %v2326 = vsel %vm2273, %v1864, 0
      %v2329 = vsel %vm2273, %v1866, 0
      %v2332 = vsel %vm2273, %v1868, 0
      %v2335 = vsel %vm2273, %v1870, 0
      %v2338 = vsel %vm2273, %v1872, 0
      %v2341 = vsel %vm2273, %v1874, 0
      %v2344 = vsel %vm2273, %v1876, 0
      %v2347 = vsel %vm2273, %v1878, 0
      %v2350 = vsel %vm2273, %v1880, 0
      %v2353 = vsel %vm2273, %v1882, 0
      %v2356 = vsel %vm2273, %v1884, 0
      %v2359 = vsel %vm2273, %v1886, 0
      %v2362 = vsel %vm2273, %v1888, 0
      %v2365 = vsel %vm2273, %v1890, 0
      %v2368 = vsel %vm2273, %v1892, 0
      %v2371 = vsel %vm2273, %v1894, 0
      %v2374 = vsel %vm2273, %v1896, 0
      %v2377 = vsel %vm2273, %v1898, 0
      %v2380 = vsel %vm2273, %v1900, 0
      %v2383 = vsel %vm2273, %v1902, 0
      %v2386 = vsel %vm2273, %v1904, 0
      %v2389 = vsel %vm2273, %v1906, 0
      %v2392 = vsel %vm2273, %v1908, 0
      %v2395 = vsel %vm2273, %v1910, 0
      %v2398 = vsel %vm2273, %v1912, 0
      %v2401 = vsel %vm2273, %v1914, 0
      %v2404 = vsel %vm2273, %v1916, 0
      %v2407 = vsel %vm2273, %v1918, 0
      %v2410 = vsel %vm2273, %v1920, 0
      %v2413 = vsel %vm2273, %v1922, 0
      %v2416 = vsel %vm2273, %v1924, 0
      %v2419 = vsel %vm2273, %v1926, 0
      %v2422 = vsel %vm2273, %v1928, 0
      %v2425 = vsel %vm2273, %v1930, 0
      %v2428 = vsel %vm2273, %v1932, 0
      %v2431 = vsel %vm2273, %v1934, 0
      %v2434 = vsel %vm2273, %v1936, 0
      %v2437 = vsel %vm2273, %v1938, 0
      %v2440 = vsel %vm2273, %v1940, 0
      %v2443 = vsel %vm2273, %v1942, 0
      %v2446 = vsel %vm2273, %v1944, 0
      %v2449 = vsel %vm2273, %v1946, 0
      %v2452 = vsel %vm2273, %v1948, 0
      %v2455 = vsel %vm2273, %v1950, 0
      %v2458 = vsel %vm2273, %v1952, 0
      %v2461 = vsel %vm2273, %v1954, 0
      %v2464 = vsel %vm2273, %v1956, 0
      %v2467 = vsel %vm2273, %v1958, 0
      %v2470 = vsel %vm2273, %v1960, 0
      %v2473 = vsel %vm2273, %v1962, 0
      %v2476 = vsel %vm2273, %v1964, 0
      %v2479 = vsel %vm2273, %v1966, 0
      %v2482 = vsel %vm2273, %v1968, 0
      %v2485 = vsel %vm2273, %v1970, 0
      %v2488 = vsel %vm2273, %v1972, 0
      %v2491 = vsel %vm2273, %v1974, 0
      %v2494 = vsel %vm2273, %v1976, 0
      %v2497 = vsel %vm2273, %v1978, 0
      %v2500 = vsel %vm2273, %v1980, 0
      %v2503 = vsel %vm2273, %v1982, 0
      %v2506 = vsel %vm2273, %v1984, 0
      %v2509 = vsel %vm2273, %v1986, 0
      %v2512 = vsel %vm2273, %v1988, 0
      %v2515 = vsel %vm2273, %v1990, 0
      %v2518 = vsel %vm2273, %v1992, 0
      %v2521 = vsel %vm2273, %v1994, 0
      %v2524 = vsel %vm2273, %v1996, 0
      %v2527 = vsel %vm2273, %v1998, 0
      %v2530 = vsel %vm2273, %v2000, 0
      %v2533 = vsel %vm2273, %v2002, 0
      %v2536 = vsel %vm2273, %v2004, 0
      %v2539 = vsel %vm2273, %v2006, 0
      %v2542 = vsel %vm2273, %v2008, 0
      %v2545 = vsel %vm2273, %v2010, 0
      %v2548 = vsel %vm2273, %v2012, 0
      %v2551 = vsel %vm2273, %v2014, 0
      %v2554 = vsel %vm2273, %v2016, 0
      %v2557 = vsel %vm2273, %v2018, 0
      %v2560 = vsel %vm2273, %v2020, 0
      %v2563 = vsel %vm2273, %v2022, 0
      %v2566 = vsel %vm2273, %v2024, 0
      %v2569 = vsel %vm2273, %v2026, 0
      %v2572 = vsel %vm2273, %v2028, 0
      %v2575 = vsel %vm2273, %v2030, 0
      %v2578 = vsel %vm2273, %v2032, 0
      %v2581 = vsel %vm2273, %v2034, 0
      %v2584 = vsel %vm2273, %v2036, 0
      %v2587 = vsel %vm2273, %v2038, 0
      %v2590 = vsel %vm2273, %v2040, 0
      %v2593 = vsel %vm2273, %v2042, 0
      %v2596 = vsel %vm2273, %v2044, 0
      %v2599 = vsel %vm2273, %v2046, 0
      %v2602 = vsel %vm2273, %v2048, 0
      %v2605 = vsel %vm2273, %v2050, 0
      %v2608 = vsel %vm2273, %v2052, 0
      %v2611 = vsel %vm2273, %v2054, 0
      %v2614 = vsel %vm2273, %v2056, 0
      %v2617 = vsel %vm2273, %v2058, 0
      %v2620 = vsel %vm2273, %v2060, 0
      %v2623 = vsel %vm2273, %v2062, 0
      %v2626 = vsel %vm2273, %v2064, 0
      %v2629 = vsel %vm2273, %v2066, 0
      %v2632 = vsel %vm2273, %v2068, 0
      %v2635 = vsel %vm2273, %v2070, 0
      %v2638 = vsel %vm2273, %v2072, 0
      %v2641 = vsel %vm2273, %v2074, 0
      %v2644 = vsel %vm2273, %v2076, 0
      %v2647 = vsel %vm2273, %v2078, 0
      %v2650 = vsel %vm2273, %v2080, 0
      %v2653 = vsel %vm2273, %v2082, 0
      %v2656 = vsel %vm2273, %v2084, 0
      %2658 = vmatpush.bf16.msra.mxu0 %v2260
      %2659 = vmatpush.bf16.msra.mxu0 %v2259
      %2660 = vmatpush.bf16.msra.mxu0 %v2258
      %2661 = vmatpush.bf16.msra.mxu0 %v2257
      %2662 = vmatpush.bf16.msra.mxu0 %v2256
      %2663 = vmatpush.bf16.msra.mxu0 %v2255
      %2664 = vmatpush.bf16.msra.mxu0 %v2254
      %2665 = vmatpush.bf16.msra.mxu0 %v2253
      %2666 = vmatmul.bf16.gmra.mxu0 %v1829
      %v2667 = vpop.f32.mrf.mxu0
      %v2668 = vadd.f32 0.0, %v2667
      %v2669 = vpop.f32.mrf.mxu0
      %v2670 = vadd.f32 0.0, %v2669
      %2671 = vmatmul.bf16.gmra.mxu0 %v1831
      %v2672 = vpop.f32.mrf.mxu0
      %v2673 = vadd.f32 0.0, %v2672
      %v2674 = vpop.f32.mrf.mxu0
      %v2675 = vadd.f32 0.0, %v2674
      %2676 = vmatmul.bf16.gmra.mxu0 %v1833
      %v2677 = vpop.f32.mrf.mxu0
      %v2678 = vadd.f32 0.0, %v2677
      %v2679 = vpop.f32.mrf.mxu0
      %v2680 = vadd.f32 0.0, %v2679
      %2681 = vmatmul.bf16.gmra.mxu0 %v1835
      %v2682 = vpop.f32.mrf.mxu0
      %v2683 = vadd.f32 0.0, %v2682
      %v2684 = vpop.f32.mrf.mxu0
      %v2685 = vadd.f32 0.0, %v2684
      %2686 = vmatmul.bf16.gmra.mxu0 %v1837
      %v2687 = vpop.f32.mrf.mxu0
      %v2688 = vadd.f32 0.0, %v2687
      %v2689 = vpop.f32.mrf.mxu0
      %v2690 = vadd.f32 0.0, %v2689
      %2691 = vmatmul.bf16.gmra.mxu0 %v1839
      %v2692 = vpop.f32.mrf.mxu0
      %v2693 = vadd.f32 0.0, %v2692
      %v2694 = vpop.f32.mrf.mxu0
      %v2695 = vadd.f32 0.0, %v2694
      %2696 = vmatmul.bf16.gmra.mxu0 %v1841
      %v2697 = vpop.f32.mrf.mxu0
      %v2698 = vadd.f32 0.0, %v2697
      %v2699 = vpop.f32.mrf.mxu0
      %v2700 = vadd.f32 0.0, %v2699
      %2701 = vmatmul.bf16.gmra.mxu0 %v1843
      %v2702 = vpop.f32.mrf.mxu0
      %v2703 = vadd.f32 0.0, %v2702
      %v2704 = vpop.f32.mrf.mxu0
      %v2705 = vadd.f32 0.0, %v2704
      %2706 = vmatmul.bf16.gmra.mxu0 %v1845
      %v2707 = vpop.f32.mrf.mxu0
      %v2708 = vadd.f32 0.0, %v2707
      %v2709 = vpop.f32.mrf.mxu0
      %v2710 = vadd.f32 0.0, %v2709
      %2711 = vmatmul.bf16.gmra.mxu0 %v1847
      %v2712 = vpop.f32.mrf.mxu0
      %v2713 = vadd.f32 0.0, %v2712
      %v2714 = vpop.f32.mrf.mxu0
      %v2715 = vadd.f32 0.0, %v2714
      %2716 = vmatmul.bf16.gmra.mxu0 %v1849
      %v2717 = vpop.f32.mrf.mxu0
      %v2718 = vadd.f32 0.0, %v2717
      %v2719 = vpop.f32.mrf.mxu0
      %v2720 = vadd.f32 0.0, %v2719
      %2721 = vmatmul.bf16.gmra.mxu0 %v1851
      %v2722 = vpop.f32.mrf.mxu0
      %v2723 = vadd.f32 0.0, %v2722
      %v2724 = vpop.f32.mrf.mxu0
      %v2725 = vadd.f32 0.0, %v2724
      %2726 = vmatmul.bf16.gmra.mxu0 %v1853
      %v2727 = vpop.f32.mrf.mxu0
      %v2728 = vadd.f32 0.0, %v2727
      %v2729 = vpop.f32.mrf.mxu0
      %v2730 = vadd.f32 0.0, %v2729
      %2731 = vmatmul.bf16.gmra.mxu0 %v1855
      %v2732 = vpop.f32.mrf.mxu0
      %v2733 = vadd.f32 0.0, %v2732
      %v2734 = vpop.f32.mrf.mxu0
      %v2735 = vadd.f32 0.0, %v2734
      %2736 = vmatmul.bf16.gmra.mxu0 %v1857
      %v2737 = vpop.f32.mrf.mxu0
      %v2738 = vadd.f32 0.0, %v2737
      %v2739 = vpop.f32.mrf.mxu0
      %v2740 = vadd.f32 0.0, %v2739
      %2741 = vmatmul.bf16.gmra.mxu0 %v1859
      %v2742 = vpop.f32.mrf.mxu0
      %v2743 = vadd.f32 0.0, %v2742
      %v2744 = vpop.f32.mrf.mxu0
      %v2745 = vadd.f32 0.0, %v2744
      %2746 = vmatmul.bf16.gmra.mxu0 %v1861
      %v2747 = vpop.f32.mrf.mxu0
      %v2748 = vadd.f32 0.0, %v2747
      %v2749 = vpop.f32.mrf.mxu0
      %v2750 = vadd.f32 0.0, %v2749
      %2751 = vmatmul.bf16.gmra.mxu0 %v1863
      %v2752 = vpop.f32.mrf.mxu0
      %v2753 = vadd.f32 0.0, %v2752
      %v2754 = vpop.f32.mrf.mxu0
      %v2755 = vadd.f32 0.0, %v2754
      %2756 = vmatmul.bf16.gmra.mxu0 %v1865
      %v2757 = vpop.f32.mrf.mxu0
      %v2758 = vadd.f32 0.0, %v2757
      %v2759 = vpop.f32.mrf.mxu0
      %v2760 = vadd.f32 0.0, %v2759
      %2761 = vmatmul.bf16.gmra.mxu0 %v1867
      %v2762 = vpop.f32.mrf.mxu0
      %v2763 = vadd.f32 0.0, %v2762
      %v2764 = vpop.f32.mrf.mxu0
      %v2765 = vadd.f32 0.0, %v2764
      %2766 = vmatmul.bf16.gmra.mxu0 %v1869
      %v2767 = vpop.f32.mrf.mxu0
      %v2768 = vadd.f32 0.0, %v2767
      %v2769 = vpop.f32.mrf.mxu0
      %v2770 = vadd.f32 0.0, %v2769
      %2771 = vmatmul.bf16.gmra.mxu0 %v1871
      %v2772 = vpop.f32.mrf.mxu0
      %v2773 = vadd.f32 0.0, %v2772
      %v2774 = vpop.f32.mrf.mxu0
      %v2775 = vadd.f32 0.0, %v2774
      %2776 = vmatmul.bf16.gmra.mxu0 %v1873
      %v2777 = vpop.f32.mrf.mxu0
      %v2778 = vadd.f32 0.0, %v2777
      %v2779 = vpop.f32.mrf.mxu0
      %v2780 = vadd.f32 0.0, %v2779
      %2781 = vmatmul.bf16.gmra.mxu0 %v1875
      %v2782 = vpop.f32.mrf.mxu0
      %v2783 = vadd.f32 0.0, %v2782
      %v2784 = vpop.f32.mrf.mxu0
      %v2785 = vadd.f32 0.0, %v2784
      %2786 = vmatmul.bf16.gmra.mxu0 %v1877
      %v2787 = vpop.f32.mrf.mxu0
      %v2788 = vadd.f32 0.0, %v2787
      %v2789 = vpop.f32.mrf.mxu0
      %v2790 = vadd.f32 0.0, %v2789
      %2791 = vmatmul.bf16.gmra.mxu0 %v1879
      %v2792 = vpop.f32.mrf.mxu0
      %v2793 = vadd.f32 0.0, %v2792
      %v2794 = vpop.f32.mrf.mxu0
      %v2795 = vadd.f32 0.0, %v2794
      %2796 = vmatmul.bf16.gmra.mxu0 %v1881
      %v2797 = vpop.f32.mrf.mxu0
      %v2798 = vadd.f32 0.0, %v2797
      %v2799 = vpop.f32.mrf.mxu0
      %v2800 = vadd.f32 0.0, %v2799
      %2801 = vmatmul.bf16.gmra.mxu0 %v1883
      %v2802 = vpop.f32.mrf.mxu0
      %v2803 = vadd.f32 0.0, %v2802
      %v2804 = vpop.f32.mrf.mxu0
      %v2805 = vadd.f32 0.0, %v2804
      %2806 = vmatmul.bf16.gmra.mxu0 %v1885
      %v2807 = vpop.f32.mrf.mxu0
      %v2808 = vadd.f32 0.0, %v2807
      %v2809 = vpop.f32.mrf.mxu0
      %v2810 = vadd.f32 0.0, %v2809
      %2811 = vmatmul.bf16.gmra.mxu0 %v1887
      %v2812 = vpop.f32.mrf.mxu0
      %v2813 = vadd.f32 0.0, %v2812
      %v2814 = vpop.f32.mrf.mxu0
      %v2815 = vadd.f32 0.0, %v2814
      %2816 = vmatmul.bf16.gmra.mxu0 %v1889
      %v2817 = vpop.f32.mrf.mxu0
      %v2818 = vadd.f32 0.0, %v2817
      %v2819 = vpop.f32.mrf.mxu0
      %v2820 = vadd.f32 0.0, %v2819
      %2821 = vmatmul.bf16.gmra.mxu0 %v1891
      %v2822 = vpop.f32.mrf.mxu0
      %v2823 = vadd.f32 0.0, %v2822
      %v2824 = vpop.f32.mrf.mxu0
      %v2825 = vadd.f32 0.0, %v2824
      %2826 = vmatmul.bf16.gmra.mxu0 %v1893
      %v2827 = vpop.f32.mrf.mxu0
      %v2828 = vadd.f32 0.0, %v2827
      %v2829 = vpop.f32.mrf.mxu0
      %v2830 = vadd.f32 0.0, %v2829
      %2831 = vmatmul.bf16.gmra.mxu0 %v1895
      %v2832 = vpop.f32.mrf.mxu0
      %v2833 = vadd.f32 0.0, %v2832
      %v2834 = vpop.f32.mrf.mxu0
      %v2835 = vadd.f32 0.0, %v2834
      %2836 = vmatmul.bf16.gmra.mxu0 %v1897
      %v2837 = vpop.f32.mrf.mxu0
      %v2838 = vadd.f32 0.0, %v2837
      %v2839 = vpop.f32.mrf.mxu0
      %v2840 = vadd.f32 0.0, %v2839
      %2841 = vmatmul.bf16.gmra.mxu0 %v1899
      %v2842 = vpop.f32.mrf.mxu0
      %v2843 = vadd.f32 0.0, %v2842
      %v2844 = vpop.f32.mrf.mxu0
      %v2845 = vadd.f32 0.0, %v2844
      %2846 = vmatmul.bf16.gmra.mxu0 %v1901
      %v2847 = vpop.f32.mrf.mxu0
      %v2848 = vadd.f32 0.0, %v2847
      %v2849 = vpop.f32.mrf.mxu0
      %v2850 = vadd.f32 0.0, %v2849
      %2851 = vmatmul.bf16.gmra.mxu0 %v1903
      %v2852 = vpop.f32.mrf.mxu0
      %v2853 = vadd.f32 0.0, %v2852
      %v2854 = vpop.f32.mrf.mxu0
      %v2855 = vadd.f32 0.0, %v2854
      %2856 = vmatmul.bf16.gmra.mxu0 %v1905
      %v2857 = vpop.f32.mrf.mxu0
      %v2858 = vadd.f32 0.0, %v2857
      %v2859 = vpop.f32.mrf.mxu0
      %v2860 = vadd.f32 0.0, %v2859
      %2861 = vmatmul.bf16.gmra.mxu0 %v1907
      %v2862 = vpop.f32.mrf.mxu0
      %v2863 = vadd.f32 0.0, %v2862
      %v2864 = vpop.f32.mrf.mxu0
      %v2865 = vadd.f32 0.0, %v2864
      %2866 = vmatmul.bf16.gmra.mxu0 %v1909
      %v2867 = vpop.f32.mrf.mxu0
      %v2868 = vadd.f32 0.0, %v2867
      %v2869 = vpop.f32.mrf.mxu0
      %v2870 = vadd.f32 0.0, %v2869
      %2871 = vmatmul.bf16.gmra.mxu0 %v1911
      %v2872 = vpop.f32.mrf.mxu0
      %v2873 = vadd.f32 0.0, %v2872
      %v2874 = vpop.f32.mrf.mxu0
      %v2875 = vadd.f32 0.0, %v2874
      %2876 = vmatmul.bf16.gmra.mxu0 %v1913
      %v2877 = vpop.f32.mrf.mxu0
      %v2878 = vadd.f32 0.0, %v2877
      %v2879 = vpop.f32.mrf.mxu0
      %v2880 = vadd.f32 0.0, %v2879
      %2881 = vmatmul.bf16.gmra.mxu0 %v1915
      %v2882 = vpop.f32.mrf.mxu0
      %v2883 = vadd.f32 0.0, %v2882
      %v2884 = vpop.f32.mrf.mxu0
      %v2885 = vadd.f32 0.0, %v2884
      %2886 = vmatmul.bf16.gmra.mxu0 %v1917
      %v2887 = vpop.f32.mrf.mxu0
      %v2888 = vadd.f32 0.0, %v2887
      %v2889 = vpop.f32.mrf.mxu0
      %v2890 = vadd.f32 0.0, %v2889
      %2891 = vmatmul.bf16.gmra.mxu0 %v1919
      %v2892 = vpop.f32.mrf.mxu0
      %v2893 = vadd.f32 0.0, %v2892
      %v2894 = vpop.f32.mrf.mxu0
      %v2895 = vadd.f32 0.0, %v2894
      %2896 = vmatmul.bf16.gmra.mxu0 %v1921
      %v2897 = vpop.f32.mrf.mxu0
      %v2898 = vadd.f32 0.0, %v2897
      %v2899 = vpop.f32.mrf.mxu0
      %v2900 = vadd.f32 0.0, %v2899
      %2901 = vmatmul.bf16.gmra.mxu0 %v1923
      %v2902 = vpop.f32.mrf.mxu0
      %v2903 = vadd.f32 0.0, %v2902
      %v2904 = vpop.f32.mrf.mxu0
      %v2905 = vadd.f32 0.0, %v2904
      %2906 = vmatmul.bf16.gmra.mxu0 %v1925
      %v2907 = vpop.f32.mrf.mxu0
      %v2908 = vadd.f32 0.0, %v2907
      %v2909 = vpop.f32.mrf.mxu0
      %v2910 = vadd.f32 0.0, %v2909
      %2911 = vmatmul.bf16.gmra.mxu0 %v1927
      %v2912 = vpop.f32.mrf.mxu0
      %v2913 = vadd.f32 0.0, %v2912
      %v2914 = vpop.f32.mrf.mxu0
      %v2915 = vadd.f32 0.0, %v2914
      %2916 = vmatmul.bf16.gmra.mxu0 %v1929
      %v2917 = vpop.f32.mrf.mxu0
      %v2918 = vadd.f32 0.0, %v2917
      %v2919 = vpop.f32.mrf.mxu0
      %v2920 = vadd.f32 0.0, %v2919
      %2921 = vmatmul.bf16.gmra.mxu0 %v1931
      %v2922 = vpop.f32.mrf.mxu0
      %v2923 = vadd.f32 0.0, %v2922
      %v2924 = vpop.f32.mrf.mxu0
      %v2925 = vadd.f32 0.0, %v2924
      %2926 = vmatmul.bf16.gmra.mxu0 %v1933
      %v2927 = vpop.f32.mrf.mxu0
      %v2928 = vadd.f32 0.0, %v2927
      %v2929 = vpop.f32.mrf.mxu0
      %v2930 = vadd.f32 0.0, %v2929
      %2931 = vmatmul.bf16.gmra.mxu0 %v1935
      %v2932 = vpop.f32.mrf.mxu0
      %v2933 = vadd.f32 0.0, %v2932
      %v2934 = vpop.f32.mrf.mxu0
      %v2935 = vadd.f32 0.0, %v2934
      %2936 = vmatmul.bf16.gmra.mxu0 %v1937
      %v2937 = vpop.f32.mrf.mxu0
      %v2938 = vadd.f32 0.0, %v2937
      %v2939 = vpop.f32.mrf.mxu0
      %v2940 = vadd.f32 0.0, %v2939
      %2941 = vmatmul.bf16.gmra.mxu0 %v1939
      %v2942 = vpop.f32.mrf.mxu0
      %v2943 = vadd.f32 0.0, %v2942
      %v2944 = vpop.f32.mrf.mxu0
      %v2945 = vadd.f32 0.0, %v2944
      %2946 = vmatmul.bf16.gmra.mxu0 %v1941
      %v2947 = vpop.f32.mrf.mxu0
      %v2948 = vadd.f32 0.0, %v2947
      %v2949 = vpop.f32.mrf.mxu0
      %v2950 = vadd.f32 0.0, %v2949
      %2951 = vmatmul.bf16.gmra.mxu0 %v1943
      %v2952 = vpop.f32.mrf.mxu0
      %v2953 = vadd.f32 0.0, %v2952
      %v2954 = vpop.f32.mrf.mxu0
      %v2955 = vadd.f32 0.0, %v2954
      %2956 = vmatmul.bf16.gmra.mxu0 %v1945
      %v2957 = vpop.f32.mrf.mxu0
      %v2958 = vadd.f32 0.0, %v2957
      %v2959 = vpop.f32.mrf.mxu0
      %v2960 = vadd.f32 0.0, %v2959
      %2961 = vmatmul.bf16.gmra.mxu0 %v1947
      %v2962 = vpop.f32.mrf.mxu0
      %v2963 = vadd.f32 0.0, %v2962
      %v2964 = vpop.f32.mrf.mxu0
      %v2965 = vadd.f32 0.0, %v2964
      %2966 = vmatmul.bf16.gmra.mxu0 %v1949
      %v2967 = vpop.f32.mrf.mxu0
      %v2968 = vadd.f32 0.0, %v2967
      %v2969 = vpop.f32.mrf.mxu0
      %v2970 = vadd.f32 0.0, %v2969
      %2971 = vmatmul.bf16.gmra.mxu0 %v1951
      %v2972 = vpop.f32.mrf.mxu0
      %v2973 = vadd.f32 0.0, %v2972
      %v2974 = vpop.f32.mrf.mxu0
      %v2975 = vadd.f32 0.0, %v2974
      %2976 = vmatmul.bf16.gmra.mxu0 %v1953
      %v2977 = vpop.f32.mrf.mxu0
      %v2978 = vadd.f32 0.0, %v2977
      %v2979 = vpop.f32.mrf.mxu0
      %v2980 = vadd.f32 0.0, %v2979
      %2981 = vmatmul.bf16.gmra.mxu0 %v1955
      %v2982 = vpop.f32.mrf.mxu0
      %v2983 = vadd.f32 0.0, %v2982
      %v2984 = vpop.f32.mrf.mxu0
      %v2985 = vadd.f32 0.0, %v2984
      %2986 = vmatmul.bf16.gmra.mxu0 %v1957
      %v2987 = vpop.f32.mrf.mxu0
      %v2988 = vadd.f32 0.0, %v2987
      %v2989 = vpop.f32.mrf.mxu0
      %v2990 = vadd.f32 0.0, %v2989
      %2991 = vmatmul.bf16.gmra.mxu0 %v1959
      %v2992 = vpop.f32.mrf.mxu0
      %v2993 = vadd.f32 0.0, %v2992
      %v2994 = vpop.f32.mrf.mxu0
      %v2995 = vadd.f32 0.0, %v2994
      %2996 = vmatmul.bf16.gmra.mxu0 %v1961
      %v2997 = vpop.f32.mrf.mxu0
      %v2998 = vadd.f32 0.0, %v2997
      %v2999 = vpop.f32.mrf.mxu0
      %v3000 = vadd.f32 0.0, %v2999
      %3001 = vmatmul.bf16.gmra.mxu0 %v1963
      %v3002 = vpop.f32.mrf.mxu0
      %v3003 = vadd.f32 0.0, %v3002
      %v3004 = vpop.f32.mrf.mxu0
      %v3005 = vadd.f32 0.0, %v3004
      %3006 = vmatmul.bf16.gmra.mxu0 %v1965
      %v3007 = vpop.f32.mrf.mxu0
      %v3008 = vadd.f32 0.0, %v3007
      %v3009 = vpop.f32.mrf.mxu0
      %v3010 = vadd.f32 0.0, %v3009
      %3011 = vmatmul.bf16.gmra.mxu0 %v1967
      %v3012 = vpop.f32.mrf.mxu0
      %v3013 = vadd.f32 0.0, %v3012
      %v3014 = vpop.f32.mrf.mxu0
      %v3015 = vadd.f32 0.0, %v3014
      %3016 = vmatmul.bf16.gmra.mxu0 %v1969
      %v3017 = vpop.f32.mrf.mxu0
      %v3018 = vadd.f32 0.0, %v3017
      %v3019 = vpop.f32.mrf.mxu0
      %v3020 = vadd.f32 0.0, %v3019
      %3021 = vmatmul.bf16.gmra.mxu0 %v1971
      %v3022 = vpop.f32.mrf.mxu0
      %v3023 = vadd.f32 0.0, %v3022
      %v3024 = vpop.f32.mrf.mxu0
      %v3025 = vadd.f32 0.0, %v3024
      %3026 = vmatmul.bf16.gmra.mxu0 %v1973
      %v3027 = vpop.f32.mrf.mxu0
      %v3028 = vadd.f32 0.0, %v3027
      %v3029 = vpop.f32.mrf.mxu0
      %v3030 = vadd.f32 0.0, %v3029
      %3031 = vmatmul.bf16.gmra.mxu0 %v1975
      %v3032 = vpop.f32.mrf.mxu0
      %v3033 = vadd.f32 0.0, %v3032
      %v3034 = vpop.f32.mrf.mxu0
      %v3035 = vadd.f32 0.0, %v3034
      %3036 = vmatmul.bf16.gmra.mxu0 %v1977
      %v3037 = vpop.f32.mrf.mxu0
      %v3038 = vadd.f32 0.0, %v3037
      %v3039 = vpop.f32.mrf.mxu0
      %v3040 = vadd.f32 0.0, %v3039
      %3041 = vmatmul.bf16.gmra.mxu0 %v1979
      %v3042 = vpop.f32.mrf.mxu0
      %v3043 = vadd.f32 0.0, %v3042
      %v3044 = vpop.f32.mrf.mxu0
      %v3045 = vadd.f32 0.0, %v3044
      %3046 = vmatmul.bf16.gmra.mxu0 %v1981
      %v3047 = vpop.f32.mrf.mxu0
      %v3048 = vadd.f32 0.0, %v3047
      %v3049 = vpop.f32.mrf.mxu0
      %v3050 = vadd.f32 0.0, %v3049
      %3051 = vmatmul.bf16.gmra.mxu0 %v1983
      %v3052 = vpop.f32.mrf.mxu0
      %v3053 = vadd.f32 0.0, %v3052
      %v3054 = vpop.f32.mrf.mxu0
      %v3055 = vadd.f32 0.0, %v3054
      %3056 = vmatmul.bf16.gmra.mxu0 %v1985
      %v3057 = vpop.f32.mrf.mxu0
      %v3058 = vadd.f32 0.0, %v3057
      %v3059 = vpop.f32.mrf.mxu0
      %v3060 = vadd.f32 0.0, %v3059
      %3061 = vmatmul.bf16.gmra.mxu0 %v1987
      %v3062 = vpop.f32.mrf.mxu0
      %v3063 = vadd.f32 0.0, %v3062
      %v3064 = vpop.f32.mrf.mxu0
      %v3065 = vadd.f32 0.0, %v3064
      %3066 = vmatmul.bf16.gmra.mxu0 %v1989
      %v3067 = vpop.f32.mrf.mxu0
      %v3068 = vadd.f32 0.0, %v3067
      %v3069 = vpop.f32.mrf.mxu0
      %v3070 = vadd.f32 0.0, %v3069
      %3071 = vmatmul.bf16.gmra.mxu0 %v1991
      %v3072 = vpop.f32.mrf.mxu0
      %v3073 = vadd.f32 0.0, %v3072
      %v3074 = vpop.f32.mrf.mxu0
      %v3075 = vadd.f32 0.0, %v3074
      %3076 = vmatmul.bf16.gmra.mxu0 %v1993
      %v3077 = vpop.f32.mrf.mxu0
      %v3078 = vadd.f32 0.0, %v3077
      %v3079 = vpop.f32.mrf.mxu0
      %v3080 = vadd.f32 0.0, %v3079
      %3081 = vmatmul.bf16.gmra.mxu0 %v1995
      %v3082 = vpop.f32.mrf.mxu0
      %v3083 = vadd.f32 0.0, %v3082
      %v3084 = vpop.f32.mrf.mxu0
      %v3085 = vadd.f32 0.0, %v3084
      %3086 = vmatmul.bf16.gmra.mxu0 %v1997
      %v3087 = vpop.f32.mrf.mxu0
      %v3088 = vadd.f32 0.0, %v3087
      %v3089 = vpop.f32.mrf.mxu0
      %v3090 = vadd.f32 0.0, %v3089
      %3091 = vmatmul.bf16.gmra.mxu0 %v1999
      %v3092 = vpop.f32.mrf.mxu0
      %v3093 = vadd.f32 0.0, %v3092
      %v3094 = vpop.f32.mrf.mxu0
      %v3095 = vadd.f32 0.0, %v3094
      %3096 = vmatmul.bf16.gmra.mxu0 %v2001
      %v3097 = vpop.f32.mrf.mxu0
      %v3098 = vadd.f32 0.0, %v3097
      %v3099 = vpop.f32.mrf.mxu0
      %v3100 = vadd.f32 0.0, %v3099
      %3101 = vmatmul.bf16.gmra.mxu0 %v2003
      %v3102 = vpop.f32.mrf.mxu0
      %v3103 = vadd.f32 0.0, %v3102
      %v3104 = vpop.f32.mrf.mxu0
      %v3105 = vadd.f32 0.0, %v3104
      %3106 = vmatmul.bf16.gmra.mxu0 %v2005
      %v3107 = vpop.f32.mrf.mxu0
      %v3108 = vadd.f32 0.0, %v3107
      %v3109 = vpop.f32.mrf.mxu0
      %v3110 = vadd.f32 0.0, %v3109
      %3111 = vmatmul.bf16.gmra.mxu0 %v2007
      %v3112 = vpop.f32.mrf.mxu0
      %v3113 = vadd.f32 0.0, %v3112
      %v3114 = vpop.f32.mrf.mxu0
      %v3115 = vadd.f32 0.0, %v3114
      %3116 = vmatmul.bf16.gmra.mxu0 %v2009
      %v3117 = vpop.f32.mrf.mxu0
      %v3118 = vadd.f32 0.0, %v3117
      %v3119 = vpop.f32.mrf.mxu0
      %v3120 = vadd.f32 0.0, %v3119
      %3121 = vmatmul.bf16.gmra.mxu0 %v2011
      %v3122 = vpop.f32.mrf.mxu0
      %v3123 = vadd.f32 0.0, %v3122
      %v3124 = vpop.f32.mrf.mxu0
      %v3125 = vadd.f32 0.0, %v3124
      %3126 = vmatmul.bf16.gmra.mxu0 %v2013
      %v3127 = vpop.f32.mrf.mxu0
      %v3128 = vadd.f32 0.0, %v3127
      %v3129 = vpop.f32.mrf.mxu0
      %v3130 = vadd.f32 0.0, %v3129
      %3131 = vmatmul.bf16.gmra.mxu0 %v2015
      %v3132 = vpop.f32.mrf.mxu0
      %v3133 = vadd.f32 0.0, %v3132
      %v3134 = vpop.f32.mrf.mxu0
      %v3135 = vadd.f32 0.0, %v3134
      %3136 = vmatmul.bf16.gmra.mxu0 %v2017
      %v3137 = vpop.f32.mrf.mxu0
      %v3138 = vadd.f32 0.0, %v3137
      %v3139 = vpop.f32.mrf.mxu0
      %v3140 = vadd.f32 0.0, %v3139
      %3141 = vmatmul.bf16.gmra.mxu0 %v2019
      %v3142 = vpop.f32.mrf.mxu0
      %v3143 = vadd.f32 0.0, %v3142
      %v3144 = vpop.f32.mrf.mxu0
      %v3145 = vadd.f32 0.0, %v3144
      %3146 = vmatmul.bf16.gmra.mxu0 %v2021
      %v3147 = vpop.f32.mrf.mxu0
      %v3148 = vadd.f32 0.0, %v3147
      %v3149 = vpop.f32.mrf.mxu0
      %v3150 = vadd.f32 0.0, %v3149
      %3151 = vmatmul.bf16.gmra.mxu0 %v2023
      %v3152 = vpop.f32.mrf.mxu0
      %v3153 = vadd.f32 0.0, %v3152
      %v3154 = vpop.f32.mrf.mxu0
      %v3155 = vadd.f32 0.0, %v3154
      %3156 = vmatmul.bf16.gmra.mxu0 %v2025
      %v3157 = vpop.f32.mrf.mxu0
      %v3158 = vadd.f32 0.0, %v3157
      %v3159 = vpop.f32.mrf.mxu0
      %v3160 = vadd.f32 0.0, %v3159
      %3161 = vmatmul.bf16.gmra.mxu0 %v2027
      %v3162 = vpop.f32.mrf.mxu0
      %v3163 = vadd.f32 0.0, %v3162
      %v3164 = vpop.f32.mrf.mxu0
      %v3165 = vadd.f32 0.0, %v3164
      %3166 = vmatmul.bf16.gmra.mxu0 %v2029
      %v3167 = vpop.f32.mrf.mxu0
      %v3168 = vadd.f32 0.0, %v3167
      %v3169 = vpop.f32.mrf.mxu0
      %v3170 = vadd.f32 0.0, %v3169
      %3171 = vmatmul.bf16.gmra.mxu0 %v2031
      %v3172 = vpop.f32.mrf.mxu0
      %v3173 = vadd.f32 0.0, %v3172
      %v3174 = vpop.f32.mrf.mxu0
      %v3175 = vadd.f32 0.0, %v3174
      %3176 = vmatmul.bf16.gmra.mxu0 %v2033
      %v3177 = vpop.f32.mrf.mxu0
      %v3178 = vadd.f32 0.0, %v3177
      %v3179 = vpop.f32.mrf.mxu0
      %v3180 = vadd.f32 0.0, %v3179
      %3181 = vmatmul.bf16.gmra.mxu0 %v2035
      %v3182 = vpop.f32.mrf.mxu0
      %v3183 = vadd.f32 0.0, %v3182
      %v3184 = vpop.f32.mrf.mxu0
      %v3185 = vadd.f32 0.0, %v3184
      %3186 = vmatmul.bf16.gmra.mxu0 %v2037
      %v3187 = vpop.f32.mrf.mxu0
      %v3188 = vadd.f32 0.0, %v3187
      %v3189 = vpop.f32.mrf.mxu0
      %v3190 = vadd.f32 0.0, %v3189
      %3191 = vmatmul.bf16.gmra.mxu0 %v2039
      %v3192 = vpop.f32.mrf.mxu0
      %v3193 = vadd.f32 0.0, %v3192
      %v3194 = vpop.f32.mrf.mxu0
      %v3195 = vadd.f32 0.0, %v3194
      %3196 = vmatmul.bf16.gmra.mxu0 %v2041
      %v3197 = vpop.f32.mrf.mxu0
      %v3198 = vadd.f32 0.0, %v3197
      %v3199 = vpop.f32.mrf.mxu0
      %v3200 = vadd.f32 0.0, %v3199
      %3201 = vmatmul.bf16.gmra.mxu0 %v2043
      %v3202 = vpop.f32.mrf.mxu0
      %v3203 = vadd.f32 0.0, %v3202
      %v3204 = vpop.f32.mrf.mxu0
      %v3205 = vadd.f32 0.0, %v3204
      %3206 = vmatmul.bf16.gmra.mxu0 %v2045
      %v3207 = vpop.f32.mrf.mxu0
      %v3208 = vadd.f32 0.0, %v3207
      %v3209 = vpop.f32.mrf.mxu0
      %v3210 = vadd.f32 0.0, %v3209
      %3211 = vmatmul.bf16.gmra.mxu0 %v2047
      %v3212 = vpop.f32.mrf.mxu0
      %v3213 = vadd.f32 0.0, %v3212
      %v3214 = vpop.f32.mrf.mxu0
      %v3215 = vadd.f32 0.0, %v3214
      %3216 = vmatmul.bf16.gmra.mxu0 %v2049
      %v3217 = vpop.f32.mrf.mxu0
      %v3218 = vadd.f32 0.0, %v3217
      %v3219 = vpop.f32.mrf.mxu0
      %v3220 = vadd.f32 0.0, %v3219
      %3221 = vmatmul.bf16.gmra.mxu0 %v2051
      %v3222 = vpop.f32.mrf.mxu0
      %v3223 = vadd.f32 0.0, %v3222
      %v3224 = vpop.f32.mrf.mxu0
      %v3225 = vadd.f32 0.0, %v3224
      %3226 = vmatmul.bf16.gmra.mxu0 %v2053
      %v3227 = vpop.f32.mrf.mxu0
      %v3228 = vadd.f32 0.0, %v3227
      %v3229 = vpop.f32.mrf.mxu0
      %v3230 = vadd.f32 0.0, %v3229
      %3231 = vmatmul.bf16.gmra.mxu0 %v2055
      %v3232 = vpop.f32.mrf.mxu0
      %v3233 = vadd.f32 0.0, %v3232
      %v3234 = vpop.f32.mrf.mxu0
      %v3235 = vadd.f32 0.0, %v3234
      %3236 = vmatmul.bf16.gmra.mxu0 %v2057
      %v3237 = vpop.f32.mrf.mxu0
      %v3238 = vadd.f32 0.0, %v3237
      %v3239 = vpop.f32.mrf.mxu0
      %v3240 = vadd.f32 0.0, %v3239
      %3241 = vmatmul.bf16.gmra.mxu0 %v2059
      %v3242 = vpop.f32.mrf.mxu0
      %v3243 = vadd.f32 0.0, %v3242
      %v3244 = vpop.f32.mrf.mxu0
      %v3245 = vadd.f32 0.0, %v3244
      %3246 = vmatmul.bf16.gmra.mxu0 %v2061
      %v3247 = vpop.f32.mrf.mxu0
      %v3248 = vadd.f32 0.0, %v3247
      %v3249 = vpop.f32.mrf.mxu0
      %v3250 = vadd.f32 0.0, %v3249
      %3251 = vmatmul.bf16.gmra.mxu0 %v2063
      %v3252 = vpop.f32.mrf.mxu0
      %v3253 = vadd.f32 0.0, %v3252
      %v3254 = vpop.f32.mrf.mxu0
      %v3255 = vadd.f32 0.0, %v3254
      %3256 = vmatmul.bf16.gmra.mxu0 %v2065
      %v3257 = vpop.f32.mrf.mxu0
      %v3258 = vadd.f32 0.0, %v3257
      %v3259 = vpop.f32.mrf.mxu0
      %v3260 = vadd.f32 0.0, %v3259
      %3261 = vmatmul.bf16.gmra.mxu0 %v2067
      %v3262 = vpop.f32.mrf.mxu0
      %v3263 = vadd.f32 0.0, %v3262
      %v3264 = vpop.f32.mrf.mxu0
      %v3265 = vadd.f32 0.0, %v3264
      %3266 = vmatmul.bf16.gmra.mxu0 %v2069
      %v3267 = vpop.f32.mrf.mxu0
      %v3268 = vadd.f32 0.0, %v3267
      %v3269 = vpop.f32.mrf.mxu0
      %v3270 = vadd.f32 0.0, %v3269
      %3271 = vmatmul.bf16.gmra.mxu0 %v2071
      %v3272 = vpop.f32.mrf.mxu0
      %v3273 = vadd.f32 0.0, %v3272
      %v3274 = vpop.f32.mrf.mxu0
      %v3275 = vadd.f32 0.0, %v3274
      %3276 = vmatmul.bf16.gmra.mxu0 %v2073
      %v3277 = vpop.f32.mrf.mxu0
      %v3278 = vadd.f32 0.0, %v3277
      %v3279 = vpop.f32.mrf.mxu0
      %v3280 = vadd.f32 0.0, %v3279
      %3281 = vmatmul.bf16.gmra.mxu0 %v2075
      %v3282 = vpop.f32.mrf.mxu0
      %v3283 = vadd.f32 0.0, %v3282
      %v3284 = vpop.f32.mrf.mxu0
      %v3285 = vadd.f32 0.0, %v3284
      %3286 = vmatmul.bf16.gmra.mxu0 %v2077
      %v3287 = vpop.f32.mrf.mxu0
      %v3288 = vadd.f32 0.0, %v3287
      %v3289 = vpop.f32.mrf.mxu0
      %v3290 = vadd.f32 0.0, %v3289
      %3291 = vmatmul.bf16.gmra.mxu0 %v2079
      %v3292 = vpop.f32.mrf.mxu0
      %v3293 = vadd.f32 0.0, %v3292
      %v3294 = vpop.f32.mrf.mxu0
      %v3295 = vadd.f32 0.0, %v3294
      %3296 = vmatmul.bf16.gmra.mxu0 %v2081
      %v3297 = vpop.f32.mrf.mxu0
      %v3298 = vadd.f32 0.0, %v3297
      %v3299 = vpop.f32.mrf.mxu0
      %v3300 = vadd.f32 0.0, %v3299
      %3301 = vmatmul.bf16.gmra.mxu0 %v2083
      %v3302 = vpop.f32.mrf.mxu0
      %v3303 = vadd.f32 0.0, %v3302
      %v3304 = vpop.f32.mrf.mxu0
      %v3305 = vadd.f32 0.0, %v3304
      %3306 = vdwg.mxu0
      %3307 = vmatpush.bf16.msra.mxu0 0
      %3308 = vmatpush.bf16.msra.mxu0 0
      %3309 = vmatpush.bf16.msra.mxu0 0
      %3310 = vmatpush.bf16.msra.mxu0 0
      %3311 = vmatpush.bf16.msra.mxu0 0
      %3312 = vmatpush.bf16.msra.mxu0 0
      %3313 = vmatpush.bf16.msra.mxu0 %v2262
      %3314 = vmatpush.bf16.msra.mxu0 %v2261
      %3315 = vmatmul.bf16.gmra.mxu0 %v2275
      %v3316 = vpop.f32.mrf.mxu0
      %v3317 = vadd.f32 %v2668, %v3316
      %v3318 = vpop.f32.mrf.mxu0
      %v3319 = vadd.f32 %v2670, %v3318
      %3320 = vmatmul.bf16.gmra.mxu0 %v2278
      %v3321 = vpop.f32.mrf.mxu0
      %v3322 = vadd.f32 %v2673, %v3321
      %v3323 = vpop.f32.mrf.mxu0
      %v3324 = vadd.f32 %v2675, %v3323
      %3325 = vmatmul.bf16.gmra.mxu0 %v2281
      %v3326 = vpop.f32.mrf.mxu0
      %v3327 = vadd.f32 %v2678, %v3326
      %v3328 = vpop.f32.mrf.mxu0
      %v3329 = vadd.f32 %v2680, %v3328
      %3330 = vmatmul.bf16.gmra.mxu0 %v2284
      %v3331 = vpop.f32.mrf.mxu0
      %v3332 = vadd.f32 %v2683, %v3331
      %v3333 = vpop.f32.mrf.mxu0
      %v3334 = vadd.f32 %v2685, %v3333
      %3335 = vmatmul.bf16.gmra.mxu0 %v2287
      %v3336 = vpop.f32.mrf.mxu0
      %v3337 = vadd.f32 %v2688, %v3336
      %v3338 = vpop.f32.mrf.mxu0
      %v3339 = vadd.f32 %v2690, %v3338
      %3340 = vmatmul.bf16.gmra.mxu0 %v2290
      %v3341 = vpop.f32.mrf.mxu0
      %v3342 = vadd.f32 %v2693, %v3341
      %v3343 = vpop.f32.mrf.mxu0
      %v3344 = vadd.f32 %v2695, %v3343
      %3345 = vmatmul.bf16.gmra.mxu0 %v2293
      %v3346 = vpop.f32.mrf.mxu0
      %v3347 = vadd.f32 %v2698, %v3346
      %v3348 = vpop.f32.mrf.mxu0
      %v3349 = vadd.f32 %v2700, %v3348
      %3350 = vmatmul.bf16.gmra.mxu0 %v2296
      %v3351 = vpop.f32.mrf.mxu0
      %v3352 = vadd.f32 %v2703, %v3351
      %v3353 = vpop.f32.mrf.mxu0
      %v3354 = vadd.f32 %v2705, %v3353
      %3355 = vmatmul.bf16.gmra.mxu0 %v2299
      %v3356 = vpop.f32.mrf.mxu0
      %v3357 = vadd.f32 %v2708, %v3356
      %v3358 = vpop.f32.mrf.mxu0
      %v3359 = vadd.f32 %v2710, %v3358
      %3360 = vmatmul.bf16.gmra.mxu0 %v2302
      %v3361 = vpop.f32.mrf.mxu0
      %v3362 = vadd.f32 %v2713, %v3361
      %v3363 = vpop.f32.mrf.mxu0
      %v3364 = vadd.f32 %v2715, %v3363
      %3365 = vmatmul.bf16.gmra.mxu0 %v2305
      %v3366 = vpop.f32.mrf.mxu0
      %v3367 = vadd.f32 %v2718, %v3366
      %v3368 = vpop.f32.mrf.mxu0
      %v3369 = vadd.f32 %v2720, %v3368
      %3370 = vmatmul.bf16.gmra.mxu0 %v2308
      %v3371 = vpop.f32.mrf.mxu0
      %v3372 = vadd.f32 %v2723, %v3371
      %v3373 = vpop.f32.mrf.mxu0
      %v3374 = vadd.f32 %v2725, %v3373
      %3375 = vmatmul.bf16.gmra.mxu0 %v2311
      %v3376 = vpop.f32.mrf.mxu0
      %v3377 = vadd.f32 %v2728, %v3376
      %v3378 = vpop.f32.mrf.mxu0
      %v3379 = vadd.f32 %v2730, %v3378
      %3380 = vmatmul.bf16.gmra.mxu0 %v2314
      %v3381 = vpop.f32.mrf.mxu0
      %v3382 = vadd.f32 %v2733, %v3381
      %v3383 = vpop.f32.mrf.mxu0
      %v3384 = vadd.f32 %v2735, %v3383
      %3385 = vmatmul.bf16.gmra.mxu0 %v2317
      %v3386 = vpop.f32.mrf.mxu0
      %v3387 = vadd.f32 %v2738, %v3386
      %v3388 = vpop.f32.mrf.mxu0
      %v3389 = vadd.f32 %v2740, %v3388
      %3390 = vmatmul.bf16.gmra.mxu0 %v2320
      %v3391 = vpop.f32.mrf.mxu0
      %v3392 = vadd.f32 %v2743, %v3391
      %v3393 = vpop.f32.mrf.mxu0
      %v3394 = vadd.f32 %v2745, %v3393
      %3395 = vmatmul.bf16.gmra.mxu0 %v2323
      %v3396 = vpop.f32.mrf.mxu0
      %v3397 = vadd.f32 %v2748, %v3396
      %v3398 = vpop.f32.mrf.mxu0
      %v3399 = vadd.f32 %v2750, %v3398
      %3400 = vmatmul.bf16.gmra.mxu0 %v2326
      %v3401 = vpop.f32.mrf.mxu0
      %v3402 = vadd.f32 %v2753, %v3401
      %v3403 = vpop.f32.mrf.mxu0
      %v3404 = vadd.f32 %v2755, %v3403
      %3405 = vmatmul.bf16.gmra.mxu0 %v2329
      %v3406 = vpop.f32.mrf.mxu0
      %v3407 = vadd.f32 %v2758, %v3406
      %v3408 = vpop.f32.mrf.mxu0
      %v3409 = vadd.f32 %v2760, %v3408
      %3410 = vmatmul.bf16.gmra.mxu0 %v2332
      %v3411 = vpop.f32.mrf.mxu0
      %v3412 = vadd.f32 %v2763, %v3411
      %v3413 = vpop.f32.mrf.mxu0
      %v3414 = vadd.f32 %v2765, %v3413
      %3415 = vmatmul.bf16.gmra.mxu0 %v2335
      %v3416 = vpop.f32.mrf.mxu0
      %v3417 = vadd.f32 %v2768, %v3416
      %v3418 = vpop.f32.mrf.mxu0
      %v3419 = vadd.f32 %v2770, %v3418
      %3420 = vmatmul.bf16.gmra.mxu0 %v2338
      %v3421 = vpop.f32.mrf.mxu0
      %v3422 = vadd.f32 %v2773, %v3421
      %v3423 = vpop.f32.mrf.mxu0
      %v3424 = vadd.f32 %v2775, %v3423
      %3425 = vmatmul.bf16.gmra.mxu0 %v2341
      %v3426 = vpop.f32.mrf.mxu0
      %v3427 = vadd.f32 %v2778, %v3426
      %v3428 = vpop.f32.mrf.mxu0
      %v3429 = vadd.f32 %v2780, %v3428
      %3430 = vmatmul.bf16.gmra.mxu0 %v2344
      %v3431 = vpop.f32.mrf.mxu0
      %v3432 = vadd.f32 %v2783, %v3431
      %v3433 = vpop.f32.mrf.mxu0
      %v3434 = vadd.f32 %v2785, %v3433
      %3435 = vmatmul.bf16.gmra.mxu0 %v2347
      %v3436 = vpop.f32.mrf.mxu0
      %v3437 = vadd.f32 %v2788, %v3436
      %v3438 = vpop.f32.mrf.mxu0
      %v3439 = vadd.f32 %v2790, %v3438
      %3440 = vmatmul.bf16.gmra.mxu0 %v2350
      %v3441 = vpop.f32.mrf.mxu0
      %v3442 = vadd.f32 %v2793, %v3441
      %v3443 = vpop.f32.mrf.mxu0
      %v3444 = vadd.f32 %v2795, %v3443
      %3445 = vmatmul.bf16.gmra.mxu0 %v2353
      %v3446 = vpop.f32.mrf.mxu0
      %v3447 = vadd.f32 %v2798, %v3446
      %v3448 = vpop.f32.mrf.mxu0
      %v3449 = vadd.f32 %v2800, %v3448
      %3450 = vmatmul.bf16.gmra.mxu0 %v2356
      %v3451 = vpop.f32.mrf.mxu0
      %v3452 = vadd.f32 %v2803, %v3451
      %v3453 = vpop.f32.mrf.mxu0
      %v3454 = vadd.f32 %v2805, %v3453
      %3455 = vmatmul.bf16.gmra.mxu0 %v2359
      %v3456 = vpop.f32.mrf.mxu0
      %v3457 = vadd.f32 %v2808, %v3456
      %v3458 = vpop.f32.mrf.mxu0
      %v3459 = vadd.f32 %v2810, %v3458
      %3460 = vmatmul.bf16.gmra.mxu0 %v2362
      %v3461 = vpop.f32.mrf.mxu0
      %v3462 = vadd.f32 %v2813, %v3461
      %v3463 = vpop.f32.mrf.mxu0
      %v3464 = vadd.f32 %v2815, %v3463
      %3465 = vmatmul.bf16.gmra.mxu0 %v2365
      %v3466 = vpop.f32.mrf.mxu0
      %v3467 = vadd.f32 %v2818, %v3466
      %v3468 = vpop.f32.mrf.mxu0
      %v3469 = vadd.f32 %v2820, %v3468
      %3470 = vmatmul.bf16.gmra.mxu0 %v2368
      %v3471 = vpop.f32.mrf.mxu0
      %v3472 = vadd.f32 %v2823, %v3471
      %v3473 = vpop.f32.mrf.mxu0
      %v3474 = vadd.f32 %v2825, %v3473
      %3475 = vmatmul.bf16.gmra.mxu0 %v2371
      %v3476 = vpop.f32.mrf.mxu0
      %v3477 = vadd.f32 %v2828, %v3476
      %v3478 = vpop.f32.mrf.mxu0
      %v3479 = vadd.f32 %v2830, %v3478
      %3480 = vmatmul.bf16.gmra.mxu0 %v2374
      %v3481 = vpop.f32.mrf.mxu0
      %v3482 = vadd.f32 %v2833, %v3481
      %v3483 = vpop.f32.mrf.mxu0
      %v3484 = vadd.f32 %v2835, %v3483
      %3485 = vmatmul.bf16.gmra.mxu0 %v2377
      %v3486 = vpop.f32.mrf.mxu0
      %v3487 = vadd.f32 %v2838, %v3486
      %v3488 = vpop.f32.mrf.mxu0
      %v3489 = vadd.f32 %v2840, %v3488
      %3490 = vmatmul.bf16.gmra.mxu0 %v2380
      %v3491 = vpop.f32.mrf.mxu0
      %v3492 = vadd.f32 %v2843, %v3491
      %v3493 = vpop.f32.mrf.mxu0
      %v3494 = vadd.f32 %v2845, %v3493
      %3495 = vmatmul.bf16.gmra.mxu0 %v2383
      %v3496 = vpop.f32.mrf.mxu0
      %v3497 = vadd.f32 %v2848, %v3496
      %v3498 = vpop.f32.mrf.mxu0
      %v3499 = vadd.f32 %v2850, %v3498
      %3500 = vmatmul.bf16.gmra.mxu0 %v2386
      %v3501 = vpop.f32.mrf.mxu0
      %v3502 = vadd.f32 %v2853, %v3501
      %v3503 = vpop.f32.mrf.mxu0
      %v3504 = vadd.f32 %v2855, %v3503
      %3505 = vmatmul.bf16.gmra.mxu0 %v2389
      %v3506 = vpop.f32.mrf.mxu0
      %v3507 = vadd.f32 %v2858, %v3506
      %v3508 = vpop.f32.mrf.mxu0
      %v3509 = vadd.f32 %v2860, %v3508
      %3510 = vmatmul.bf16.gmra.mxu0 %v2392
      %v3511 = vpop.f32.mrf.mxu0
      %v3512 = vadd.f32 %v2863, %v3511
      %v3513 = vpop.f32.mrf.mxu0
      %v3514 = vadd.f32 %v2865, %v3513
      %3515 = vmatmul.bf16.gmra.mxu0 %v2395
      %v3516 = vpop.f32.mrf.mxu0
      %v3517 = vadd.f32 %v2868, %v3516
      %v3518 = vpop.f32.mrf.mxu0
      %v3519 = vadd.f32 %v2870, %v3518
      %3520 = vmatmul.bf16.gmra.mxu0 %v2398
      %v3521 = vpop.f32.mrf.mxu0
      %v3522 = vadd.f32 %v2873, %v3521
      %v3523 = vpop.f32.mrf.mxu0
      %v3524 = vadd.f32 %v2875, %v3523
      %3525 = vmatmul.bf16.gmra.mxu0 %v2401
      %v3526 = vpop.f32.mrf.mxu0
      %v3527 = vadd.f32 %v2878, %v3526
      %v3528 = vpop.f32.mrf.mxu0
      %v3529 = vadd.f32 %v2880, %v3528
      %3530 = vmatmul.bf16.gmra.mxu0 %v2404
      %v3531 = vpop.f32.mrf.mxu0
      %v3532 = vadd.f32 %v2883, %v3531
      %v3533 = vpop.f32.mrf.mxu0
      %v3534 = vadd.f32 %v2885, %v3533
      %3535 = vmatmul.bf16.gmra.mxu0 %v2407
      %v3536 = vpop.f32.mrf.mxu0
      %v3537 = vadd.f32 %v2888, %v3536
      %v3538 = vpop.f32.mrf.mxu0
      %v3539 = vadd.f32 %v2890, %v3538
      %3540 = vmatmul.bf16.gmra.mxu0 %v2410
      %v3541 = vpop.f32.mrf.mxu0
      %v3542 = vadd.f32 %v2893, %v3541
      %v3543 = vpop.f32.mrf.mxu0
      %v3544 = vadd.f32 %v2895, %v3543
      %3545 = vmatmul.bf16.gmra.mxu0 %v2413
      %v3546 = vpop.f32.mrf.mxu0
      %v3547 = vadd.f32 %v2898, %v3546
      %v3548 = vpop.f32.mrf.mxu0
      %v3549 = vadd.f32 %v2900, %v3548
      %3550 = vmatmul.bf16.gmra.mxu0 %v2416
      %v3551 = vpop.f32.mrf.mxu0
      %v3552 = vadd.f32 %v2903, %v3551
      %v3553 = vpop.f32.mrf.mxu0
      %v3554 = vadd.f32 %v2905, %v3553
      %3555 = vmatmul.bf16.gmra.mxu0 %v2419
      %v3556 = vpop.f32.mrf.mxu0
      %v3557 = vadd.f32 %v2908, %v3556
      %v3558 = vpop.f32.mrf.mxu0
      %v3559 = vadd.f32 %v2910, %v3558
      %3560 = vmatmul.bf16.gmra.mxu0 %v2422
      %v3561 = vpop.f32.mrf.mxu0
      %v3562 = vadd.f32 %v2913, %v3561
      %v3563 = vpop.f32.mrf.mxu0
      %v3564 = vadd.f32 %v2915, %v3563
      %3565 = vmatmul.bf16.gmra.mxu0 %v2425
      %v3566 = vpop.f32.mrf.mxu0
      %v3567 = vadd.f32 %v2918, %v3566
      %v3568 = vpop.f32.mrf.mxu0
      %v3569 = vadd.f32 %v2920, %v3568
      %3570 = vmatmul.bf16.gmra.mxu0 %v2428
      %v3571 = vpop.f32.mrf.mxu0
      %v3572 = vadd.f32 %v2923, %v3571
      %v3573 = vpop.f32.mrf.mxu0
      %v3574 = vadd.f32 %v2925, %v3573
      %3575 = vmatmul.bf16.gmra.mxu0 %v2431
      %v3576 = vpop.f32.mrf.mxu0
      %v3577 = vadd.f32 %v2928, %v3576
      %v3578 = vpop.f32.mrf.mxu0
      %v3579 = vadd.f32 %v2930, %v3578
      %3580 = vmatmul.bf16.gmra.mxu0 %v2434
      %v3581 = vpop.f32.mrf.mxu0
      %v3582 = vadd.f32 %v2933, %v3581
      %v3583 = vpop.f32.mrf.mxu0
      %v3584 = vadd.f32 %v2935, %v3583
      %3585 = vmatmul.bf16.gmra.mxu0 %v2437
      %v3586 = vpop.f32.mrf.mxu0
      %v3587 = vadd.f32 %v2938, %v3586
      %v3588 = vpop.f32.mrf.mxu0
      %v3589 = vadd.f32 %v2940, %v3588
      %3590 = vmatmul.bf16.gmra.mxu0 %v2440
      %v3591 = vpop.f32.mrf.mxu0
      %v3592 = vadd.f32 %v2943, %v3591
      %v3593 = vpop.f32.mrf.mxu0
      %v3594 = vadd.f32 %v2945, %v3593
      %3595 = vmatmul.bf16.gmra.mxu0 %v2443
      %v3596 = vpop.f32.mrf.mxu0
      %v3597 = vadd.f32 %v2948, %v3596
      %v3598 = vpop.f32.mrf.mxu0
      %v3599 = vadd.f32 %v2950, %v3598
      %3600 = vmatmul.bf16.gmra.mxu0 %v2446
      %v3601 = vpop.f32.mrf.mxu0
      %v3602 = vadd.f32 %v2953, %v3601
      %v3603 = vpop.f32.mrf.mxu0
      %v3604 = vadd.f32 %v2955, %v3603
      %3605 = vmatmul.bf16.gmra.mxu0 %v2449
      %v3606 = vpop.f32.mrf.mxu0
      %v3607 = vadd.f32 %v2958, %v3606
      %v3608 = vpop.f32.mrf.mxu0
      %v3609 = vadd.f32 %v2960, %v3608
      %3610 = vmatmul.bf16.gmra.mxu0 %v2452
      %v3611 = vpop.f32.mrf.mxu0
      %v3612 = vadd.f32 %v2963, %v3611
      %v3613 = vpop.f32.mrf.mxu0
      %v3614 = vadd.f32 %v2965, %v3613
      %3615 = vmatmul.bf16.gmra.mxu0 %v2455
      %v3616 = vpop.f32.mrf.mxu0
      %v3617 = vadd.f32 %v2968, %v3616
      %v3618 = vpop.f32.mrf.mxu0
      %v3619 = vadd.f32 %v2970, %v3618
      %3620 = vmatmul.bf16.gmra.mxu0 %v2458
      %v3621 = vpop.f32.mrf.mxu0
      %v3622 = vadd.f32 %v2973, %v3621
      %v3623 = vpop.f32.mrf.mxu0
      %v3624 = vadd.f32 %v2975, %v3623
      %3625 = vmatmul.bf16.gmra.mxu0 %v2461
      %v3626 = vpop.f32.mrf.mxu0
      %v3627 = vadd.f32 %v2978, %v3626
      %v3628 = vpop.f32.mrf.mxu0
      %v3629 = vadd.f32 %v2980, %v3628
      %3630 = vmatmul.bf16.gmra.mxu0 %v2464
      %v3631 = vpop.f32.mrf.mxu0
      %v3632 = vadd.f32 %v2983, %v3631
      %v3633 = vpop.f32.mrf.mxu0
      %v3634 = vadd.f32 %v2985, %v3633
      %3635 = vmatmul.bf16.gmra.mxu0 %v2467
      %v3636 = vpop.f32.mrf.mxu0
      %v3637 = vadd.f32 %v2988, %v3636
      %v3638 = vpop.f32.mrf.mxu0
      %v3639 = vadd.f32 %v2990, %v3638
      %3640 = vmatmul.bf16.gmra.mxu0 %v2470
      %v3641 = vpop.f32.mrf.mxu0
      %v3642 = vadd.f32 %v2993, %v3641
      %v3643 = vpop.f32.mrf.mxu0
      %v3644 = vadd.f32 %v2995, %v3643
      %3645 = vmatmul.bf16.gmra.mxu0 %v2473
      %v3646 = vpop.f32.mrf.mxu0
      %v3647 = vadd.f32 %v2998, %v3646
      %v3648 = vpop.f32.mrf.mxu0
      %v3649 = vadd.f32 %v3000, %v3648
      %3650 = vmatmul.bf16.gmra.mxu0 %v2476
      %v3651 = vpop.f32.mrf.mxu0
      %v3652 = vadd.f32 %v3003, %v3651
      %v3653 = vpop.f32.mrf.mxu0
      %v3654 = vadd.f32 %v3005, %v3653
      %3655 = vmatmul.bf16.gmra.mxu0 %v2479
      %v3656 = vpop.f32.mrf.mxu0
      %v3657 = vadd.f32 %v3008, %v3656
      %v3658 = vpop.f32.mrf.mxu0
      %v3659 = vadd.f32 %v3010, %v3658
      %3660 = vmatmul.bf16.gmra.mxu0 %v2482
      %v3661 = vpop.f32.mrf.mxu0
      %v3662 = vadd.f32 %v3013, %v3661
      %v3663 = vpop.f32.mrf.mxu0
      %v3664 = vadd.f32 %v3015, %v3663
      %3665 = vmatmul.bf16.gmra.mxu0 %v2485
      %v3666 = vpop.f32.mrf.mxu0
      %v3667 = vadd.f32 %v3018, %v3666
      %v3668 = vpop.f32.mrf.mxu0
      %v3669 = vadd.f32 %v3020, %v3668
      %3670 = vmatmul.bf16.gmra.mxu0 %v2488
      %v3671 = vpop.f32.mrf.mxu0
      %v3672 = vadd.f32 %v3023, %v3671
      %v3673 = vpop.f32.mrf.mxu0
      %v3674 = vadd.f32 %v3025, %v3673
      %3675 = vmatmul.bf16.gmra.mxu0 %v2491
      %v3676 = vpop.f32.mrf.mxu0
      %v3677 = vadd.f32 %v3028, %v3676
      %v3678 = vpop.f32.mrf.mxu0
      %v3679 = vadd.f32 %v3030, %v3678
      %3680 = vmatmul.bf16.gmra.mxu0 %v2494
      %v3681 = vpop.f32.mrf.mxu0
      %v3682 = vadd.f32 %v3033, %v3681
      %v3683 = vpop.f32.mrf.mxu0
      %v3684 = vadd.f32 %v3035, %v3683
      %3685 = vmatmul.bf16.gmra.mxu0 %v2497
      %v3686 = vpop.f32.mrf.mxu0
      %v3687 = vadd.f32 %v3038, %v3686
      %v3688 = vpop.f32.mrf.mxu0
      %v3689 = vadd.f32 %v3040, %v3688
      %3690 = vmatmul.bf16.gmra.mxu0 %v2500
      %v3691 = vpop.f32.mrf.mxu0
      %v3692 = vadd.f32 %v3043, %v3691
      %v3693 = vpop.f32.mrf.mxu0
      %v3694 = vadd.f32 %v3045, %v3693
      %3695 = vmatmul.bf16.gmra.mxu0 %v2503
      %v3696 = vpop.f32.mrf.mxu0
      %v3697 = vadd.f32 %v3048, %v3696
      %v3698 = vpop.f32.mrf.mxu0
      %v3699 = vadd.f32 %v3050, %v3698
      %3700 = vmatmul.bf16.gmra.mxu0 %v2506
      %v3701 = vpop.f32.mrf.mxu0
      %v3702 = vadd.f32 %v3053, %v3701
      %v3703 = vpop.f32.mrf.mxu0
      %v3704 = vadd.f32 %v3055, %v3703
      %3705 = vmatmul.bf16.gmra.mxu0 %v2509
      %v3706 = vpop.f32.mrf.mxu0
      %v3707 = vadd.f32 %v3058, %v3706
      %v3708 = vpop.f32.mrf.mxu0
      %v3709 = vadd.f32 %v3060, %v3708
      %3710 = vmatmul.bf16.gmra.mxu0 %v2512
      %v3711 = vpop.f32.mrf.mxu0
      %v3712 = vadd.f32 %v3063, %v3711
      %v3713 = vpop.f32.mrf.mxu0
      %v3714 = vadd.f32 %v3065, %v3713
      %3715 = vmatmul.bf16.gmra.mxu0 %v2515
      %v3716 = vpop.f32.mrf.mxu0
      %v3717 = vadd.f32 %v3068, %v3716
      %v3718 = vpop.f32.mrf.mxu0
      %v3719 = vadd.f32 %v3070, %v3718
      %3720 = vmatmul.bf16.gmra.mxu0 %v2518
      %v3721 = vpop.f32.mrf.mxu0
      %v3722 = vadd.f32 %v3073, %v3721
      %v3723 = vpop.f32.mrf.mxu0
      %v3724 = vadd.f32 %v3075, %v3723
      %3725 = vmatmul.bf16.gmra.mxu0 %v2521
      %v3726 = vpop.f32.mrf.mxu0
      %v3727 = vadd.f32 %v3078, %v3726
      %v3728 = vpop.f32.mrf.mxu0
      %v3729 = vadd.f32 %v3080, %v3728
      %3730 = vmatmul.bf16.gmra.mxu0 %v2524
      %v3731 = vpop.f32.mrf.mxu0
      %v3732 = vadd.f32 %v3083, %v3731
      %v3733 = vpop.f32.mrf.mxu0
      %v3734 = vadd.f32 %v3085, %v3733
      %3735 = vmatmul.bf16.gmra.mxu0 %v2527
      %v3736 = vpop.f32.mrf.mxu0
      %v3737 = vadd.f32 %v3088, %v3736
      %v3738 = vpop.f32.mrf.mxu0
      %v3739 = vadd.f32 %v3090, %v3738
      %3740 = vmatmul.bf16.gmra.mxu0 %v2530
      %v3741 = vpop.f32.mrf.mxu0
      %v3742 = vadd.f32 %v3093, %v3741
      %v3743 = vpop.f32.mrf.mxu0
      %v3744 = vadd.f32 %v3095, %v3743
      %3745 = vmatmul.bf16.gmra.mxu0 %v2533
      %v3746 = vpop.f32.mrf.mxu0
      %v3747 = vadd.f32 %v3098, %v3746
      %v3748 = vpop.f32.mrf.mxu0
      %v3749 = vadd.f32 %v3100, %v3748
      %3750 = vmatmul.bf16.gmra.mxu0 %v2536
      %v3751 = vpop.f32.mrf.mxu0
      %v3752 = vadd.f32 %v3103, %v3751
      %v3753 = vpop.f32.mrf.mxu0
      %v3754 = vadd.f32 %v3105, %v3753
      %3755 = vmatmul.bf16.gmra.mxu0 %v2539
      %v3756 = vpop.f32.mrf.mxu0
      %v3757 = vadd.f32 %v3108, %v3756
      %v3758 = vpop.f32.mrf.mxu0
      %v3759 = vadd.f32 %v3110, %v3758
      %3760 = vmatmul.bf16.gmra.mxu0 %v2542
      %v3761 = vpop.f32.mrf.mxu0
      %v3762 = vadd.f32 %v3113, %v3761
      %v3763 = vpop.f32.mrf.mxu0
      %v3764 = vadd.f32 %v3115, %v3763
      %3765 = vmatmul.bf16.gmra.mxu0 %v2545
      %v3766 = vpop.f32.mrf.mxu0
      %v3767 = vadd.f32 %v3118, %v3766
      %v3768 = vpop.f32.mrf.mxu0
      %v3769 = vadd.f32 %v3120, %v3768
      %3770 = vmatmul.bf16.gmra.mxu0 %v2548
      %v3771 = vpop.f32.mrf.mxu0
      %v3772 = vadd.f32 %v3123, %v3771
      %v3773 = vpop.f32.mrf.mxu0
      %v3774 = vadd.f32 %v3125, %v3773
      %3775 = vmatmul.bf16.gmra.mxu0 %v2551
      %v3776 = vpop.f32.mrf.mxu0
      %v3777 = vadd.f32 %v3128, %v3776
      %v3778 = vpop.f32.mrf.mxu0
      %v3779 = vadd.f32 %v3130, %v3778
      %3780 = vmatmul.bf16.gmra.mxu0 %v2554
      %v3781 = vpop.f32.mrf.mxu0
      %v3782 = vadd.f32 %v3133, %v3781
      %v3783 = vpop.f32.mrf.mxu0
      %v3784 = vadd.f32 %v3135, %v3783
      %3785 = vmatmul.bf16.gmra.mxu0 %v2557
      %v3786 = vpop.f32.mrf.mxu0
      %v3787 = vadd.f32 %v3138, %v3786
      %v3788 = vpop.f32.mrf.mxu0
      %v3789 = vadd.f32 %v3140, %v3788
      %3790 = vmatmul.bf16.gmra.mxu0 %v2560
      %v3791 = vpop.f32.mrf.mxu0
      %v3792 = vadd.f32 %v3143, %v3791
      %v3793 = vpop.f32.mrf.mxu0
      %v3794 = vadd.f32 %v3145, %v3793
      %3795 = vmatmul.bf16.gmra.mxu0 %v2563
      %v3796 = vpop.f32.mrf.mxu0
      %v3797 = vadd.f32 %v3148, %v3796
      %v3798 = vpop.f32.mrf.mxu0
      %v3799 = vadd.f32 %v3150, %v3798
      %3800 = vmatmul.bf16.gmra.mxu0 %v2566
      %v3801 = vpop.f32.mrf.mxu0
      %v3802 = vadd.f32 %v3153, %v3801
      %v3803 = vpop.f32.mrf.mxu0
      %v3804 = vadd.f32 %v3155, %v3803
      %3805 = vmatmul.bf16.gmra.mxu0 %v2569
      %v3806 = vpop.f32.mrf.mxu0
      %v3807 = vadd.f32 %v3158, %v3806
      %v3808 = vpop.f32.mrf.mxu0
      %v3809 = vadd.f32 %v3160, %v3808
      %3810 = vmatmul.bf16.gmra.mxu0 %v2572
      %v3811 = vpop.f32.mrf.mxu0
      %v3812 = vadd.f32 %v3163, %v3811
      %v3813 = vpop.f32.mrf.mxu0
      %v3814 = vadd.f32 %v3165, %v3813
      %3815 = vmatmul.bf16.gmra.mxu0 %v2575
      %v3816 = vpop.f32.mrf.mxu0
      %v3817 = vadd.f32 %v3168, %v3816
      %v3818 = vpop.f32.mrf.mxu0
      %v3819 = vadd.f32 %v3170, %v3818
      %3820 = vmatmul.bf16.gmra.mxu0 %v2578
      %v3821 = vpop.f32.mrf.mxu0
      %v3822 = vadd.f32 %v3173, %v3821
      %v3823 = vpop.f32.mrf.mxu0
      %v3824 = vadd.f32 %v3175, %v3823
      %3825 = vmatmul.bf16.gmra.mxu0 %v2581
      %v3826 = vpop.f32.mrf.mxu0
      %v3827 = vadd.f32 %v3178, %v3826
      %v3828 = vpop.f32.mrf.mxu0
      %v3829 = vadd.f32 %v3180, %v3828
      %3830 = vmatmul.bf16.gmra.mxu0 %v2584
      %v3831 = vpop.f32.mrf.mxu0
      %v3832 = vadd.f32 %v3183, %v3831
      %v3833 = vpop.f32.mrf.mxu0
      %v3834 = vadd.f32 %v3185, %v3833
      %3835 = vmatmul.bf16.gmra.mxu0 %v2587
      %v3836 = vpop.f32.mrf.mxu0
      %v3837 = vadd.f32 %v3188, %v3836
      %v3838 = vpop.f32.mrf.mxu0
      %v3839 = vadd.f32 %v3190, %v3838
      %3840 = vmatmul.bf16.gmra.mxu0 %v2590
      %v3841 = vpop.f32.mrf.mxu0
      %v3842 = vadd.f32 %v3193, %v3841
      %v3843 = vpop.f32.mrf.mxu0
      %v3844 = vadd.f32 %v3195, %v3843
      %3845 = vmatmul.bf16.gmra.mxu0 %v2593
      %v3846 = vpop.f32.mrf.mxu0
      %v3847 = vadd.f32 %v3198, %v3846
      %v3848 = vpop.f32.mrf.mxu0
      %v3849 = vadd.f32 %v3200, %v3848
      %3850 = vmatmul.bf16.gmra.mxu0 %v2596
      %v3851 = vpop.f32.mrf.mxu0
      %v3852 = vadd.f32 %v3203, %v3851
      %v3853 = vpop.f32.mrf.mxu0
      %v3854 = vadd.f32 %v3205, %v3853
      %3855 = vmatmul.bf16.gmra.mxu0 %v2599
      %v3856 = vpop.f32.mrf.mxu0
      %v3857 = vadd.f32 %v3208, %v3856
      %v3858 = vpop.f32.mrf.mxu0
      %v3859 = vadd.f32 %v3210, %v3858
      %3860 = vmatmul.bf16.gmra.mxu0 %v2602
      %v3861 = vpop.f32.mrf.mxu0
      %v3862 = vadd.f32 %v3213, %v3861
      %v3863 = vpop.f32.mrf.mxu0
      %v3864 = vadd.f32 %v3215, %v3863
      %3865 = vmatmul.bf16.gmra.mxu0 %v2605
      %v3866 = vpop.f32.mrf.mxu0
      %v3867 = vadd.f32 %v3218, %v3866
      %v3868 = vpop.f32.mrf.mxu0
      %v3869 = vadd.f32 %v3220, %v3868
      %3870 = vmatmul.bf16.gmra.mxu0 %v2608
      %v3871 = vpop.f32.mrf.mxu0
      %v3872 = vadd.f32 %v3223, %v3871
      %v3873 = vpop.f32.mrf.mxu0
      %v3874 = vadd.f32 %v3225, %v3873
      %3875 = vmatmul.bf16.gmra.mxu0 %v2611
      %v3876 = vpop.f32.mrf.mxu0
      %v3877 = vadd.f32 %v3228, %v3876
      %v3878 = vpop.f32.mrf.mxu0
      %v3879 = vadd.f32 %v3230, %v3878
      %3880 = vmatmul.bf16.gmra.mxu0 %v2614
      %v3881 = vpop.f32.mrf.mxu0
      %v3882 = vadd.f32 %v3233, %v3881
      %v3883 = vpop.f32.mrf.mxu0
      %v3884 = vadd.f32 %v3235, %v3883
      %3885 = vmatmul.bf16.gmra.mxu0 %v2617
      %v3886 = vpop.f32.mrf.mxu0
      %v3887 = vadd.f32 %v3238, %v3886
      %v3888 = vpop.f32.mrf.mxu0
      %v3889 = vadd.f32 %v3240, %v3888
      %3890 = vmatmul.bf16.gmra.mxu0 %v2620
      %v3891 = vpop.f32.mrf.mxu0
      %v3892 = vadd.f32 %v3243, %v3891
      %v3893 = vpop.f32.mrf.mxu0
      %v3894 = vadd.f32 %v3245, %v3893
      %3895 = vmatmul.bf16.gmra.mxu0 %v2623
      %v3896 = vpop.f32.mrf.mxu0
      %v3897 = vadd.f32 %v3248, %v3896
      %v3898 = vpop.f32.mrf.mxu0
      %v3899 = vadd.f32 %v3250, %v3898
      %3900 = vmatmul.bf16.gmra.mxu0 %v2626
      %v3901 = vpop.f32.mrf.mxu0
      %v3902 = vadd.f32 %v3253, %v3901
      %v3903 = vpop.f32.mrf.mxu0
      %v3904 = vadd.f32 %v3255, %v3903
      %3905 = vmatmul.bf16.gmra.mxu0 %v2629
      %v3906 = vpop.f32.mrf.mxu0
      %v3907 = vadd.f32 %v3258, %v3906
      %v3908 = vpop.f32.mrf.mxu0
      %v3909 = vadd.f32 %v3260, %v3908
      %3910 = vmatmul.bf16.gmra.mxu0 %v2632
      %v3911 = vpop.f32.mrf.mxu0
      %v3912 = vadd.f32 %v3263, %v3911
      %v3913 = vpop.f32.mrf.mxu0
      %v3914 = vadd.f32 %v3265, %v3913
      %3915 = vmatmul.bf16.gmra.mxu0 %v2635
      %v3916 = vpop.f32.mrf.mxu0
      %v3917 = vadd.f32 %v3268, %v3916
      %v3918 = vpop.f32.mrf.mxu0
      %v3919 = vadd.f32 %v3270, %v3918
      %3920 = vmatmul.bf16.gmra.mxu0 %v2638
      %v3921 = vpop.f32.mrf.mxu0
      %v3922 = vadd.f32 %v3273, %v3921
      %v3923 = vpop.f32.mrf.mxu0
      %v3924 = vadd.f32 %v3275, %v3923
      %3925 = vmatmul.bf16.gmra.mxu0 %v2641
      %v3926 = vpop.f32.mrf.mxu0
      %v3927 = vadd.f32 %v3278, %v3926
      %v3928 = vpop.f32.mrf.mxu0
      %v3929 = vadd.f32 %v3280, %v3928
      %3930 = vmatmul.bf16.gmra.mxu0 %v2644
      %v3931 = vpop.f32.mrf.mxu0
      %v3932 = vadd.f32 %v3283, %v3931
      %v3933 = vpop.f32.mrf.mxu0
      %v3934 = vadd.f32 %v3285, %v3933
      %3935 = vmatmul.bf16.gmra.mxu0 %v2647
      %v3936 = vpop.f32.mrf.mxu0
      %v3937 = vadd.f32 %v3288, %v3936
      %v3938 = vpop.f32.mrf.mxu0
      %v3939 = vadd.f32 %v3290, %v3938
      %3940 = vmatmul.bf16.gmra.mxu0 %v2650
      %v3941 = vpop.f32.mrf.mxu0
      %v3942 = vadd.f32 %v3293, %v3941
      %v3943 = vpop.f32.mrf.mxu0
      %v3944 = vadd.f32 %v3295, %v3943
      %3945 = vmatmul.bf16.gmra.mxu0 %v2653
      %v3946 = vpop.f32.mrf.mxu0
      %v3947 = vadd.f32 %v3298, %v3946
      %v3948 = vpop.f32.mrf.mxu0
      %v3949 = vadd.f32 %v3300, %v3948
      %3950 = vmatmul.bf16.gmra.mxu0 %v2656
      %v3951 = vpop.f32.mrf.mxu0
      %v3952 = vadd.f32 %v3303, %v3951
      %v3953 = vpop.f32.mrf.mxu0
      %v3954 = vadd.f32 %v3305, %v3953
      %3955 = vdwg.mxu0
      %v3956 = vadd.f32 %v529, %v3317
      %v3957 = vadd.f32 %v530, %v3319
      %v3958 = vadd.f32 %v531, %v3322
      %v3959 = vadd.f32 %v532, %v3324
      %v3960 = vadd.f32 %v533, %v3327
      %v3961 = vadd.f32 %v534, %v3329
      %v3962 = vadd.f32 %v535, %v3332
      %v3963 = vadd.f32 %v536, %v3334
      %v3964 = vadd.f32 %v537, %v3337
      %v3965 = vadd.f32 %v538, %v3339
      %v3966 = vadd.f32 %v539, %v3342
      %v3967 = vadd.f32 %v540, %v3344
      %v3968 = vadd.f32 %v541, %v3347
      %v3969 = vadd.f32 %v542, %v3349
      %v3970 = vadd.f32 %v543, %v3352
      %v3971 = vadd.f32 %v544, %v3354
      %v3972 = vadd.f32 %v545, %v3357
      %v3973 = vadd.f32 %v546, %v3359
      %v3974 = vadd.f32 %v547, %v3362
      %v3975 = vadd.f32 %v548, %v3364
      %v3976 = vadd.f32 %v549, %v3367
      %v3977 = vadd.f32 %v550, %v3369
      %v3978 = vadd.f32 %v551, %v3372
      %v3979 = vadd.f32 %v552, %v3374
      %v3980 = vadd.f32 %v553, %v3377
      %v3981 = vadd.f32 %v554, %v3379
      %v3982 = vadd.f32 %v555, %v3382
      %v3983 = vadd.f32 %v556, %v3384
      %v3984 = vadd.f32 %v557, %v3387
      %v3985 = vadd.f32 %v558, %v3389
      %v3986 = vadd.f32 %v559, %v3392
      %v3987 = vadd.f32 %v560, %v3394
      %v3988 = vadd.f32 %v561, %v3397
      %v3989 = vadd.f32 %v562, %v3399
      %v3990 = vadd.f32 %v563, %v3402
      %v3991 = vadd.f32 %v564, %v3404
      %v3992 = vadd.f32 %v565, %v3407
      %v3993 = vadd.f32 %v566, %v3409
      %v3994 = vadd.f32 %v567, %v3412
      %v3995 = vadd.f32 %v568, %v3414
      %v3996 = vadd.f32 %v569, %v3417
      %v3997 = vadd.f32 %v570, %v3419
      %v3998 = vadd.f32 %v571, %v3422
      %v3999 = vadd.f32 %v572, %v3424
      %v4000 = vadd.f32 %v573, %v3427
      %v4001 = vadd.f32 %v574, %v3429
      %v4002 = vadd.f32 %v575, %v3432
      %v4003 = vadd.f32 %v576, %v3434
      %v4004 = vadd.f32 %v577, %v3437
      %v4005 = vadd.f32 %v578, %v3439
      %v4006 = vadd.f32 %v579, %v3442
      %v4007 = vadd.f32 %v580, %v3444
      %v4008 = vadd.f32 %v581, %v3447
      %v4009 = vadd.f32 %v582, %v3449
      %v4010 = vadd.f32 %v583, %v3452
      %v4011 = vadd.f32 %v584, %v3454
      %v4012 = vadd.f32 %v585, %v3457
      %v4013 = vadd.f32 %v586, %v3459
      %v4014 = vadd.f32 %v587, %v3462
      %v4015 = vadd.f32 %v588, %v3464
      %v4016 = vadd.f32 %v589, %v3467
      %v4017 = vadd.f32 %v590, %v3469
      %v4018 = vadd.f32 %v591, %v3472
      %v4019 = vadd.f32 %v592, %v3474
      %v4020 = vadd.f32 %v593, %v3477
      %v4021 = vadd.f32 %v594, %v3479
      %v4022 = vadd.f32 %v595, %v3482
      %v4023 = vadd.f32 %v596, %v3484
      %v4024 = vadd.f32 %v597, %v3487
      %v4025 = vadd.f32 %v598, %v3489
      %v4026 = vadd.f32 %v599, %v3492
      %v4027 = vadd.f32 %v600, %v3494
      %v4028 = vadd.f32 %v601, %v3497
      %v4029 = vadd.f32 %v602, %v3499
      %v4030 = vadd.f32 %v603, %v3502
      %v4031 = vadd.f32 %v604, %v3504
      %v4032 = vadd.f32 %v605, %v3507
      %v4033 = vadd.f32 %v606, %v3509
      %v4034 = vadd.f32 %v607, %v3512
      %v4035 = vadd.f32 %v608, %v3514
      %v4036 = vadd.f32 %v609, %v3517
      %v4037 = vadd.f32 %v610, %v3519
      %v4038 = vadd.f32 %v611, %v3522
      %v4039 = vadd.f32 %v612, %v3524
      %v4040 = vadd.f32 %v613, %v3527
      %v4041 = vadd.f32 %v614, %v3529
      %v4042 = vadd.f32 %v615, %v3532
      %v4043 = vadd.f32 %v616, %v3534
      %v4044 = vadd.f32 %v617, %v3537
      %v4045 = vadd.f32 %v618, %v3539
      %v4046 = vadd.f32 %v619, %v3542
      %v4047 = vadd.f32 %v620, %v3544
      %v4048 = vadd.f32 %v621, %v3547
      %v4049 = vadd.f32 %v622, %v3549
      %v4050 = vadd.f32 %v623, %v3552
      %v4051 = vadd.f32 %v624, %v3554
      %v4052 = vadd.f32 %v625, %v3557
      %v4053 = vadd.f32 %v626, %v3559
      %v4054 = vadd.f32 %v627, %v3562
      %v4055 = vadd.f32 %v628, %v3564
      %v4056 = vadd.f32 %v629, %v3567
      %v4057 = vadd.f32 %v630, %v3569
      %v4058 = vadd.f32 %v631, %v3572
      %v4059 = vadd.f32 %v632, %v3574
      %v4060 = vadd.f32 %v633, %v3577
      %v4061 = vadd.f32 %v634, %v3579
      %v4062 = vadd.f32 %v635, %v3582
      %v4063 = vadd.f32 %v636, %v3584
      %v4064 = vadd.f32 %v637, %v3587
      %v4065 = vadd.f32 %v638, %v3589
      %v4066 = vadd.f32 %v639, %v3592
      %v4067 = vadd.f32 %v640, %v3594
      %v4068 = vadd.f32 %v641, %v3597
      %v4069 = vadd.f32 %v642, %v3599
      %v4070 = vadd.f32 %v643, %v3602
      %v4071 = vadd.f32 %v644, %v3604
      %v4072 = vadd.f32 %v645, %v3607
      %v4073 = vadd.f32 %v646, %v3609
      %v4074 = vadd.f32 %v647, %v3612
      %v4075 = vadd.f32 %v648, %v3614
      %v4076 = vadd.f32 %v649, %v3617
      %v4077 = vadd.f32 %v650, %v3619
      %v4078 = vadd.f32 %v651, %v3622
      %v4079 = vadd.f32 %v652, %v3624
      %v4080 = vadd.f32 %v653, %v3627
      %v4081 = vadd.f32 %v654, %v3629
      %v4082 = vadd.f32 %v655, %v3632
      %v4083 = vadd.f32 %v656, %v3634
      %v4084 = vadd.f32 %v657, %v3637
      %v4085 = vadd.f32 %v658, %v3639
      %v4086 = vadd.f32 %v659, %v3642
      %v4087 = vadd.f32 %v660, %v3644
      %v4088 = vadd.f32 %v661, %v3647
      %v4089 = vadd.f32 %v662, %v3649
      %v4090 = vadd.f32 %v663, %v3652
      %v4091 = vadd.f32 %v664, %v3654
      %v4092 = vadd.f32 %v665, %v3657
      %v4093 = vadd.f32 %v666, %v3659
      %v4094 = vadd.f32 %v667, %v3662
      %v4095 = vadd.f32 %v668, %v3664
      %v4096 = vadd.f32 %v669, %v3667
      %v4097 = vadd.f32 %v670, %v3669
      %v4098 = vadd.f32 %v671, %v3672
      %v4099 = vadd.f32 %v672, %v3674
      %v4100 = vadd.f32 %v673, %v3677
      %v4101 = vadd.f32 %v674, %v3679
      %v4102 = vadd.f32 %v675, %v3682
      %v4103 = vadd.f32 %v676, %v3684
      %v4104 = vadd.f32 %v677, %v3687
      %v4105 = vadd.f32 %v678, %v3689
      %v4106 = vadd.f32 %v679, %v3692
      %v4107 = vadd.f32 %v680, %v3694
      %v4108 = vadd.f32 %v681, %v3697
      %v4109 = vadd.f32 %v682, %v3699
      %v4110 = vadd.f32 %v683, %v3702
      %v4111 = vadd.f32 %v684, %v3704
      %v4112 = vadd.f32 %v685, %v3707
      %v4113 = vadd.f32 %v686, %v3709
      %v4114 = vadd.f32 %v687, %v3712
      %v4115 = vadd.f32 %v688, %v3714
      %v4116 = vadd.f32 %v689, %v3717
      %v4117 = vadd.f32 %v690, %v3719
      %v4118 = vadd.f32 %v691, %v3722
      %v4119 = vadd.f32 %v692, %v3724
      %v4120 = vadd.f32 %v693, %v3727
      %v4121 = vadd.f32 %v694, %v3729
      %v4122 = vadd.f32 %v695, %v3732
      %v4123 = vadd.f32 %v696, %v3734
      %v4124 = vadd.f32 %v697, %v3737
      %v4125 = vadd.f32 %v698, %v3739
      %v4126 = vadd.f32 %v699, %v3742
      %v4127 = vadd.f32 %v700, %v3744
      %v4128 = vadd.f32 %v701, %v3747
      %v4129 = vadd.f32 %v702, %v3749
      %v4130 = vadd.f32 %v703, %v3752
      %v4131 = vadd.f32 %v704, %v3754
      %v4132 = vadd.f32 %v705, %v3757
      %v4133 = vadd.f32 %v706, %v3759
      %v4134 = vadd.f32 %v707, %v3762
      %v4135 = vadd.f32 %v708, %v3764
      %v4136 = vadd.f32 %v709, %v3767
      %v4137 = vadd.f32 %v710, %v3769
      %v4138 = vadd.f32 %v711, %v3772
      %v4139 = vadd.f32 %v712, %v3774
      %v4140 = vadd.f32 %v713, %v3777
      %v4141 = vadd.f32 %v714, %v3779
      %v4142 = vadd.f32 %v715, %v3782
      %v4143 = vadd.f32 %v716, %v3784
      %v4144 = vadd.f32 %v717, %v3787
      %v4145 = vadd.f32 %v718, %v3789
      %v4146 = vadd.f32 %v719, %v3792
      %v4147 = vadd.f32 %v720, %v3794
      %v4148 = vadd.f32 %v721, %v3797
      %v4149 = vadd.f32 %v722, %v3799
      %v4150 = vadd.f32 %v723, %v3802
      %v4151 = vadd.f32 %v724, %v3804
      %v4152 = vadd.f32 %v725, %v3807
      %v4153 = vadd.f32 %v726, %v3809
      %v4154 = vadd.f32 %v727, %v3812
      %v4155 = vadd.f32 %v728, %v3814
      %v4156 = vadd.f32 %v729, %v3817
      %v4157 = vadd.f32 %v730, %v3819
      %v4158 = vadd.f32 %v731, %v3822
      %v4159 = vadd.f32 %v732, %v3824
      %v4160 = vadd.f32 %v733, %v3827
      %v4161 = vadd.f32 %v734, %v3829
      %v4162 = vadd.f32 %v735, %v3832
      %v4163 = vadd.f32 %v736, %v3834
      %v4164 = vadd.f32 %v737, %v3837
      %v4165 = vadd.f32 %v738, %v3839
      %v4166 = vadd.f32 %v739, %v3842
      %v4167 = vadd.f32 %v740, %v3844
      %v4168 = vadd.f32 %v741, %v3847
      %v4169 = vadd.f32 %v742, %v3849
      %v4170 = vadd.f32 %v743, %v3852
      %v4171 = vadd.f32 %v744, %v3854
      %v4172 = vadd.f32 %v745, %v3857
      %v4173 = vadd.f32 %v746, %v3859
      %v4174 = vadd.f32 %v747, %v3862
      %v4175 = vadd.f32 %v748, %v3864
      %v4176 = vadd.f32 %v749, %v3867
      %v4177 = vadd.f32 %v750, %v3869
      %v4178 = vadd.f32 %v751, %v3872
      %v4179 = vadd.f32 %v752, %v3874
      %v4180 = vadd.f32 %v753, %v3877
      %v4181 = vadd.f32 %v754, %v3879
      %v4182 = vadd.f32 %v755, %v3882
      %v4183 = vadd.f32 %v756, %v3884
      %v4184 = vadd.f32 %v757, %v3887
      %v4185 = vadd.f32 %v758, %v3889
      %v4186 = vadd.f32 %v759, %v3892
      %v4187 = vadd.f32 %v760, %v3894
      %v4188 = vadd.f32 %v761, %v3897
      %v4189 = vadd.f32 %v762, %v3899
      %v4190 = vadd.f32 %v763, %v3902
      %v4191 = vadd.f32 %v764, %v3904
      %v4192 = vadd.f32 %v765, %v3907
      %v4193 = vadd.f32 %v766, %v3909
      %v4194 = vadd.f32 %v767, %v3912
      %v4195 = vadd.f32 %v768, %v3914
      %v4196 = vadd.f32 %v769, %v3917
      %v4197 = vadd.f32 %v770, %v3919
      %v4198 = vadd.f32 %v771, %v3922
      %v4199 = vadd.f32 %v772, %v3924
      %v4200 = vadd.f32 %v773, %v3927
      %v4201 = vadd.f32 %v774, %v3929
      %v4202 = vadd.f32 %v775, %v3932
      %v4203 = vadd.f32 %v776, %v3934
      %v4204 = vadd.f32 %v777, %v3937
      %v4205 = vadd.f32 %v778, %v3939
      %v4206 = vadd.f32 %v779, %v3942
      %v4207 = vadd.f32 %v780, %v3944
      %v4208 = vadd.f32 %v781, %v3947
      %v4209 = vadd.f32 %v782, %v3949
      %v4210 = vadd.f32 %v783, %v3952
      %v4211 = vadd.f32 %v784, %v3954
      %vm4212 = vcmask 523264
      %4213 = vst.msk [vmem:[#allocation2] sm:$0xff] %vm4212, %v3956
      %4214 = vst.msk [vmem:[#allocation2 + $0x8] sm:$0xff] %vm4212, %v3957
      %4215 = vst.msk [vmem:[#allocation2 + $0x10] sm:$0xff] %vm4212, %v3958
      %4216 = vst.msk [vmem:[#allocation2 + $0x18] sm:$0xff] %vm4212, %v3959
      %4217 = vst.msk [vmem:[#allocation2 + $0x20] sm:$0xff] %vm4212, %v3960
      %4218 = vst.msk [vmem:[#allocation2 + $0x28] sm:$0xff] %vm4212, %v3961
      %4219 = vst.msk [vmem:[#allocation2 + $0x30] sm:$0xff] %vm4212, %v3962
      %4220 = vst.msk [vmem:[#allocation2 + $0x38] sm:$0xff] %vm4212, %v3963
      %4221 = vst.msk [vmem:[#allocation2 + $0x40] sm:$0xff] %vm4212, %v3964
      %4222 = vst.msk [vmem:[#allocation2 + $0x48] sm:$0xff] %vm4212, %v3965
      %4223 = vst.msk [vmem:[#allocation2 + $0x50] sm:$0xff] %vm4212, %v3966
      %4224 = vst.msk [vmem:[#allocation2 + $0x58] sm:$0xff] %vm4212, %v3967
      %4225 = vst.msk [vmem:[#allocation2 + $0x60] sm:$0xff] %vm4212, %v3968
      %4226 = vst.msk [vmem:[#allocation2 + $0x68] sm:$0xff] %vm4212, %v3969
      %4227 = vst.msk [vmem:[#allocation2 + $0x70] sm:$0xff] %vm4212, %v3970
      %4228 = vst.msk [vmem:[#allocation2 + $0x78] sm:$0xff] %vm4212, %v3971
      %4229 = vst.msk [vmem:[#allocation2 + $0x80] sm:$0xff] %vm4212, %v3972
      %4230 = vst.msk [vmem:[#allocation2 + $0x88] sm:$0xff] %vm4212, %v3973
      %4231 = vst.msk [vmem:[#allocation2 + $0x90] sm:$0xff] %vm4212, %v3974
      %4232 = vst.msk [vmem:[#allocation2 + $0x98] sm:$0xff] %vm4212, %v3975
      %4233 = vst.msk [vmem:[#allocation2 + $0xa0] sm:$0xff] %vm4212, %v3976
      %4234 = vst.msk [vmem:[#allocation2 + $0xa8] sm:$0xff] %vm4212, %v3977
      %4235 = vst.msk [vmem:[#allocation2 + $0xb0] sm:$0xff] %vm4212, %v3978
      %4236 = vst.msk [vmem:[#allocation2 + $0xb8] sm:$0xff] %vm4212, %v3979
      %4237 = vst.msk [vmem:[#allocation2 + $0xc0] sm:$0xff] %vm4212, %v3980
      %4238 = vst.msk [vmem:[#allocation2 + $0xc8] sm:$0xff] %vm4212, %v3981
      %4239 = vst.msk [vmem:[#allocation2 + $0xd0] sm:$0xff] %vm4212, %v3982
      %4240 = vst.msk [vmem:[#allocation2 + $0xd8] sm:$0xff] %vm4212, %v3983
      %4241 = vst.msk [vmem:[#allocation2 + $0xe0] sm:$0xff] %vm4212, %v3984
      %4242 = vst.msk [vmem:[#allocation2 + $0xe8] sm:$0xff] %vm4212, %v3985
      %4243 = vst.msk [vmem:[#allocation2 + $0xf0] sm:$0xff] %vm4212, %v3986
      %4244 = vst.msk [vmem:[#allocation2 + $0xf8] sm:$0xff] %vm4212, %v3987
      %4245 = vst.msk [vmem:[#allocation2 + $0x100] sm:$0xff] %vm4212, %v3988
      %4246 = vst.msk [vmem:[#allocation2 + $0x108] sm:$0xff] %vm4212, %v3989
      %4247 = vst.msk [vmem:[#allocation2 + $0x110] sm:$0xff] %vm4212, %v3990
      %4248 = vst.msk [vmem:[#allocation2 + $0x118] sm:$0xff] %vm4212, %v3991
      %4249 = vst.msk [vmem:[#allocation2 + $0x120] sm:$0xff] %vm4212, %v3992
      %4250 = vst.msk [vmem:[#allocation2 + $0x128] sm:$0xff] %vm4212, %v3993
      %4251 = vst.msk [vmem:[#allocation2 + $0x130] sm:$0xff] %vm4212, %v3994
      %4252 = vst.msk [vmem:[#allocation2 + $0x138] sm:$0xff] %vm4212, %v3995
      %4253 = vst.msk [vmem:[#allocation2 + $0x140] sm:$0xff] %vm4212, %v3996
      %4254 = vst.msk [vmem:[#allocation2 + $0x148] sm:$0xff] %vm4212, %v3997
      %4255 = vst.msk [vmem:[#allocation2 + $0x150] sm:$0xff] %vm4212, %v3998
      %4256 = vst.msk [vmem:[#allocation2 + $0x158] sm:$0xff] %vm4212, %v3999
      %4257 = vst.msk [vmem:[#allocation2 + $0x160] sm:$0xff] %vm4212, %v4000
      %4258 = vst.msk [vmem:[#allocation2 + $0x168] sm:$0xff] %vm4212, %v4001
      %4259 = vst.msk [vmem:[#allocation2 + $0x170] sm:$0xff] %vm4212, %v4002
      %4260 = vst.msk [vmem:[#allocation2 + $0x178] sm:$0xff] %vm4212, %v4003
      %4261 = vst.msk [vmem:[#allocation2 + $0x180] sm:$0xff] %vm4212, %v4004
      %4262 = vst.msk [vmem:[#allocation2 + $0x188] sm:$0xff] %vm4212, %v4005
      %4263 = vst.msk [vmem:[#allocation2 + $0x190] sm:$0xff] %vm4212, %v4006
      %4264 = vst.msk [vmem:[#allocation2 + $0x198] sm:$0xff] %vm4212, %v4007
      %4265 = vst.msk [vmem:[#allocation2 + $0x1a0] sm:$0xff] %vm4212, %v4008
      %4266 = vst.msk [vmem:[#allocation2 + $0x1a8] sm:$0xff] %vm4212, %v4009
      %4267 = vst.msk [vmem:[#allocation2 + $0x1b0] sm:$0xff] %vm4212, %v4010
      %4268 = vst.msk [vmem:[#allocation2 + $0x1b8] sm:$0xff] %vm4212, %v4011
      %4269 = vst.msk [vmem:[#allocation2 + $0x1c0] sm:$0xff] %vm4212, %v4012
      %4270 = vst.msk [vmem:[#allocation2 + $0x1c8] sm:$0xff] %vm4212, %v4013
      %4271 = vst.msk [vmem:[#allocation2 + $0x1d0] sm:$0xff] %vm4212, %v4014
      %4272 = vst.msk [vmem:[#allocation2 + $0x1d8] sm:$0xff] %vm4212, %v4015
      %4273 = vst.msk [vmem:[#allocation2 + $0x1e0] sm:$0xff] %vm4212, %v4016
      %4274 = vst.msk [vmem:[#allocation2 + $0x1e8] sm:$0xff] %vm4212, %v4017
      %4275 = vst.msk [vmem:[#allocation2 + $0x1f0] sm:$0xff] %vm4212, %v4018
      %4276 = vst.msk [vmem:[#allocation2 + $0x1f8] sm:$0xff] %vm4212, %v4019
      %4277 = vst.msk [vmem:[#allocation2 + $0x200] sm:$0xff] %vm4212, %v4020
      %4278 = vst.msk [vmem:[#allocation2 + $0x208] sm:$0xff] %vm4212, %v4021
      %4279 = vst.msk [vmem:[#allocation2 + $0x210] sm:$0xff] %vm4212, %v4022
      %4280 = vst.msk [vmem:[#allocation2 + $0x218] sm:$0xff] %vm4212, %v4023
      %4281 = vst.msk [vmem:[#allocation2 + $0x220] sm:$0xff] %vm4212, %v4024
      %4282 = vst.msk [vmem:[#allocation2 + $0x228] sm:$0xff] %vm4212, %v4025
      %4283 = vst.msk [vmem:[#allocation2 + $0x230] sm:$0xff] %vm4212, %v4026
      %4284 = vst.msk [vmem:[#allocation2 + $0x238] sm:$0xff] %vm4212, %v4027
      %4285 = vst.msk [vmem:[#allocation2 + $0x240] sm:$0xff] %vm4212, %v4028
      %4286 = vst.msk [vmem:[#allocation2 + $0x248] sm:$0xff] %vm4212, %v4029
      %4287 = vst.msk [vmem:[#allocation2 + $0x250] sm:$0xff] %vm4212, %v4030
      %4288 = vst.msk [vmem:[#allocation2 + $0x258] sm:$0xff] %vm4212, %v4031
      %4289 = vst.msk [vmem:[#allocation2 + $0x260] sm:$0xff] %vm4212, %v4032
      %4290 = vst.msk [vmem:[#allocation2 + $0x268] sm:$0xff] %vm4212, %v4033
      %4291 = vst.msk [vmem:[#allocation2 + $0x270] sm:$0xff] %vm4212, %v4034
      %4292 = vst.msk [vmem:[#allocation2 + $0x278] sm:$0xff] %vm4212, %v4035
      %4293 = vst.msk [vmem:[#allocation2 + $0x280] sm:$0xff] %vm4212, %v4036
      %4294 = vst.msk [vmem:[#allocation2 + $0x288] sm:$0xff] %vm4212, %v4037
      %4295 = vst.msk [vmem:[#allocation2 + $0x290] sm:$0xff] %vm4212, %v4038
      %4296 = vst.msk [vmem:[#allocation2 + $0x298] sm:$0xff] %vm4212, %v4039
      %4297 = vst.msk [vmem:[#allocation2 + $0x2a0] sm:$0xff] %vm4212, %v4040
      %4298 = vst.msk [vmem:[#allocation2 + $0x2a8] sm:$0xff] %vm4212, %v4041
      %4299 = vst.msk [vmem:[#allocation2 + $0x2b0] sm:$0xff] %vm4212, %v4042
      %4300 = vst.msk [vmem:[#allocation2 + $0x2b8] sm:$0xff] %vm4212, %v4043
      %4301 = vst.msk [vmem:[#allocation2 + $0x2c0] sm:$0xff] %vm4212, %v4044
      %4302 = vst.msk [vmem:[#allocation2 + $0x2c8] sm:$0xff] %vm4212, %v4045
      %4303 = vst.msk [vmem:[#allocation2 + $0x2d0] sm:$0xff] %vm4212, %v4046
      %4304 = vst.msk [vmem:[#allocation2 + $0x2d8] sm:$0xff] %vm4212, %v4047
      %4305 = vst.msk [vmem:[#allocation2 + $0x2e0] sm:$0xff] %vm4212, %v4048
      %4306 = vst.msk [vmem:[#allocation2 + $0x2e8] sm:$0xff] %vm4212, %v4049
      %4307 = vst.msk [vmem:[#allocation2 + $0x2f0] sm:$0xff] %vm4212, %v4050
      %4308 = vst.msk [vmem:[#allocation2 + $0x2f8] sm:$0xff] %vm4212, %v4051
      %4309 = vst.msk [vmem:[#allocation2 + $0x300] sm:$0xff] %vm4212, %v4052
      %4310 = vst.msk [vmem:[#allocation2 + $0x308] sm:$0xff] %vm4212, %v4053
      %4311 = vst.msk [vmem:[#allocation2 + $0x310] sm:$0xff] %vm4212, %v4054
      %4312 = vst.msk [vmem:[#allocation2 + $0x318] sm:$0xff] %vm4212, %v4055
      %4313 = vst.msk [vmem:[#allocation2 + $0x320] sm:$0xff] %vm4212, %v4056
      %4314 = vst.msk [vmem:[#allocation2 + $0x328] sm:$0xff] %vm4212, %v4057
      %4315 = vst.msk [vmem:[#allocation2 + $0x330] sm:$0xff] %vm4212, %v4058
      %4316 = vst.msk [vmem:[#allocation2 + $0x338] sm:$0xff] %vm4212, %v4059
      %4317 = vst.msk [vmem:[#allocation2 + $0x340] sm:$0xff] %vm4212, %v4060
      %4318 = vst.msk [vmem:[#allocation2 + $0x348] sm:$0xff] %vm4212, %v4061
      %4319 = vst.msk [vmem:[#allocation2 + $0x350] sm:$0xff] %vm4212, %v4062
      %4320 = vst.msk [vmem:[#allocation2 + $0x358] sm:$0xff] %vm4212, %v4063
      %4321 = vst.msk [vmem:[#allocation2 + $0x360] sm:$0xff] %vm4212, %v4064
      %4322 = vst.msk [vmem:[#allocation2 + $0x368] sm:$0xff] %vm4212, %v4065
      %4323 = vst.msk [vmem:[#allocation2 + $0x370] sm:$0xff] %vm4212, %v4066
      %4324 = vst.msk [vmem:[#allocation2 + $0x378] sm:$0xff] %vm4212, %v4067
      %4325 = vst.msk [vmem:[#allocation2 + $0x380] sm:$0xff] %vm4212, %v4068
      %4326 = vst.msk [vmem:[#allocation2 + $0x388] sm:$0xff] %vm4212, %v4069
      %4327 = vst.msk [vmem:[#allocation2 + $0x390] sm:$0xff] %vm4212, %v4070
      %4328 = vst.msk [vmem:[#allocation2 + $0x398] sm:$0xff] %vm4212, %v4071
      %4329 = vst.msk [vmem:[#allocation2 + $0x3a0] sm:$0xff] %vm4212, %v4072
      %4330 = vst.msk [vmem:[#allocation2 + $0x3a8] sm:$0xff] %vm4212, %v4073
      %4331 = vst.msk [vmem:[#allocation2 + $0x3b0] sm:$0xff] %vm4212, %v4074
      %4332 = vst.msk [vmem:[#allocation2 + $0x3b8] sm:$0xff] %vm4212, %v4075
      %4333 = vst.msk [vmem:[#allocation2 + $0x3c0] sm:$0xff] %vm4212, %v4076
      %4334 = vst.msk [vmem:[#allocation2 + $0x3c8] sm:$0xff] %vm4212, %v4077
      %4335 = vst.msk [vmem:[#allocation2 + $0x3d0] sm:$0xff] %vm4212, %v4078
      %4336 = vst.msk [vmem:[#allocation2 + $0x3d8] sm:$0xff] %vm4212, %v4079
      %4337 = vst.msk [vmem:[#allocation2 + $0x3e0] sm:$0xff] %vm4212, %v4080
      %4338 = vst.msk [vmem:[#allocation2 + $0x3e8] sm:$0xff] %vm4212, %v4081
      %4339 = vst.msk [vmem:[#allocation2 + $0x3f0] sm:$0xff] %vm4212, %v4082
      %4340 = vst.msk [vmem:[#allocation2 + $0x3f8] sm:$0xff] %vm4212, %v4083
      %4341 = vst.msk [vmem:[#allocation2 + $0x400] sm:$0xff] %vm4212, %v4084
      %4342 = vst.msk [vmem:[#allocation2 + $0x408] sm:$0xff] %vm4212, %v4085
      %4343 = vst.msk [vmem:[#allocation2 + $0x410] sm:$0xff] %vm4212, %v4086
      %4344 = vst.msk [vmem:[#allocation2 + $0x418] sm:$0xff] %vm4212, %v4087
      %4345 = vst.msk [vmem:[#allocation2 + $0x420] sm:$0xff] %vm4212, %v4088
      %4346 = vst.msk [vmem:[#allocation2 + $0x428] sm:$0xff] %vm4212, %v4089
      %4347 = vst.msk [vmem:[#allocation2 + $0x430] sm:$0xff] %vm4212, %v4090
      %4348 = vst.msk [vmem:[#allocation2 + $0x438] sm:$0xff] %vm4212, %v4091
      %4349 = vst.msk [vmem:[#allocation2 + $0x440] sm:$0xff] %vm4212, %v4092
      %4350 = vst.msk [vmem:[#allocation2 + $0x448] sm:$0xff] %vm4212, %v4093
      %4351 = vst.msk [vmem:[#allocation2 + $0x450] sm:$0xff] %vm4212, %v4094
      %4352 = vst.msk [vmem:[#allocation2 + $0x458] sm:$0xff] %vm4212, %v4095
      %4353 = vst.msk [vmem:[#allocation2 + $0x460] sm:$0xff] %vm4212, %v4096
      %4354 = vst.msk [vmem:[#allocation2 + $0x468] sm:$0xff] %vm4212, %v4097
      %4355 = vst.msk [vmem:[#allocation2 + $0x470] sm:$0xff] %vm4212, %v4098
      %4356 = vst.msk [vmem:[#allocation2 + $0x478] sm:$0xff] %vm4212, %v4099
      %4357 = vst.msk [vmem:[#allocation2 + $0x480] sm:$0xff] %vm4212, %v4100
      %4358 = vst.msk [vmem:[#allocation2 + $0x488] sm:$0xff] %vm4212, %v4101
      %4359 = vst.msk [vmem:[#allocation2 + $0x490] sm:$0xff] %vm4212, %v4102
      %4360 = vst.msk [vmem:[#allocation2 + $0x498] sm:$0xff] %vm4212, %v4103
      %4361 = vst.msk [vmem:[#allocation2 + $0x4a0] sm:$0xff] %vm4212, %v4104
      %4362 = vst.msk [vmem:[#allocation2 + $0x4a8] sm:$0xff] %vm4212, %v4105
      %4363 = vst.msk [vmem:[#allocation2 + $0x4b0] sm:$0xff] %vm4212, %v4106
      %4364 = vst.msk [vmem:[#allocation2 + $0x4b8] sm:$0xff] %vm4212, %v4107
      %4365 = vst.msk [vmem:[#allocation2 + $0x4c0] sm:$0xff] %vm4212, %v4108
      %4366 = vst.msk [vmem:[#allocation2 + $0x4c8] sm:$0xff] %vm4212, %v4109
      %4367 = vst.msk [vmem:[#allocation2 + $0x4d0] sm:$0xff] %vm4212, %v4110
      %4368 = vst.msk [vmem:[#allocation2 + $0x4d8] sm:$0xff] %vm4212, %v4111
      %4369 = vst.msk [vmem:[#allocation2 + $0x4e0] sm:$0xff] %vm4212, %v4112
      %4370 = vst.msk [vmem:[#allocation2 + $0x4e8] sm:$0xff] %vm4212, %v4113
      %4371 = vst.msk [vmem:[#allocation2 + $0x4f0] sm:$0xff] %vm4212, %v4114
      %4372 = vst.msk [vmem:[#allocation2 + $0x4f8] sm:$0xff] %vm4212, %v4115
      %4373 = vst.msk [vmem:[#allocation2 + $0x500] sm:$0xff] %vm4212, %v4116
      %4374 = vst.msk [vmem:[#allocation2 + $0x508] sm:$0xff] %vm4212, %v4117
      %4375 = vst.msk [vmem:[#allocation2 + $0x510] sm:$0xff] %vm4212, %v4118
      %4376 = vst.msk [vmem:[#allocation2 + $0x518] sm:$0xff] %vm4212, %v4119
      %4377 = vst.msk [vmem:[#allocation2 + $0x520] sm:$0xff] %vm4212, %v4120
      %4378 = vst.msk [vmem:[#allocation2 + $0x528] sm:$0xff] %vm4212, %v4121
      %4379 = vst.msk [vmem:[#allocation2 + $0x530] sm:$0xff] %vm4212, %v4122
      %4380 = vst.msk [vmem:[#allocation2 + $0x538] sm:$0xff] %vm4212, %v4123
      %4381 = vst.msk [vmem:[#allocation2 + $0x540] sm:$0xff] %vm4212, %v4124
      %4382 = vst.msk [vmem:[#allocation2 + $0x548] sm:$0xff] %vm4212, %v4125
      %4383 = vst.msk [vmem:[#allocation2 + $0x550] sm:$0xff] %vm4212, %v4126
      %4384 = vst.msk [vmem:[#allocation2 + $0x558] sm:$0xff] %vm4212, %v4127
      %4385 = vst.msk [vmem:[#allocation2 + $0x560] sm:$0xff] %vm4212, %v4128
      %4386 = vst.msk [vmem:[#allocation2 + $0x568] sm:$0xff] %vm4212, %v4129
      %4387 = vst.msk [vmem:[#allocation2 + $0x570] sm:$0xff] %vm4212, %v4130
      %4388 = vst.msk [vmem:[#allocation2 + $0x578] sm:$0xff] %vm4212, %v4131
      %4389 = vst.msk [vmem:[#allocation2 + $0x580] sm:$0xff] %vm4212, %v4132
      %4390 = vst.msk [vmem:[#allocation2 + $0x588] sm:$0xff] %vm4212, %v4133
      %4391 = vst.msk [vmem:[#allocation2 + $0x590] sm:$0xff] %vm4212, %v4134
      %4392 = vst.msk [vmem:[#allocation2 + $0x598] sm:$0xff] %vm4212, %v4135
      %4393 = vst.msk [vmem:[#allocation2 + $0x5a0] sm:$0xff] %vm4212, %v4136
      %4394 = vst.msk [vmem:[#allocation2 + $0x5a8] sm:$0xff] %vm4212, %v4137
      %4395 = vst.msk [vmem:[#allocation2 + $0x5b0] sm:$0xff] %vm4212, %v4138
      %4396 = vst.msk [vmem:[#allocation2 + $0x5b8] sm:$0xff] %vm4212, %v4139
      %4397 = vst.msk [vmem:[#allocation2 + $0x5c0] sm:$0xff] %vm4212, %v4140
      %4398 = vst.msk [vmem:[#allocation2 + $0x5c8] sm:$0xff] %vm4212, %v4141
      %4399 = vst.msk [vmem:[#allocation2 + $0x5d0] sm:$0xff] %vm4212, %v4142
      %4400 = vst.msk [vmem:[#allocation2 + $0x5d8] sm:$0xff] %vm4212, %v4143
      %4401 = vst.msk [vmem:[#allocation2 + $0x5e0] sm:$0xff] %vm4212, %v4144
      %4402 = vst.msk [vmem:[#allocation2 + $0x5e8] sm:$0xff] %vm4212, %v4145
      %4403 = vst.msk [vmem:[#allocation2 + $0x5f0] sm:$0xff] %vm4212, %v4146
      %4404 = vst.msk [vmem:[#allocation2 + $0x5f8] sm:$0xff] %vm4212, %v4147
      %4405 = vst.msk [vmem:[#allocation2 + $0x600] sm:$0xff] %vm4212, %v4148
      %4406 = vst.msk [vmem:[#allocation2 + $0x608] sm:$0xff] %vm4212, %v4149
      %4407 = vst.msk [vmem:[#allocation2 + $0x610] sm:$0xff] %vm4212, %v4150
      %4408 = vst.msk [vmem:[#allocation2 + $0x618] sm:$0xff] %vm4212, %v4151
      %4409 = vst.msk [vmem:[#allocation2 + $0x620] sm:$0xff] %vm4212, %v4152
      %4410 = vst.msk [vmem:[#allocation2 + $0x628] sm:$0xff] %vm4212, %v4153
      %4411 = vst.msk [vmem:[#allocation2 + $0x630] sm:$0xff] %vm4212, %v4154
      %4412 = vst.msk [vmem:[#allocation2 + $0x638] sm:$0xff] %vm4212, %v4155
      %4413 = vst.msk [vmem:[#allocation2 + $0x640] sm:$0xff] %vm4212, %v4156
      %4414 = vst.msk [vmem:[#allocation2 + $0x648] sm:$0xff] %vm4212, %v4157
      %4415 = vst.msk [vmem:[#allocation2 + $0x650] sm:$0xff] %vm4212, %v4158
      %4416 = vst.msk [vmem:[#allocation2 + $0x658] sm:$0xff] %vm4212, %v4159
      %4417 = vst.msk [vmem:[#allocation2 + $0x660] sm:$0xff] %vm4212, %v4160
      %4418 = vst.msk [vmem:[#allocation2 + $0x668] sm:$0xff] %vm4212, %v4161
      %4419 = vst.msk [vmem:[#allocation2 + $0x670] sm:$0xff] %vm4212, %v4162
      %4420 = vst.msk [vmem:[#allocation2 + $0x678] sm:$0xff] %vm4212, %v4163
      %4421 = vst.msk [vmem:[#allocation2 + $0x680] sm:$0xff] %vm4212, %v4164
      %4422 = vst.msk [vmem:[#allocation2 + $0x688] sm:$0xff] %vm4212, %v4165
      %4423 = vst.msk [vmem:[#allocation2 + $0x690] sm:$0xff] %vm4212, %v4166
      %4424 = vst.msk [vmem:[#allocation2 + $0x698] sm:$0xff] %vm4212, %v4167
      %4425 = vst.msk [vmem:[#allocation2 + $0x6a0] sm:$0xff] %vm4212, %v4168
      %4426 = vst.msk [vmem:[#allocation2 + $0x6a8] sm:$0xff] %vm4212, %v4169
      %4427 = vst.msk [vmem:[#allocation2 + $0x6b0] sm:$0xff] %vm4212, %v4170
      %4428 = vst.msk [vmem:[#allocation2 + $0x6b8] sm:$0xff] %vm4212, %v4171
      %4429 = vst.msk [vmem:[#allocation2 + $0x6c0] sm:$0xff] %vm4212, %v4172
      %4430 = vst.msk [vmem:[#allocation2 + $0x6c8] sm:$0xff] %vm4212, %v4173
      %4431 = vst.msk [vmem:[#allocation2 + $0x6d0] sm:$0xff] %vm4212, %v4174
      %4432 = vst.msk [vmem:[#allocation2 + $0x6d8] sm:$0xff] %vm4212, %v4175
      %4433 = vst.msk [vmem:[#allocation2 + $0x6e0] sm:$0xff] %vm4212, %v4176
      %4434 = vst.msk [vmem:[#allocation2 + $0x6e8] sm:$0xff] %vm4212, %v4177
      %4435 = vst.msk [vmem:[#allocation2 + $0x6f0] sm:$0xff] %vm4212, %v4178
      %4436 = vst.msk [vmem:[#allocation2 + $0x6f8] sm:$0xff] %vm4212, %v4179
      %4437 = vst.msk [vmem:[#allocation2 + $0x700] sm:$0xff] %vm4212, %v4180
      %4438 = vst.msk [vmem:[#allocation2 + $0x708] sm:$0xff] %vm4212, %v4181
      %4439 = vst.msk [vmem:[#allocation2 + $0x710] sm:$0xff] %vm4212, %v4182
      %4440 = vst.msk [vmem:[#allocation2 + $0x718] sm:$0xff] %vm4212, %v4183
      %4441 = vst.msk [vmem:[#allocation2 + $0x720] sm:$0xff] %vm4212, %v4184
      %4442 = vst.msk [vmem:[#allocation2 + $0x728] sm:$0xff] %vm4212, %v4185
      %4443 = vst.msk [vmem:[#allocation2 + $0x730] sm:$0xff] %vm4212, %v4186
      %4444 = vst.msk [vmem:[#allocation2 + $0x738] sm:$0xff] %vm4212, %v4187
      %4445 = vst.msk [vmem:[#allocation2 + $0x740] sm:$0xff] %vm4212, %v4188
      %4446 = vst.msk [vmem:[#allocation2 + $0x748] sm:$0xff] %vm4212, %v4189
      %4447 = vst.msk [vmem:[#allocation2 + $0x750] sm:$0xff] %vm4212, %v4190
      %4448 = vst.msk [vmem:[#allocation2 + $0x758] sm:$0xff] %vm4212, %v4191
      %4449 = vst.msk [vmem:[#allocation2 + $0x760] sm:$0xff] %vm4212, %v4192
      %4450 = vst.msk [vmem:[#allocation2 + $0x768] sm:$0xff] %vm4212, %v4193
      %4451 = vst.msk [vmem:[#allocation2 + $0x770] sm:$0xff] %vm4212, %v4194
      %4452 = vst.msk [vmem:[#allocation2 + $0x778] sm:$0xff] %vm4212, %v4195
      %4453 = vst.msk [vmem:[#allocation2 + $0x780] sm:$0xff] %vm4212, %v4196
      %4454 = vst.msk [vmem:[#allocation2 + $0x788] sm:$0xff] %vm4212, %v4197
      %4455 = vst.msk [vmem:[#allocation2 + $0x790] sm:$0xff] %vm4212, %v4198
      %4456 = vst.msk [vmem:[#allocation2 + $0x798] sm:$0xff] %vm4212, %v4199
      %4457 = vst.msk [vmem:[#allocation2 + $0x7a0] sm:$0xff] %vm4212, %v4200
      %4458 = vst.msk [vmem:[#allocation2 + $0x7a8] sm:$0xff] %vm4212, %v4201
      %4459 = vst.msk [vmem:[#allocation2 + $0x7b0] sm:$0xff] %vm4212, %v4202
      %4460 = vst.msk [vmem:[#allocation2 + $0x7b8] sm:$0xff] %vm4212, %v4203
      %4461 = vst.msk [vmem:[#allocation2 + $0x7c0] sm:$0xff] %vm4212, %v4204
      %4462 = vst.msk [vmem:[#allocation2 + $0x7c8] sm:$0xff] %vm4212, %v4205
      %4463 = vst.msk [vmem:[#allocation2 + $0x7d0] sm:$0xff] %vm4212, %v4206
      %4464 = vst.msk [vmem:[#allocation2 + $0x7d8] sm:$0xff] %vm4212, %v4207
      %4465 = vst.msk [vmem:[#allocation2 + $0x7e0] sm:$0xff] %vm4212, %v4208
      %4466 = vst.msk [vmem:[#allocation2 + $0x7e8] sm:$0xff] %vm4212, %v4209
      %4467 = vst.msk [vmem:[#allocation2 + $0x7f0] sm:$0xff] %vm4212, %v4210
      %4468 = vst.msk [vmem:[#allocation2 + $0x7f8] sm:$0xff] %vm4212, %v4211
      // Predicated region
      $region37: #{fused_matmul.1} parent=31 // pred_check
        %p4469 = pneg %p268
      $region38: #{fused_matmul.1} parent=31 // pred_check_branch
        %4471 = sbr.rel (%p4469) target = $region40
      $region39: #{fused_matmul.1} parent=31 // pred_region
        %v4472 = vld [vmem:[#allocation2] sm:$0xff]
        %v4473 = vld [vmem:[#allocation2 + $0x8] sm:$0xff]
        %v4474 = vld [vmem:[#allocation2 + $0x10] sm:$0xff]
        %v4475 = vld [vmem:[#allocation2 + $0x18] sm:$0xff]
        %v4476 = vld [vmem:[#allocation2 + $0x20] sm:$0xff]
        %v4477 = vld [vmem:[#allocation2 + $0x28] sm:$0xff]
        %v4478 = vld [vmem:[#allocation2 + $0x30] sm:$0xff]
        %v4479 = vld [vmem:[#allocation2 + $0x38] sm:$0xff]
        %v4480 = vld [vmem:[#allocation2 + $0x40] sm:$0xff]
        %v4481 = vld [vmem:[#allocation2 + $0x48] sm:$0xff]
        %v4482 = vld [vmem:[#allocation2 + $0x50] sm:$0xff]
        %v4483 = vld [vmem:[#allocation2 + $0x58] sm:$0xff]
        %v4484 = vld [vmem:[#allocation2 + $0x60] sm:$0xff]
        %v4485 = vld [vmem:[#allocation2 + $0x68] sm:$0xff]
        %v4486 = vld [vmem:[#allocation2 + $0x70] sm:$0xff]
        %v4487 = vld [vmem:[#allocation2 + $0x78] sm:$0xff]
        %v4488 = vld [vmem:[#allocation2 + $0x80] sm:$0xff]
        %v4489 = vld [vmem:[#allocation2 + $0x88] sm:$0xff]
        %v4490 = vld [vmem:[#allocation2 + $0x90] sm:$0xff]
        %v4491 = vld [vmem:[#allocation2 + $0x98] sm:$0xff]
        %v4492 = vld [vmem:[#allocation2 + $0xa0] sm:$0xff]
        %v4493 = vld [vmem:[#allocation2 + $0xa8] sm:$0xff]
        %v4494 = vld [vmem:[#allocation2 + $0xb0] sm:$0xff]
        %v4495 = vld [vmem:[#allocation2 + $0xb8] sm:$0xff]
        %v4496 = vld [vmem:[#allocation2 + $0xc0] sm:$0xff]
        %v4497 = vld [vmem:[#allocation2 + $0xc8] sm:$0xff]
        %v4498 = vld [vmem:[#allocation2 + $0xd0] sm:$0xff]
        %v4499 = vld [vmem:[#allocation2 + $0xd8] sm:$0xff]
        %v4500 = vld [vmem:[#allocation2 + $0xe0] sm:$0xff]
        %v4501 = vld [vmem:[#allocation2 + $0xe8] sm:$0xff]
        %v4502 = vld [vmem:[#allocation2 + $0xf0] sm:$0xff]
        %v4503 = vld [vmem:[#allocation2 + $0xf8] sm:$0xff]
        %v4504 = vld [vmem:[#allocation2 + $0x100] sm:$0xff]
        %v4505 = vld [vmem:[#allocation2 + $0x108] sm:$0xff]
        %v4506 = vld [vmem:[#allocation2 + $0x110] sm:$0xff]
        %v4507 = vld [vmem:[#allocation2 + $0x118] sm:$0xff]
        %v4508 = vld [vmem:[#allocation2 + $0x120] sm:$0xff]
        %v4509 = vld [vmem:[#allocation2 + $0x128] sm:$0xff]
        %v4510 = vld [vmem:[#allocation2 + $0x130] sm:$0xff]
        %v4511 = vld [vmem:[#allocation2 + $0x138] sm:$0xff]
        %v4512 = vld [vmem:[#allocation2 + $0x140] sm:$0xff]
        %v4513 = vld [vmem:[#allocation2 + $0x148] sm:$0xff]
        %v4514 = vld [vmem:[#allocation2 + $0x150] sm:$0xff]
        %v4515 = vld [vmem:[#allocation2 + $0x158] sm:$0xff]
        %v4516 = vld [vmem:[#allocation2 + $0x160] sm:$0xff]
        %v4517 = vld [vmem:[#allocation2 + $0x168] sm:$0xff]
        %v4518 = vld [vmem:[#allocation2 + $0x170] sm:$0xff]
        %v4519 = vld [vmem:[#allocation2 + $0x178] sm:$0xff]
        %v4520 = vld [vmem:[#allocation2 + $0x180] sm:$0xff]
        %v4521 = vld [vmem:[#allocation2 + $0x188] sm:$0xff]
        %v4522 = vld [vmem:[#allocation2 + $0x190] sm:$0xff]
        %v4523 = vld [vmem:[#allocation2 + $0x198] sm:$0xff]
        %v4524 = vld [vmem:[#allocation2 + $0x1a0] sm:$0xff]
        %v4525 = vld [vmem:[#allocation2 + $0x1a8] sm:$0xff]
        %v4526 = vld [vmem:[#allocation2 + $0x1b0] sm:$0xff]
        %v4527 = vld [vmem:[#allocation2 + $0x1b8] sm:$0xff]
        %v4528 = vld [vmem:[#allocation2 + $0x1c0] sm:$0xff]
        %v4529 = vld [vmem:[#allocation2 + $0x1c8] sm:$0xff]
        %v4530 = vld [vmem:[#allocation2 + $0x1d0] sm:$0xff]
        %v4531 = vld [vmem:[#allocation2 + $0x1d8] sm:$0xff]
        %v4532 = vld [vmem:[#allocation2 + $0x1e0] sm:$0xff]
        %v4533 = vld [vmem:[#allocation2 + $0x1e8] sm:$0xff]
        %v4534 = vld [vmem:[#allocation2 + $0x1f0] sm:$0xff]
        %v4535 = vld [vmem:[#allocation2 + $0x1f8] sm:$0xff]
        %v4536 = vld [vmem:[#allocation2 + $0x200] sm:$0xff]
        %v4537 = vld [vmem:[#allocation2 + $0x208] sm:$0xff]
        %v4538 = vld [vmem:[#allocation2 + $0x210] sm:$0xff]
        %v4539 = vld [vmem:[#allocation2 + $0x218] sm:$0xff]
        %v4540 = vld [vmem:[#allocation2 + $0x220] sm:$0xff]
        %v4541 = vld [vmem:[#allocation2 + $0x228] sm:$0xff]
        %v4542 = vld [vmem:[#allocation2 + $0x230] sm:$0xff]
        %v4543 = vld [vmem:[#allocation2 + $0x238] sm:$0xff]
        %v4544 = vld [vmem:[#allocation2 + $0x240] sm:$0xff]
        %v4545 = vld [vmem:[#allocation2 + $0x248] sm:$0xff]
        %v4546 = vld [vmem:[#allocation2 + $0x250] sm:$0xff]
        %v4547 = vld [vmem:[#allocation2 + $0x258] sm:$0xff]
        %v4548 = vld [vmem:[#allocation2 + $0x260] sm:$0xff]
        %v4549 = vld [vmem:[#allocation2 + $0x268] sm:$0xff]
        %v4550 = vld [vmem:[#allocation2 + $0x270] sm:$0xff]
        %v4551 = vld [vmem:[#allocation2 + $0x278] sm:$0xff]
        %v4552 = vld [vmem:[#allocation2 + $0x280] sm:$0xff]
        %v4553 = vld [vmem:[#allocation2 + $0x288] sm:$0xff]
        %v4554 = vld [vmem:[#allocation2 + $0x290] sm:$0xff]
        %v4555 = vld [vmem:[#allocation2 + $0x298] sm:$0xff]
        %v4556 = vld [vmem:[#allocation2 + $0x2a0] sm:$0xff]
        %v4557 = vld [vmem:[#allocation2 + $0x2a8] sm:$0xff]
        %v4558 = vld [vmem:[#allocation2 + $0x2b0] sm:$0xff]
        %v4559 = vld [vmem:[#allocation2 + $0x2b8] sm:$0xff]
        %v4560 = vld [vmem:[#allocation2 + $0x2c0] sm:$0xff]
        %v4561 = vld [vmem:[#allocation2 + $0x2c8] sm:$0xff]
        %v4562 = vld [vmem:[#allocation2 + $0x2d0] sm:$0xff]
        %v4563 = vld [vmem:[#allocation2 + $0x2d8] sm:$0xff]
        %v4564 = vld [vmem:[#allocation2 + $0x2e0] sm:$0xff]
        %v4565 = vld [vmem:[#allocation2 + $0x2e8] sm:$0xff]
        %v4566 = vld [vmem:[#allocation2 + $0x2f0] sm:$0xff]
        %v4567 = vld [vmem:[#allocation2 + $0x2f8] sm:$0xff]
        %v4568 = vld [vmem:[#allocation2 + $0x300] sm:$0xff]
        %v4569 = vld [vmem:[#allocation2 + $0x308] sm:$0xff]
        %v4570 = vld [vmem:[#allocation2 + $0x310] sm:$0xff]
        %v4571 = vld [vmem:[#allocation2 + $0x318] sm:$0xff]
        %v4572 = vld [vmem:[#allocation2 + $0x320] sm:$0xff]
        %v4573 = vld [vmem:[#allocation2 + $0x328] sm:$0xff]
        %v4574 = vld [vmem:[#allocation2 + $0x330] sm:$0xff]
        %v4575 = vld [vmem:[#allocation2 + $0x338] sm:$0xff]
        %v4576 = vld [vmem:[#allocation2 + $0x340] sm:$0xff]
        %v4577 = vld [vmem:[#allocation2 + $0x348] sm:$0xff]
        %v4578 = vld [vmem:[#allocation2 + $0x350] sm:$0xff]
        %v4579 = vld [vmem:[#allocation2 + $0x358] sm:$0xff]
        %v4580 = vld [vmem:[#allocation2 + $0x360] sm:$0xff]
        %v4581 = vld [vmem:[#allocation2 + $0x368] sm:$0xff]
        %v4582 = vld [vmem:[#allocation2 + $0x370] sm:$0xff]
        %v4583 = vld [vmem:[#allocation2 + $0x378] sm:$0xff]
        %v4584 = vld [vmem:[#allocation2 + $0x380] sm:$0xff]
        %v4585 = vld [vmem:[#allocation2 + $0x388] sm:$0xff]
        %v4586 = vld [vmem:[#allocation2 + $0x390] sm:$0xff]
        %v4587 = vld [vmem:[#allocation2 + $0x398] sm:$0xff]
        %v4588 = vld [vmem:[#allocation2 + $0x3a0] sm:$0xff]
        %v4589 = vld [vmem:[#allocation2 + $0x3a8] sm:$0xff]
        %v4590 = vld [vmem:[#allocation2 + $0x3b0] sm:$0xff]
        %v4591 = vld [vmem:[#allocation2 + $0x3b8] sm:$0xff]
        %v4592 = vld [vmem:[#allocation2 + $0x3c0] sm:$0xff]
        %v4593 = vld [vmem:[#allocation2 + $0x3c8] sm:$0xff]
        %v4594 = vld [vmem:[#allocation2 + $0x3d0] sm:$0xff]
        %v4595 = vld [vmem:[#allocation2 + $0x3d8] sm:$0xff]
        %v4596 = vld [vmem:[#allocation2 + $0x3e0] sm:$0xff]
        %v4597 = vld [vmem:[#allocation2 + $0x3e8] sm:$0xff]
        %v4598 = vld [vmem:[#allocation2 + $0x3f0] sm:$0xff]
        %v4599 = vld [vmem:[#allocation2 + $0x3f8] sm:$0xff]
        %v4600 = vld [vmem:[#allocation2 + $0x400] sm:$0xff]
        %v4601 = vld [vmem:[#allocation2 + $0x408] sm:$0xff]
        %v4602 = vld [vmem:[#allocation2 + $0x410] sm:$0xff]
        %v4603 = vld [vmem:[#allocation2 + $0x418] sm:$0xff]
        %v4604 = vld [vmem:[#allocation2 + $0x420] sm:$0xff]
        %v4605 = vld [vmem:[#allocation2 + $0x428] sm:$0xff]
        %v4606 = vld [vmem:[#allocation2 + $0x430] sm:$0xff]
        %v4607 = vld [vmem:[#allocation2 + $0x438] sm:$0xff]
        %v4608 = vld [vmem:[#allocation2 + $0x440] sm:$0xff]
        %v4609 = vld [vmem:[#allocation2 + $0x448] sm:$0xff]
        %v4610 = vld [vmem:[#allocation2 + $0x450] sm:$0xff]
        %v4611 = vld [vmem:[#allocation2 + $0x458] sm:$0xff]
        %v4612 = vld [vmem:[#allocation2 + $0x460] sm:$0xff]
        %v4613 = vld [vmem:[#allocation2 + $0x468] sm:$0xff]
        %v4614 = vld [vmem:[#allocation2 + $0x470] sm:$0xff]
        %v4615 = vld [vmem:[#allocation2 + $0x478] sm:$0xff]
        %v4616 = vld [vmem:[#allocation2 + $0x480] sm:$0xff]
        %v4617 = vld [vmem:[#allocation2 + $0x488] sm:$0xff]
        %v4618 = vld [vmem:[#allocation2 + $0x490] sm:$0xff]
        %v4619 = vld [vmem:[#allocation2 + $0x498] sm:$0xff]
        %v4620 = vld [vmem:[#allocation2 + $0x4a0] sm:$0xff]
        %v4621 = vld [vmem:[#allocation2 + $0x4a8] sm:$0xff]
        %v4622 = vld [vmem:[#allocation2 + $0x4b0] sm:$0xff]
        %v4623 = vld [vmem:[#allocation2 + $0x4b8] sm:$0xff]
        %v4624 = vld [vmem:[#allocation2 + $0x4c0] sm:$0xff]
        %v4625 = vld [vmem:[#allocation2 + $0x4c8] sm:$0xff]
        %v4626 = vld [vmem:[#allocation2 + $0x4d0] sm:$0xff]
        %v4627 = vld [vmem:[#allocation2 + $0x4d8] sm:$0xff]
        %v4628 = vld [vmem:[#allocation2 + $0x4e0] sm:$0xff]
        %v4629 = vld [vmem:[#allocation2 + $0x4e8] sm:$0xff]
        %v4630 = vld [vmem:[#allocation2 + $0x4f0] sm:$0xff]
        %v4631 = vld [vmem:[#allocation2 + $0x4f8] sm:$0xff]
        %v4632 = vld [vmem:[#allocation2 + $0x500] sm:$0xff]
        %v4633 = vld [vmem:[#allocation2 + $0x508] sm:$0xff]
        %v4634 = vld [vmem:[#allocation2 + $0x510] sm:$0xff]
        %v4635 = vld [vmem:[#allocation2 + $0x518] sm:$0xff]
        %v4636 = vld [vmem:[#allocation2 + $0x520] sm:$0xff]
        %v4637 = vld [vmem:[#allocation2 + $0x528] sm:$0xff]
        %v4638 = vld [vmem:[#allocation2 + $0x530] sm:$0xff]
        %v4639 = vld [vmem:[#allocation2 + $0x538] sm:$0xff]
        %v4640 = vld [vmem:[#allocation2 + $0x540] sm:$0xff]
        %v4641 = vld [vmem:[#allocation2 + $0x548] sm:$0xff]
        %v4642 = vld [vmem:[#allocation2 + $0x550] sm:$0xff]
        %v4643 = vld [vmem:[#allocation2 + $0x558] sm:$0xff]
        %v4644 = vld [vmem:[#allocation2 + $0x560] sm:$0xff]
        %v4645 = vld [vmem:[#allocation2 + $0x568] sm:$0xff]
        %v4646 = vld [vmem:[#allocation2 + $0x570] sm:$0xff]
        %v4647 = vld [vmem:[#allocation2 + $0x578] sm:$0xff]
        %v4648 = vld [vmem:[#allocation2 + $0x580] sm:$0xff]
        %v4649 = vld [vmem:[#allocation2 + $0x588] sm:$0xff]
        %v4650 = vld [vmem:[#allocation2 + $0x590] sm:$0xff]
        %v4651 = vld [vmem:[#allocation2 + $0x598] sm:$0xff]
        %v4652 = vld [vmem:[#allocation2 + $0x5a0] sm:$0xff]
        %v4653 = vld [vmem:[#allocation2 + $0x5a8] sm:$0xff]
        %v4654 = vld [vmem:[#allocation2 + $0x5b0] sm:$0xff]
        %v4655 = vld [vmem:[#allocation2 + $0x5b8] sm:$0xff]
        %v4656 = vld [vmem:[#allocation2 + $0x5c0] sm:$0xff]
        %v4657 = vld [vmem:[#allocation2 + $0x5c8] sm:$0xff]
        %v4658 = vld [vmem:[#allocation2 + $0x5d0] sm:$0xff]
        %v4659 = vld [vmem:[#allocation2 + $0x5d8] sm:$0xff]
        %v4660 = vld [vmem:[#allocation2 + $0x5e0] sm:$0xff]
        %v4661 = vld [vmem:[#allocation2 + $0x5e8] sm:$0xff]
        %v4662 = vld [vmem:[#allocation2 + $0x5f0] sm:$0xff]
        %v4663 = vld [vmem:[#allocation2 + $0x5f8] sm:$0xff]
        %v4664 = vld [vmem:[#allocation2 + $0x600] sm:$0xff]
        %v4665 = vld [vmem:[#allocation2 + $0x608] sm:$0xff]
        %v4666 = vld [vmem:[#allocation2 + $0x610] sm:$0xff]
        %v4667 = vld [vmem:[#allocation2 + $0x618] sm:$0xff]
        %v4668 = vld [vmem:[#allocation2 + $0x620] sm:$0xff]
        %v4669 = vld [vmem:[#allocation2 + $0x628] sm:$0xff]
        %v4670 = vld [vmem:[#allocation2 + $0x630] sm:$0xff]
        %v4671 = vld [vmem:[#allocation2 + $0x638] sm:$0xff]
        %v4672 = vld [vmem:[#allocation2 + $0x640] sm:$0xff]
        %v4673 = vld [vmem:[#allocation2 + $0x648] sm:$0xff]
        %v4674 = vld [vmem:[#allocation2 + $0x650] sm:$0xff]
        %v4675 = vld [vmem:[#allocation2 + $0x658] sm:$0xff]
        %v4676 = vld [vmem:[#allocation2 + $0x660] sm:$0xff]
        %v4677 = vld [vmem:[#allocation2 + $0x668] sm:$0xff]
        %v4678 = vld [vmem:[#allocation2 + $0x670] sm:$0xff]
        %v4679 = vld [vmem:[#allocation2 + $0x678] sm:$0xff]
        %v4680 = vld [vmem:[#allocation2 + $0x680] sm:$0xff]
        %v4681 = vld [vmem:[#allocation2 + $0x688] sm:$0xff]
        %v4682 = vld [vmem:[#allocation2 + $0x690] sm:$0xff]
        %v4683 = vld [vmem:[#allocation2 + $0x698] sm:$0xff]
        %v4684 = vld [vmem:[#allocation2 + $0x6a0] sm:$0xff]
        %v4685 = vld [vmem:[#allocation2 + $0x6a8] sm:$0xff]
        %v4686 = vld [vmem:[#allocation2 + $0x6b0] sm:$0xff]
        %v4687 = vld [vmem:[#allocation2 + $0x6b8] sm:$0xff]
        %v4688 = vld [vmem:[#allocation2 + $0x6c0] sm:$0xff]
        %v4689 = vld [vmem:[#allocation2 + $0x6c8] sm:$0xff]
        %v4690 = vld [vmem:[#allocation2 + $0x6d0] sm:$0xff]
        %v4691 = vld [vmem:[#allocation2 + $0x6d8] sm:$0xff]
        %v4692 = vld [vmem:[#allocation2 + $0x6e0] sm:$0xff]
        %v4693 = vld [vmem:[#allocation2 + $0x6e8] sm:$0xff]
        %v4694 = vld [vmem:[#allocation2 + $0x6f0] sm:$0xff]
        %v4695 = vld [vmem:[#allocation2 + $0x6f8] sm:$0xff]
        %v4696 = vld [vmem:[#allocation2 + $0x700] sm:$0xff]
        %v4697 = vld [vmem:[#allocation2 + $0x708] sm:$0xff]
        %v4698 = vld [vmem:[#allocation2 + $0x710] sm:$0xff]
        %v4699 = vld [vmem:[#allocation2 + $0x718] sm:$0xff]
        %v4700 = vld [vmem:[#allocation2 + $0x720] sm:$0xff]
        %v4701 = vld [vmem:[#allocation2 + $0x728] sm:$0xff]
        %v4702 = vld [vmem:[#allocation2 + $0x730] sm:$0xff]
        %v4703 = vld [vmem:[#allocation2 + $0x738] sm:$0xff]
        %v4704 = vld [vmem:[#allocation2 + $0x740] sm:$0xff]
        %v4705 = vld [vmem:[#allocation2 + $0x748] sm:$0xff]
        %v4706 = vld [vmem:[#allocation2 + $0x750] sm:$0xff]
        %v4707 = vld [vmem:[#allocation2 + $0x758] sm:$0xff]
        %v4708 = vld [vmem:[#allocation2 + $0x760] sm:$0xff]
        %v4709 = vld [vmem:[#allocation2 + $0x768] sm:$0xff]
        %v4710 = vld [vmem:[#allocation2 + $0x770] sm:$0xff]
        %v4711 = vld [vmem:[#allocation2 + $0x778] sm:$0xff]
        %v4712 = vld [vmem:[#allocation2 + $0x780] sm:$0xff]
        %v4713 = vld [vmem:[#allocation2 + $0x788] sm:$0xff]
        %v4714 = vld [vmem:[#allocation2 + $0x790] sm:$0xff]
        %v4715 = vld [vmem:[#allocation2 + $0x798] sm:$0xff]
        %v4716 = vld [vmem:[#allocation2 + $0x7a0] sm:$0xff]
        %v4717 = vld [vmem:[#allocation2 + $0x7a8] sm:$0xff]
        %v4718 = vld [vmem:[#allocation2 + $0x7b0] sm:$0xff]
        %v4719 = vld [vmem:[#allocation2 + $0x7b8] sm:$0xff]
        %v4720 = vld [vmem:[#allocation2 + $0x7c0] sm:$0xff]
        %v4721 = vld [vmem:[#allocation2 + $0x7c8] sm:$0xff]
        %v4722 = vld [vmem:[#allocation2 + $0x7d0] sm:$0xff]
        %v4723 = vld [vmem:[#allocation2 + $0x7d8] sm:$0xff]
        %v4724 = vld [vmem:[#allocation2 + $0x7e0] sm:$0xff]
        %v4725 = vld [vmem:[#allocation2 + $0x7e8] sm:$0xff]
        %v4726 = vld [vmem:[#allocation2 + $0x7f0] sm:$0xff]
        %v4727 = vld [vmem:[#allocation2 + $0x7f8] sm:$0xff]
        %v4728 = vld [vmem:[%s257] sm:$0x1]
        %v4730 = vperm.slane %v4728, 0
        %v4732 = vadd.f32 %v4472, %v4730
        %v4733 = vadd.f32 %v4473, %v4730
        %v4734 = vadd.f32 %v4474, %v4730
        %v4735 = vadd.f32 %v4475, %v4730
        %v4736 = vadd.f32 %v4476, %v4730
        %v4737 = vadd.f32 %v4477, %v4730
        %v4738 = vadd.f32 %v4478, %v4730
        %v4739 = vadd.f32 %v4479, %v4730
        %v4740 = vadd.f32 %v4480, %v4730
        %v4741 = vadd.f32 %v4481, %v4730
        %v4742 = vadd.f32 %v4482, %v4730
        %v4743 = vadd.f32 %v4483, %v4730
        %v4744 = vadd.f32 %v4484, %v4730
        %v4745 = vadd.f32 %v4485, %v4730
        %v4746 = vadd.f32 %v4486, %v4730
        %v4747 = vadd.f32 %v4487, %v4730
        %v4748 = vadd.f32 %v4488, %v4730
        %v4749 = vadd.f32 %v4489, %v4730
        %v4750 = vadd.f32 %v4490, %v4730
        %v4751 = vadd.f32 %v4491, %v4730
        %v4752 = vadd.f32 %v4492, %v4730
        %v4753 = vadd.f32 %v4493, %v4730
        %v4754 = vadd.f32 %v4494, %v4730
        %v4755 = vadd.f32 %v4495, %v4730
        %v4756 = vadd.f32 %v4496, %v4730
        %v4757 = vadd.f32 %v4497, %v4730
        %v4758 = vadd.f32 %v4498, %v4730
        %v4759 = vadd.f32 %v4499, %v4730
        %v4760 = vadd.f32 %v4500, %v4730
        %v4761 = vadd.f32 %v4501, %v4730
        %v4762 = vadd.f32 %v4502, %v4730
        %v4763 = vadd.f32 %v4503, %v4730
        %v4764 = vadd.f32 %v4504, %v4730
        %v4765 = vadd.f32 %v4505, %v4730
        %v4766 = vadd.f32 %v4506, %v4730
        %v4767 = vadd.f32 %v4507, %v4730
        %v4768 = vadd.f32 %v4508, %v4730
        %v4769 = vadd.f32 %v4509, %v4730
        %v4770 = vadd.f32 %v4510, %v4730
        %v4771 = vadd.f32 %v4511, %v4730
        %v4772 = vadd.f32 %v4512, %v4730
        %v4773 = vadd.f32 %v4513, %v4730
        %v4774 = vadd.f32 %v4514, %v4730
        %v4775 = vadd.f32 %v4515, %v4730
        %v4776 = vadd.f32 %v4516, %v4730
        %v4777 = vadd.f32 %v4517, %v4730
        %v4778 = vadd.f32 %v4518, %v4730
        %v4779 = vadd.f32 %v4519, %v4730
        %v4780 = vadd.f32 %v4520, %v4730
        %v4781 = vadd.f32 %v4521, %v4730
        %v4782 = vadd.f32 %v4522, %v4730
        %v4783 = vadd.f32 %v4523, %v4730
        %v4784 = vadd.f32 %v4524, %v4730
        %v4785 = vadd.f32 %v4525, %v4730
        %v4786 = vadd.f32 %v4526, %v4730
        %v4787 = vadd.f32 %v4527, %v4730
        %v4788 = vadd.f32 %v4528, %v4730
        %v4789 = vadd.f32 %v4529, %v4730
        %v4790 = vadd.f32 %v4530, %v4730
        %v4791 = vadd.f32 %v4531, %v4730
        %v4792 = vadd.f32 %v4532, %v4730
        %v4793 = vadd.f32 %v4533, %v4730
        %v4794 = vadd.f32 %v4534, %v4730
        %v4795 = vadd.f32 %v4535, %v4730
        %v4796 = vadd.f32 %v4536, %v4730
        %v4797 = vadd.f32 %v4537, %v4730
        %v4798 = vadd.f32 %v4538, %v4730
        %v4799 = vadd.f32 %v4539, %v4730
        %v4800 = vadd.f32 %v4540, %v4730
        %v4801 = vadd.f32 %v4541, %v4730
        %v4802 = vadd.f32 %v4542, %v4730
        %v4803 = vadd.f32 %v4543, %v4730
        %v4804 = vadd.f32 %v4544, %v4730
        %v4805 = vadd.f32 %v4545, %v4730
        %v4806 = vadd.f32 %v4546, %v4730
        %v4807 = vadd.f32 %v4547, %v4730
        %v4808 = vadd.f32 %v4548, %v4730
        %v4809 = vadd.f32 %v4549, %v4730
        %v4810 = vadd.f32 %v4550, %v4730
        %v4811 = vadd.f32 %v4551, %v4730
        %v4812 = vadd.f32 %v4552, %v4730
        %v4813 = vadd.f32 %v4553, %v4730
        %v4814 = vadd.f32 %v4554, %v4730
        %v4815 = vadd.f32 %v4555, %v4730
        %v4816 = vadd.f32 %v4556, %v4730
        %v4817 = vadd.f32 %v4557, %v4730
        %v4818 = vadd.f32 %v4558, %v4730
        %v4819 = vadd.f32 %v4559, %v4730
        %v4820 = vadd.f32 %v4560, %v4730
        %v4821 = vadd.f32 %v4561, %v4730
        %v4822 = vadd.f32 %v4562, %v4730
        %v4823 = vadd.f32 %v4563, %v4730
        %v4824 = vadd.f32 %v4564, %v4730
        %v4825 = vadd.f32 %v4565, %v4730
        %v4826 = vadd.f32 %v4566, %v4730
        %v4827 = vadd.f32 %v4567, %v4730
        %v4828 = vadd.f32 %v4568, %v4730
        %v4829 = vadd.f32 %v4569, %v4730
        %v4830 = vadd.f32 %v4570, %v4730
        %v4831 = vadd.f32 %v4571, %v4730
        %v4832 = vadd.f32 %v4572, %v4730
        %v4833 = vadd.f32 %v4573, %v4730
        %v4834 = vadd.f32 %v4574, %v4730
        %v4835 = vadd.f32 %v4575, %v4730
        %v4836 = vadd.f32 %v4576, %v4730
        %v4837 = vadd.f32 %v4577, %v4730
        %v4838 = vadd.f32 %v4578, %v4730
        %v4839 = vadd.f32 %v4579, %v4730
        %v4840 = vadd.f32 %v4580, %v4730
        %v4841 = vadd.f32 %v4581, %v4730
        %v4842 = vadd.f32 %v4582, %v4730
        %v4843 = vadd.f32 %v4583, %v4730
        %v4844 = vadd.f32 %v4584, %v4730
        %v4845 = vadd.f32 %v4585, %v4730
        %v4846 = vadd.f32 %v4586, %v4730
        %v4847 = vadd.f32 %v4587, %v4730
        %v4848 = vadd.f32 %v4588, %v4730
        %v4849 = vadd.f32 %v4589, %v4730
        %v4850 = vadd.f32 %v4590, %v4730
        %v4851 = vadd.f32 %v4591, %v4730
        %v4852 = vadd.f32 %v4592, %v4730
        %v4853 = vadd.f32 %v4593, %v4730
        %v4854 = vadd.f32 %v4594, %v4730
        %v4855 = vadd.f32 %v4595, %v4730
        %v4856 = vadd.f32 %v4596, %v4730
        %v4857 = vadd.f32 %v4597, %v4730
        %v4858 = vadd.f32 %v4598, %v4730
        %v4859 = vadd.f32 %v4599, %v4730
        %v4860 = vadd.f32 %v4600, %v4730
        %v4861 = vadd.f32 %v4601, %v4730
        %v4862 = vadd.f32 %v4602, %v4730
        %v4863 = vadd.f32 %v4603, %v4730
        %v4864 = vadd.f32 %v4604, %v4730
        %v4865 = vadd.f32 %v4605, %v4730
        %v4866 = vadd.f32 %v4606, %v4730
        %v4867 = vadd.f32 %v4607, %v4730
        %v4868 = vadd.f32 %v4608, %v4730
        %v4869 = vadd.f32 %v4609, %v4730
        %v4870 = vadd.f32 %v4610, %v4730
        %v4871 = vadd.f32 %v4611, %v4730
        %v4872 = vadd.f32 %v4612, %v4730
        %v4873 = vadd.f32 %v4613, %v4730
        %v4874 = vadd.f32 %v4614, %v4730
        %v4875 = vadd.f32 %v4615, %v4730
        %v4876 = vadd.f32 %v4616, %v4730
        %v4877 = vadd.f32 %v4617, %v4730
        %v4878 = vadd.f32 %v4618, %v4730
        %v4879 = vadd.f32 %v4619, %v4730
        %v4880 = vadd.f32 %v4620, %v4730
        %v4881 = vadd.f32 %v4621, %v4730
        %v4882 = vadd.f32 %v4622, %v4730
        %v4883 = vadd.f32 %v4623, %v4730
        %v4884 = vadd.f32 %v4624, %v4730
        %v4885 = vadd.f32 %v4625, %v4730
        %v4886 = vadd.f32 %v4626, %v4730
        %v4887 = vadd.f32 %v4627, %v4730
        %v4888 = vadd.f32 %v4628, %v4730
        %v4889 = vadd.f32 %v4629, %v4730
        %v4890 = vadd.f32 %v4630, %v4730
        %v4891 = vadd.f32 %v4631, %v4730
        %v4892 = vadd.f32 %v4632, %v4730
        %v4893 = vadd.f32 %v4633, %v4730
        %v4894 = vadd.f32 %v4634, %v4730
        %v4895 = vadd.f32 %v4635, %v4730
        %v4896 = vadd.f32 %v4636, %v4730
        %v4897 = vadd.f32 %v4637, %v4730
        %v4898 = vadd.f32 %v4638, %v4730
        %v4899 = vadd.f32 %v4639, %v4730
        %v4900 = vadd.f32 %v4640, %v4730
        %v4901 = vadd.f32 %v4641, %v4730
        %v4902 = vadd.f32 %v4642, %v4730
        %v4903 = vadd.f32 %v4643, %v4730
        %v4904 = vadd.f32 %v4644, %v4730
        %v4905 = vadd.f32 %v4645, %v4730
        %v4906 = vadd.f32 %v4646, %v4730
        %v4907 = vadd.f32 %v4647, %v4730
        %v4908 = vadd.f32 %v4648, %v4730
        %v4909 = vadd.f32 %v4649, %v4730
        %v4910 = vadd.f32 %v4650, %v4730
        %v4911 = vadd.f32 %v4651, %v4730
        %v4912 = vadd.f32 %v4652, %v4730
        %v4913 = vadd.f32 %v4653, %v4730
        %v4914 = vadd.f32 %v4654, %v4730
        %v4915 = vadd.f32 %v4655, %v4730
        %v4916 = vadd.f32 %v4656, %v4730
        %v4917 = vadd.f32 %v4657, %v4730
        %v4918 = vadd.f32 %v4658, %v4730
        %v4919 = vadd.f32 %v4659, %v4730
        %v4920 = vadd.f32 %v4660, %v4730
        %v4921 = vadd.f32 %v4661, %v4730
        %v4922 = vadd.f32 %v4662, %v4730
        %v4923 = vadd.f32 %v4663, %v4730
        %v4924 = vadd.f32 %v4664, %v4730
        %v4925 = vadd.f32 %v4665, %v4730
        %v4926 = vadd.f32 %v4666, %v4730
        %v4927 = vadd.f32 %v4667, %v4730
        %v4928 = vadd.f32 %v4668, %v4730
        %v4929 = vadd.f32 %v4669, %v4730
        %v4930 = vadd.f32 %v4670, %v4730
        %v4931 = vadd.f32 %v4671, %v4730
        %v4932 = vadd.f32 %v4672, %v4730
        %v4933 = vadd.f32 %v4673, %v4730
        %v4934 = vadd.f32 %v4674, %v4730
        %v4935 = vadd.f32 %v4675, %v4730
        %v4936 = vadd.f32 %v4676, %v4730
        %v4937 = vadd.f32 %v4677, %v4730
        %v4938 = vadd.f32 %v4678, %v4730
        %v4939 = vadd.f32 %v4679, %v4730
        %v4940 = vadd.f32 %v4680, %v4730
        %v4941 = vadd.f32 %v4681, %v4730
        %v4942 = vadd.f32 %v4682, %v4730
        %v4943 = vadd.f32 %v4683, %v4730
        %v4944 = vadd.f32 %v4684, %v4730
        %v4945 = vadd.f32 %v4685, %v4730
        %v4946 = vadd.f32 %v4686, %v4730
        %v4947 = vadd.f32 %v4687, %v4730
        %v4948 = vadd.f32 %v4688, %v4730
        %v4949 = vadd.f32 %v4689, %v4730
        %v4950 = vadd.f32 %v4690, %v4730
        %v4951 = vadd.f32 %v4691, %v4730
        %v4952 = vadd.f32 %v4692, %v4730
        %v4953 = vadd.f32 %v4693, %v4730
        %v4954 = vadd.f32 %v4694, %v4730
        %v4955 = vadd.f32 %v4695, %v4730
        %v4956 = vadd.f32 %v4696, %v4730
        %v4957 = vadd.f32 %v4697, %v4730
        %v4958 = vadd.f32 %v4698, %v4730
        %v4959 = vadd.f32 %v4699, %v4730
        %v4960 = vadd.f32 %v4700, %v4730
        %v4961 = vadd.f32 %v4701, %v4730
        %v4962 = vadd.f32 %v4702, %v4730
        %v4963 = vadd.f32 %v4703, %v4730
        %v4964 = vadd.f32 %v4704, %v4730
        %v4965 = vadd.f32 %v4705, %v4730
        %v4966 = vadd.f32 %v4706, %v4730
        %v4967 = vadd.f32 %v4707, %v4730
        %v4968 = vadd.f32 %v4708, %v4730
        %v4969 = vadd.f32 %v4709, %v4730
        %v4970 = vadd.f32 %v4710, %v4730
        %v4971 = vadd.f32 %v4711, %v4730
        %v4972 = vadd.f32 %v4712, %v4730
        %v4973 = vadd.f32 %v4713, %v4730
        %v4974 = vadd.f32 %v4714, %v4730
        %v4975 = vadd.f32 %v4715, %v4730
        %v4976 = vadd.f32 %v4716, %v4730
        %v4977 = vadd.f32 %v4717, %v4730
        %v4978 = vadd.f32 %v4718, %v4730
        %v4979 = vadd.f32 %v4719, %v4730
        %v4980 = vadd.f32 %v4720, %v4730
        %v4981 = vadd.f32 %v4721, %v4730
        %v4982 = vadd.f32 %v4722, %v4730
        %v4983 = vadd.f32 %v4723, %v4730
        %v4984 = vadd.f32 %v4724, %v4730
        %v4985 = vadd.f32 %v4725, %v4730
        %v4986 = vadd.f32 %v4726, %v4730
        %v4987 = vadd.f32 %v4727, %v4730
        %v4988 = vmax.f32 %v4732, 0.0
        %v4989 = vmax.f32 %v4733, 0.0
        %v4990 = vmax.f32 %v4734, 0.0
        %v4991 = vmax.f32 %v4735, 0.0
        %v4992 = vmax.f32 %v4736, 0.0
        %v4993 = vmax.f32 %v4737, 0.0
        %v4994 = vmax.f32 %v4738, 0.0
        %v4995 = vmax.f32 %v4739, 0.0
        %v4996 = vmax.f32 %v4740, 0.0
        %v4997 = vmax.f32 %v4741, 0.0
        %v4998 = vmax.f32 %v4742, 0.0
        %v4999 = vmax.f32 %v4743, 0.0
        %v5000 = vmax.f32 %v4744, 0.0
        %v5001 = vmax.f32 %v4745, 0.0
        %v5002 = vmax.f32 %v4746, 0.0
        %v5003 = vmax.f32 %v4747, 0.0
        %v5004 = vmax.f32 %v4748, 0.0
        %v5005 = vmax.f32 %v4749, 0.0
        %v5006 = vmax.f32 %v4750, 0.0
        %v5007 = vmax.f32 %v4751, 0.0
        %v5008 = vmax.f32 %v4752, 0.0
        %v5009 = vmax.f32 %v4753, 0.0
        %v5010 = vmax.f32 %v4754, 0.0
        %v5011 = vmax.f32 %v4755, 0.0
        %v5012 = vmax.f32 %v4756, 0.0
        %v5013 = vmax.f32 %v4757, 0.0
        %v5014 = vmax.f32 %v4758, 0.0
        %v5015 = vmax.f32 %v4759, 0.0
        %v5016 = vmax.f32 %v4760, 0.0
        %v5017 = vmax.f32 %v4761, 0.0
        %v5018 = vmax.f32 %v4762, 0.0
        %v5019 = vmax.f32 %v4763, 0.0
        %v5020 = vmax.f32 %v4764, 0.0
        %v5021 = vmax.f32 %v4765, 0.0
        %v5022 = vmax.f32 %v4766, 0.0
        %v5023 = vmax.f32 %v4767, 0.0
        %v5024 = vmax.f32 %v4768, 0.0
        %v5025 = vmax.f32 %v4769, 0.0
        %v5026 = vmax.f32 %v4770, 0.0
        %v5027 = vmax.f32 %v4771, 0.0
        %v5028 = vmax.f32 %v4772, 0.0
        %v5029 = vmax.f32 %v4773, 0.0
        %v5030 = vmax.f32 %v4774, 0.0
        %v5031 = vmax.f32 %v4775, 0.0
        %v5032 = vmax.f32 %v4776, 0.0
        %v5033 = vmax.f32 %v4777, 0.0
        %v5034 = vmax.f32 %v4778, 0.0
        %v5035 = vmax.f32 %v4779, 0.0
        %v5036 = vmax.f32 %v4780, 0.0
        %v5037 = vmax.f32 %v4781, 0.0
        %v5038 = vmax.f32 %v4782, 0.0
        %v5039 = vmax.f32 %v4783, 0.0
        %v5040 = vmax.f32 %v4784, 0.0
        %v5041 = vmax.f32 %v4785, 0.0
        %v5042 = vmax.f32 %v4786, 0.0
        %v5043 = vmax.f32 %v4787, 0.0
        %v5044 = vmax.f32 %v4788, 0.0
        %v5045 = vmax.f32 %v4789, 0.0
        %v5046 = vmax.f32 %v4790, 0.0
        %v5047 = vmax.f32 %v4791, 0.0
        %v5048 = vmax.f32 %v4792, 0.0
        %v5049 = vmax.f32 %v4793, 0.0
        %v5050 = vmax.f32 %v4794, 0.0
        %v5051 = vmax.f32 %v4795, 0.0
        %v5052 = vmax.f32 %v4796, 0.0
        %v5053 = vmax.f32 %v4797, 0.0
        %v5054 = vmax.f32 %v4798, 0.0
        %v5055 = vmax.f32 %v4799, 0.0
        %v5056 = vmax.f32 %v4800, 0.0
        %v5057 = vmax.f32 %v4801, 0.0
        %v5058 = vmax.f32 %v4802, 0.0
        %v5059 = vmax.f32 %v4803, 0.0
        %v5060 = vmax.f32 %v4804, 0.0
        %v5061 = vmax.f32 %v4805, 0.0
        %v5062 = vmax.f32 %v4806, 0.0
        %v5063 = vmax.f32 %v4807, 0.0
        %v5064 = vmax.f32 %v4808, 0.0
        %v5065 = vmax.f32 %v4809, 0.0
        %v5066 = vmax.f32 %v4810, 0.0
        %v5067 = vmax.f32 %v4811, 0.0
        %v5068 = vmax.f32 %v4812, 0.0
        %v5069 = vmax.f32 %v4813, 0.0
        %v5070 = vmax.f32 %v4814, 0.0
        %v5071 = vmax.f32 %v4815, 0.0
        %v5072 = vmax.f32 %v4816, 0.0
        %v5073 = vmax.f32 %v4817, 0.0
        %v5074 = vmax.f32 %v4818, 0.0
        %v5075 = vmax.f32 %v4819, 0.0
        %v5076 = vmax.f32 %v4820, 0.0
        %v5077 = vmax.f32 %v4821, 0.0
        %v5078 = vmax.f32 %v4822, 0.0
        %v5079 = vmax.f32 %v4823, 0.0
        %v5080 = vmax.f32 %v4824, 0.0
        %v5081 = vmax.f32 %v4825, 0.0
        %v5082 = vmax.f32 %v4826, 0.0
        %v5083 = vmax.f32 %v4827, 0.0
        %v5084 = vmax.f32 %v4828, 0.0
        %v5085 = vmax.f32 %v4829, 0.0
        %v5086 = vmax.f32 %v4830, 0.0
        %v5087 = vmax.f32 %v4831, 0.0
        %v5088 = vmax.f32 %v4832, 0.0
        %v5089 = vmax.f32 %v4833, 0.0
        %v5090 = vmax.f32 %v4834, 0.0
        %v5091 = vmax.f32 %v4835, 0.0
        %v5092 = vmax.f32 %v4836, 0.0
        %v5093 = vmax.f32 %v4837, 0.0
        %v5094 = vmax.f32 %v4838, 0.0
        %v5095 = vmax.f32 %v4839, 0.0
        %v5096 = vmax.f32 %v4840, 0.0
        %v5097 = vmax.f32 %v4841, 0.0
        %v5098 = vmax.f32 %v4842, 0.0
        %v5099 = vmax.f32 %v4843, 0.0
        %v5100 = vmax.f32 %v4844, 0.0
        %v5101 = vmax.f32 %v4845, 0.0
        %v5102 = vmax.f32 %v4846, 0.0
        %v5103 = vmax.f32 %v4847, 0.0
        %v5104 = vmax.f32 %v4848, 0.0
        %v5105 = vmax.f32 %v4849, 0.0
        %v5106 = vmax.f32 %v4850, 0.0
        %v5107 = vmax.f32 %v4851, 0.0
        %v5108 = vmax.f32 %v4852, 0.0
        %v5109 = vmax.f32 %v4853, 0.0
        %v5110 = vmax.f32 %v4854, 0.0
        %v5111 = vmax.f32 %v4855, 0.0
        %v5112 = vmax.f32 %v4856, 0.0
        %v5113 = vmax.f32 %v4857, 0.0
        %v5114 = vmax.f32 %v4858, 0.0
        %v5115 = vmax.f32 %v4859, 0.0
        %v5116 = vmax.f32 %v4860, 0.0
        %v5117 = vmax.f32 %v4861, 0.0
        %v5118 = vmax.f32 %v4862, 0.0
        %v5119 = vmax.f32 %v4863, 0.0
        %v5120 = vmax.f32 %v4864, 0.0
        %v5121 = vmax.f32 %v4865, 0.0
        %v5122 = vmax.f32 %v4866, 0.0
        %v5123 = vmax.f32 %v4867, 0.0
        %v5124 = vmax.f32 %v4868, 0.0
        %v5125 = vmax.f32 %v4869, 0.0
        %v5126 = vmax.f32 %v4870, 0.0
        %v5127 = vmax.f32 %v4871, 0.0
        %v5128 = vmax.f32 %v4872, 0.0
        %v5129 = vmax.f32 %v4873, 0.0
        %v5130 = vmax.f32 %v4874, 0.0
        %v5131 = vmax.f32 %v4875, 0.0
        %v5132 = vmax.f32 %v4876, 0.0
        %v5133 = vmax.f32 %v4877, 0.0
        %v5134 = vmax.f32 %v4878, 0.0
        %v5135 = vmax.f32 %v4879, 0.0
        %v5136 = vmax.f32 %v4880, 0.0
        %v5137 = vmax.f32 %v4881, 0.0
        %v5138 = vmax.f32 %v4882, 0.0
        %v5139 = vmax.f32 %v4883, 0.0
        %v5140 = vmax.f32 %v4884, 0.0
        %v5141 = vmax.f32 %v4885, 0.0
        %v5142 = vmax.f32 %v4886, 0.0
        %v5143 = vmax.f32 %v4887, 0.0
        %v5144 = vmax.f32 %v4888, 0.0
        %v5145 = vmax.f32 %v4889, 0.0
        %v5146 = vmax.f32 %v4890, 0.0
        %v5147 = vmax.f32 %v4891, 0.0
        %v5148 = vmax.f32 %v4892, 0.0
        %v5149 = vmax.f32 %v4893, 0.0
        %v5150 = vmax.f32 %v4894, 0.0
        %v5151 = vmax.f32 %v4895, 0.0
        %v5152 = vmax.f32 %v4896, 0.0
        %v5153 = vmax.f32 %v4897, 0.0
        %v5154 = vmax.f32 %v4898, 0.0
        %v5155 = vmax.f32 %v4899, 0.0
        %v5156 = vmax.f32 %v4900, 0.0
        %v5157 = vmax.f32 %v4901, 0.0
        %v5158 = vmax.f32 %v4902, 0.0
        %v5159 = vmax.f32 %v4903, 0.0
        %v5160 = vmax.f32 %v4904, 0.0
        %v5161 = vmax.f32 %v4905, 0.0
        %v5162 = vmax.f32 %v4906, 0.0
        %v5163 = vmax.f32 %v4907, 0.0
        %v5164 = vmax.f32 %v4908, 0.0
        %v5165 = vmax.f32 %v4909, 0.0
        %v5166 = vmax.f32 %v4910, 0.0
        %v5167 = vmax.f32 %v4911, 0.0
        %v5168 = vmax.f32 %v4912, 0.0
        %v5169 = vmax.f32 %v4913, 0.0
        %v5170 = vmax.f32 %v4914, 0.0
        %v5171 = vmax.f32 %v4915, 0.0
        %v5172 = vmax.f32 %v4916, 0.0
        %v5173 = vmax.f32 %v4917, 0.0
        %v5174 = vmax.f32 %v4918, 0.0
        %v5175 = vmax.f32 %v4919, 0.0
        %v5176 = vmax.f32 %v4920, 0.0
        %v5177 = vmax.f32 %v4921, 0.0
        %v5178 = vmax.f32 %v4922, 0.0
        %v5179 = vmax.f32 %v4923, 0.0
        %v5180 = vmax.f32 %v4924, 0.0
        %v5181 = vmax.f32 %v4925, 0.0
        %v5182 = vmax.f32 %v4926, 0.0
        %v5183 = vmax.f32 %v4927, 0.0
        %v5184 = vmax.f32 %v4928, 0.0
        %v5185 = vmax.f32 %v4929, 0.0
        %v5186 = vmax.f32 %v4930, 0.0
        %v5187 = vmax.f32 %v4931, 0.0
        %v5188 = vmax.f32 %v4932, 0.0
        %v5189 = vmax.f32 %v4933, 0.0
        %v5190 = vmax.f32 %v4934, 0.0
        %v5191 = vmax.f32 %v4935, 0.0
        %v5192 = vmax.f32 %v4936, 0.0
        %v5193 = vmax.f32 %v4937, 0.0
        %v5194 = vmax.f32 %v4938, 0.0
        %v5195 = vmax.f32 %v4939, 0.0
        %v5196 = vmax.f32 %v4940, 0.0
        %v5197 = vmax.f32 %v4941, 0.0
        %v5198 = vmax.f32 %v4942, 0.0
        %v5199 = vmax.f32 %v4943, 0.0
        %v5200 = vmax.f32 %v4944, 0.0
        %v5201 = vmax.f32 %v4945, 0.0
        %v5202 = vmax.f32 %v4946, 0.0
        %v5203 = vmax.f32 %v4947, 0.0
        %v5204 = vmax.f32 %v4948, 0.0
        %v5205 = vmax.f32 %v4949, 0.0
        %v5206 = vmax.f32 %v4950, 0.0
        %v5207 = vmax.f32 %v4951, 0.0
        %v5208 = vmax.f32 %v4952, 0.0
        %v5209 = vmax.f32 %v4953, 0.0
        %v5210 = vmax.f32 %v4954, 0.0
        %v5211 = vmax.f32 %v4955, 0.0
        %v5212 = vmax.f32 %v4956, 0.0
        %v5213 = vmax.f32 %v4957, 0.0
        %v5214 = vmax.f32 %v4958, 0.0
        %v5215 = vmax.f32 %v4959, 0.0
        %v5216 = vmax.f32 %v4960, 0.0
        %v5217 = vmax.f32 %v4961, 0.0
        %v5218 = vmax.f32 %v4962, 0.0
        %v5219 = vmax.f32 %v4963, 0.0
        %v5220 = vmax.f32 %v4964, 0.0
        %v5221 = vmax.f32 %v4965, 0.0
        %v5222 = vmax.f32 %v4966, 0.0
        %v5223 = vmax.f32 %v4967, 0.0
        %v5224 = vmax.f32 %v4968, 0.0
        %v5225 = vmax.f32 %v4969, 0.0
        %v5226 = vmax.f32 %v4970, 0.0
        %v5227 = vmax.f32 %v4971, 0.0
        %v5228 = vmax.f32 %v4972, 0.0
        %v5229 = vmax.f32 %v4973, 0.0
        %v5230 = vmax.f32 %v4974, 0.0
        %v5231 = vmax.f32 %v4975, 0.0
        %v5232 = vmax.f32 %v4976, 0.0
        %v5233 = vmax.f32 %v4977, 0.0
        %v5234 = vmax.f32 %v4978, 0.0
        %v5235 = vmax.f32 %v4979, 0.0
        %v5236 = vmax.f32 %v4980, 0.0
        %v5237 = vmax.f32 %v4981, 0.0
        %v5238 = vmax.f32 %v4982, 0.0
        %v5239 = vmax.f32 %v4983, 0.0
        %v5240 = vmax.f32 %v4984, 0.0
        %v5241 = vmax.f32 %v4985, 0.0
        %v5242 = vmax.f32 %v4986, 0.0
        %v5243 = vmax.f32 %v4987, 0.0
        %v5244 = vpack.c.bf16 %v4988, %v4988
        %v5245 = vpack.c.bf16 %v4989, %v4989
        %v5246 = vpack.c.bf16 %v4990, %v4990
        %v5247 = vpack.c.bf16 %v4991, %v4991
        %v5248 = vpack.c.bf16 %v4992, %v4992
        %v5249 = vpack.c.bf16 %v4993, %v4993
        %v5250 = vpack.c.bf16 %v4994, %v4994
        %v5251 = vpack.c.bf16 %v4995, %v4995
        %v5252 = vpack.c.bf16 %v4996, %v4996
        %v5253 = vpack.c.bf16 %v4997, %v4997
        %v5254 = vpack.c.bf16 %v4998, %v4998
        %v5255 = vpack.c.bf16 %v4999, %v4999
        %v5256 = vpack.c.bf16 %v5000, %v5000
        %v5257 = vpack.c.bf16 %v5001, %v5001
        %v5258 = vpack.c.bf16 %v5002, %v5002
        %v5259 = vpack.c.bf16 %v5003, %v5003
        %v5260 = vpack.c.bf16 %v5004, %v5004
        %v5261 = vpack.c.bf16 %v5005, %v5005
        %v5262 = vpack.c.bf16 %v5006, %v5006
        %v5263 = vpack.c.bf16 %v5007, %v5007
        %v5264 = vpack.c.bf16 %v5008, %v5008
        %v5265 = vpack.c.bf16 %v5009, %v5009
        %v5266 = vpack.c.bf16 %v5010, %v5010
        %v5267 = vpack.c.bf16 %v5011, %v5011
        %v5268 = vpack.c.bf16 %v5012, %v5012
        %v5269 = vpack.c.bf16 %v5013, %v5013
        %v5270 = vpack.c.bf16 %v5014, %v5014
        %v5271 = vpack.c.bf16 %v5015, %v5015
        %v5272 = vpack.c.bf16 %v5016, %v5016
        %v5273 = vpack.c.bf16 %v5017, %v5017
        %v5274 = vpack.c.bf16 %v5018, %v5018
        %v5275 = vpack.c.bf16 %v5019, %v5019
        %v5276 = vpack.c.bf16 %v5020, %v5020
        %v5277 = vpack.c.bf16 %v5021, %v5021
        %v5278 = vpack.c.bf16 %v5022, %v5022
        %v5279 = vpack.c.bf16 %v5023, %v5023
        %v5280 = vpack.c.bf16 %v5024, %v5024
        %v5281 = vpack.c.bf16 %v5025, %v5025
        %v5282 = vpack.c.bf16 %v5026, %v5026
        %v5283 = vpack.c.bf16 %v5027, %v5027
        %v5284 = vpack.c.bf16 %v5028, %v5028
        %v5285 = vpack.c.bf16 %v5029, %v5029
        %v5286 = vpack.c.bf16 %v5030, %v5030
        %v5287 = vpack.c.bf16 %v5031, %v5031
        %v5288 = vpack.c.bf16 %v5032, %v5032
        %v5289 = vpack.c.bf16 %v5033, %v5033
        %v5290 = vpack.c.bf16 %v5034, %v5034
        %v5291 = vpack.c.bf16 %v5035, %v5035
        %v5292 = vpack.c.bf16 %v5036, %v5036
        %v5293 = vpack.c.bf16 %v5037, %v5037
        %v5294 = vpack.c.bf16 %v5038, %v5038
        %v5295 = vpack.c.bf16 %v5039, %v5039
        %v5296 = vpack.c.bf16 %v5040, %v5040
        %v5297 = vpack.c.bf16 %v5041, %v5041
        %v5298 = vpack.c.bf16 %v5042, %v5042
        %v5299 = vpack.c.bf16 %v5043, %v5043
        %v5300 = vpack.c.bf16 %v5044, %v5044
        %v5301 = vpack.c.bf16 %v5045, %v5045
        %v5302 = vpack.c.bf16 %v5046, %v5046
        %v5303 = vpack.c.bf16 %v5047, %v5047
        %v5304 = vpack.c.bf16 %v5048, %v5048
        %v5305 = vpack.c.bf16 %v5049, %v5049
        %v5306 = vpack.c.bf16 %v5050, %v5050
        %v5307 = vpack.c.bf16 %v5051, %v5051
        %v5308 = vpack.c.bf16 %v5052, %v5052
        %v5309 = vpack.c.bf16 %v5053, %v5053
        %v5310 = vpack.c.bf16 %v5054, %v5054
        %v5311 = vpack.c.bf16 %v5055, %v5055
        %v5312 = vpack.c.bf16 %v5056, %v5056
        %v5313 = vpack.c.bf16 %v5057, %v5057
        %v5314 = vpack.c.bf16 %v5058, %v5058
        %v5315 = vpack.c.bf16 %v5059, %v5059
        %v5316 = vpack.c.bf16 %v5060, %v5060
        %v5317 = vpack.c.bf16 %v5061, %v5061
        %v5318 = vpack.c.bf16 %v5062, %v5062
        %v5319 = vpack.c.bf16 %v5063, %v5063
        %v5320 = vpack.c.bf16 %v5064, %v5064
        %v5321 = vpack.c.bf16 %v5065, %v5065
        %v5322 = vpack.c.bf16 %v5066, %v5066
        %v5323 = vpack.c.bf16 %v5067, %v5067
        %v5324 = vpack.c.bf16 %v5068, %v5068
        %v5325 = vpack.c.bf16 %v5069, %v5069
        %v5326 = vpack.c.bf16 %v5070, %v5070
        %v5327 = vpack.c.bf16 %v5071, %v5071
        %v5328 = vpack.c.bf16 %v5072, %v5072
        %v5329 = vpack.c.bf16 %v5073, %v5073
        %v5330 = vpack.c.bf16 %v5074, %v5074
        %v5331 = vpack.c.bf16 %v5075, %v5075
        %v5332 = vpack.c.bf16 %v5076, %v5076
        %v5333 = vpack.c.bf16 %v5077, %v5077
        %v5334 = vpack.c.bf16 %v5078, %v5078
        %v5335 = vpack.c.bf16 %v5079, %v5079
        %v5336 = vpack.c.bf16 %v5080, %v5080
        %v5337 = vpack.c.bf16 %v5081, %v5081
        %v5338 = vpack.c.bf16 %v5082, %v5082
        %v5339 = vpack.c.bf16 %v5083, %v5083
        %v5340 = vpack.c.bf16 %v5084, %v5084
        %v5341 = vpack.c.bf16 %v5085, %v5085
        %v5342 = vpack.c.bf16 %v5086, %v5086
        %v5343 = vpack.c.bf16 %v5087, %v5087
        %v5344 = vpack.c.bf16 %v5088, %v5088
        %v5345 = vpack.c.bf16 %v5089, %v5089
        %v5346 = vpack.c.bf16 %v5090, %v5090
        %v5347 = vpack.c.bf16 %v5091, %v5091
        %v5348 = vpack.c.bf16 %v5092, %v5092
        %v5349 = vpack.c.bf16 %v5093, %v5093
        %v5350 = vpack.c.bf16 %v5094, %v5094
        %v5351 = vpack.c.bf16 %v5095, %v5095
        %v5352 = vpack.c.bf16 %v5096, %v5096
        %v5353 = vpack.c.bf16 %v5097, %v5097
        %v5354 = vpack.c.bf16 %v5098, %v5098
        %v5355 = vpack.c.bf16 %v5099, %v5099
        %v5356 = vpack.c.bf16 %v5100, %v5100
        %v5357 = vpack.c.bf16 %v5101, %v5101
        %v5358 = vpack.c.bf16 %v5102, %v5102
        %v5359 = vpack.c.bf16 %v5103, %v5103
        %v5360 = vpack.c.bf16 %v5104, %v5104
        %v5361 = vpack.c.bf16 %v5105, %v5105
        %v5362 = vpack.c.bf16 %v5106, %v5106
        %v5363 = vpack.c.bf16 %v5107, %v5107
        %v5364 = vpack.c.bf16 %v5108, %v5108
        %v5365 = vpack.c.bf16 %v5109, %v5109
        %v5366 = vpack.c.bf16 %v5110, %v5110
        %v5367 = vpack.c.bf16 %v5111, %v5111
        %v5368 = vpack.c.bf16 %v5112, %v5112
        %v5369 = vpack.c.bf16 %v5113, %v5113
        %v5370 = vpack.c.bf16 %v5114, %v5114
        %v5371 = vpack.c.bf16 %v5115, %v5115
        %v5372 = vpack.c.bf16 %v5116, %v5116
        %v5373 = vpack.c.bf16 %v5117, %v5117
        %v5374 = vpack.c.bf16 %v5118, %v5118
        %v5375 = vpack.c.bf16 %v5119, %v5119
        %v5376 = vpack.c.bf16 %v5120, %v5120
        %v5377 = vpack.c.bf16 %v5121, %v5121
        %v5378 = vpack.c.bf16 %v5122, %v5122
        %v5379 = vpack.c.bf16 %v5123, %v5123
        %v5380 = vpack.c.bf16 %v5124, %v5124
        %v5381 = vpack.c.bf16 %v5125, %v5125
        %v5382 = vpack.c.bf16 %v5126, %v5126
        %v5383 = vpack.c.bf16 %v5127, %v5127
        %v5384 = vpack.c.bf16 %v5128, %v5128
        %v5385 = vpack.c.bf16 %v5129, %v5129
        %v5386 = vpack.c.bf16 %v5130, %v5130
        %v5387 = vpack.c.bf16 %v5131, %v5131
        %v5388 = vpack.c.bf16 %v5132, %v5132
        %v5389 = vpack.c.bf16 %v5133, %v5133
        %v5390 = vpack.c.bf16 %v5134, %v5134
        %v5391 = vpack.c.bf16 %v5135, %v5135
        %v5392 = vpack.c.bf16 %v5136, %v5136
        %v5393 = vpack.c.bf16 %v5137, %v5137
        %v5394 = vpack.c.bf16 %v5138, %v5138
        %v5395 = vpack.c.bf16 %v5139, %v5139
        %v5396 = vpack.c.bf16 %v5140, %v5140
        %v5397 = vpack.c.bf16 %v5141, %v5141
        %v5398 = vpack.c.bf16 %v5142, %v5142
        %v5399 = vpack.c.bf16 %v5143, %v5143
        %v5400 = vpack.c.bf16 %v5144, %v5144
        %v5401 = vpack.c.bf16 %v5145, %v5145
        %v5402 = vpack.c.bf16 %v5146, %v5146
        %v5403 = vpack.c.bf16 %v5147, %v5147
        %v5404 = vpack.c.bf16 %v5148, %v5148
        %v5405 = vpack.c.bf16 %v5149, %v5149
        %v5406 = vpack.c.bf16 %v5150, %v5150
        %v5407 = vpack.c.bf16 %v5151, %v5151
        %v5408 = vpack.c.bf16 %v5152, %v5152
        %v5409 = vpack.c.bf16 %v5153, %v5153
        %v5410 = vpack.c.bf16 %v5154, %v5154
        %v5411 = vpack.c.bf16 %v5155, %v5155
        %v5412 = vpack.c.bf16 %v5156, %v5156
        %v5413 = vpack.c.bf16 %v5157, %v5157
        %v5414 = vpack.c.bf16 %v5158, %v5158
        %v5415 = vpack.c.bf16 %v5159, %v5159
        %v5416 = vpack.c.bf16 %v5160, %v5160
        %v5417 = vpack.c.bf16 %v5161, %v5161
        %v5418 = vpack.c.bf16 %v5162, %v5162
        %v5419 = vpack.c.bf16 %v5163, %v5163
        %v5420 = vpack.c.bf16 %v5164, %v5164
        %v5421 = vpack.c.bf16 %v5165, %v5165
        %v5422 = vpack.c.bf16 %v5166, %v5166
        %v5423 = vpack.c.bf16 %v5167, %v5167
        %v5424 = vpack.c.bf16 %v5168, %v5168
        %v5425 = vpack.c.bf16 %v5169, %v5169
        %v5426 = vpack.c.bf16 %v5170, %v5170
        %v5427 = vpack.c.bf16 %v5171, %v5171
        %v5428 = vpack.c.bf16 %v5172, %v5172
        %v5429 = vpack.c.bf16 %v5173, %v5173
        %v5430 = vpack.c.bf16 %v5174, %v5174
        %v5431 = vpack.c.bf16 %v5175, %v5175
        %v5432 = vpack.c.bf16 %v5176, %v5176
        %v5433 = vpack.c.bf16 %v5177, %v5177
        %v5434 = vpack.c.bf16 %v5178, %v5178
        %v5435 = vpack.c.bf16 %v5179, %v5179
        %v5436 = vpack.c.bf16 %v5180, %v5180
        %v5437 = vpack.c.bf16 %v5181, %v5181
        %v5438 = vpack.c.bf16 %v5182, %v5182
        %v5439 = vpack.c.bf16 %v5183, %v5183
        %v5440 = vpack.c.bf16 %v5184, %v5184
        %v5441 = vpack.c.bf16 %v5185, %v5185
        %v5442 = vpack.c.bf16 %v5186, %v5186
        %v5443 = vpack.c.bf16 %v5187, %v5187
        %v5444 = vpack.c.bf16 %v5188, %v5188
        %v5445 = vpack.c.bf16 %v5189, %v5189
        %v5446 = vpack.c.bf16 %v5190, %v5190
        %v5447 = vpack.c.bf16 %v5191, %v5191
        %v5448 = vpack.c.bf16 %v5192, %v5192
        %v5449 = vpack.c.bf16 %v5193, %v5193
        %v5450 = vpack.c.bf16 %v5194, %v5194
        %v5451 = vpack.c.bf16 %v5195, %v5195
        %v5452 = vpack.c.bf16 %v5196, %v5196
        %v5453 = vpack.c.bf16 %v5197, %v5197
        %v5454 = vpack.c.bf16 %v5198, %v5198
        %v5455 = vpack.c.bf16 %v5199, %v5199
        %v5456 = vpack.c.bf16 %v5200, %v5200
        %v5457 = vpack.c.bf16 %v5201, %v5201
        %v5458 = vpack.c.bf16 %v5202, %v5202
        %v5459 = vpack.c.bf16 %v5203, %v5203
        %v5460 = vpack.c.bf16 %v5204, %v5204
        %v5461 = vpack.c.bf16 %v5205, %v5205
        %v5462 = vpack.c.bf16 %v5206, %v5206
        %v5463 = vpack.c.bf16 %v5207, %v5207
        %v5464 = vpack.c.bf16 %v5208, %v5208
        %v5465 = vpack.c.bf16 %v5209, %v5209
        %v5466 = vpack.c.bf16 %v5210, %v5210
        %v5467 = vpack.c.bf16 %v5211, %v5211
        %v5468 = vpack.c.bf16 %v5212, %v5212
        %v5469 = vpack.c.bf16 %v5213, %v5213
        %v5470 = vpack.c.bf16 %v5214, %v5214
        %v5471 = vpack.c.bf16 %v5215, %v5215
        %v5472 = vpack.c.bf16 %v5216, %v5216
        %v5473 = vpack.c.bf16 %v5217, %v5217
        %v5474 = vpack.c.bf16 %v5218, %v5218
        %v5475 = vpack.c.bf16 %v5219, %v5219
        %v5476 = vpack.c.bf16 %v5220, %v5220
        %v5477 = vpack.c.bf16 %v5221, %v5221
        %v5478 = vpack.c.bf16 %v5222, %v5222
        %v5479 = vpack.c.bf16 %v5223, %v5223
        %v5480 = vpack.c.bf16 %v5224, %v5224
        %v5481 = vpack.c.bf16 %v5225, %v5225
        %v5482 = vpack.c.bf16 %v5226, %v5226
        %v5483 = vpack.c.bf16 %v5227, %v5227
        %v5484 = vpack.c.bf16 %v5228, %v5228
        %v5485 = vpack.c.bf16 %v5229, %v5229
        %v5486 = vpack.c.bf16 %v5230, %v5230
        %v5487 = vpack.c.bf16 %v5231, %v5231
        %v5488 = vpack.c.bf16 %v5232, %v5232
        %v5489 = vpack.c.bf16 %v5233, %v5233
        %v5490 = vpack.c.bf16 %v5234, %v5234
        %v5491 = vpack.c.bf16 %v5235, %v5235
        %v5492 = vpack.c.bf16 %v5236, %v5236
        %v5493 = vpack.c.bf16 %v5237, %v5237
        %v5494 = vpack.c.bf16 %v5238, %v5238
        %v5495 = vpack.c.bf16 %v5239, %v5239
        %v5496 = vpack.c.bf16 %v5240, %v5240
        %v5497 = vpack.c.bf16 %v5241, %v5241
        %v5498 = vpack.c.bf16 %v5242, %v5242
        %v5499 = vpack.c.bf16 %v5243, %v5243
        %vm5500 = vcmask 519168
        %5501 = vst.msk [vmem:[%s265] sm:$0xf] %vm5500, %v5244
        %5502 = vst.msk [vmem:[%s265 + $0x4] sm:$0xf] %vm5500, %v5245
        %5503 = vst.msk [vmem:[%s265 + $0x8] sm:$0xf] %vm5500, %v5246
        %5504 = vst.msk [vmem:[%s265 + $0xc] sm:$0xf] %vm5500, %v5247
        %5505 = vst.msk [vmem:[%s265 + $0x10] sm:$0xf] %vm5500, %v5248
        %5506 = vst.msk [vmem:[%s265 + $0x14] sm:$0xf] %vm5500, %v5249
        %5507 = vst.msk [vmem:[%s265 + $0x18] sm:$0xf] %vm5500, %v5250
        %5508 = vst.msk [vmem:[%s265 + $0x1c] sm:$0xf] %vm5500, %v5251
        %5509 = vst.msk [vmem:[%s265 + $0x20] sm:$0xf] %vm5500, %v5252
        %5510 = vst.msk [vmem:[%s265 + $0x24] sm:$0xf] %vm5500, %v5253
        %5511 = vst.msk [vmem:[%s265 + $0x28] sm:$0xf] %vm5500, %v5254
        %5512 = vst.msk [vmem:[%s265 + $0x2c] sm:$0xf] %vm5500, %v5255
        %5513 = vst.msk [vmem:[%s265 + $0x30] sm:$0xf] %vm5500, %v5256
        %5514 = vst.msk [vmem:[%s265 + $0x34] sm:$0xf] %vm5500, %v5257
        %5515 = vst.msk [vmem:[%s265 + $0x38] sm:$0xf] %vm5500, %v5258
        %5516 = vst.msk [vmem:[%s265 + $0x3c] sm:$0xf] %vm5500, %v5259
        %5517 = vst.msk [vmem:[%s265 + $0x40] sm:$0xf] %vm5500, %v5260
        %5518 = vst.msk [vmem:[%s265 + $0x44] sm:$0xf] %vm5500, %v5261
        %5519 = vst.msk [vmem:[%s265 + $0x48] sm:$0xf] %vm5500, %v5262
        %5520 = vst.msk [vmem:[%s265 + $0x4c] sm:$0xf] %vm5500, %v5263
        %5521 = vst.msk [vmem:[%s265 + $0x50] sm:$0xf] %vm5500, %v5264
        %5522 = vst.msk [vmem:[%s265 + $0x54] sm:$0xf] %vm5500, %v5265
        %5523 = vst.msk [vmem:[%s265 + $0x58] sm:$0xf] %vm5500, %v5266
        %5524 = vst.msk [vmem:[%s265 + $0x5c] sm:$0xf] %vm5500, %v5267
        %5525 = vst.msk [vmem:[%s265 + $0x60] sm:$0xf] %vm5500, %v5268
        %5526 = vst.msk [vmem:[%s265 + $0x64] sm:$0xf] %vm5500, %v5269
        %5527 = vst.msk [vmem:[%s265 + $0x68] sm:$0xf] %vm5500, %v5270
        %5528 = vst.msk [vmem:[%s265 + $0x6c] sm:$0xf] %vm5500, %v5271
        %5529 = vst.msk [vmem:[%s265 + $0x70] sm:$0xf] %vm5500, %v5272
        %5530 = vst.msk [vmem:[%s265 + $0x74] sm:$0xf] %vm5500, %v5273
        %5531 = vst.msk [vmem:[%s265 + $0x78] sm:$0xf] %vm5500, %v5274
        %5532 = vst.msk [vmem:[%s265 + $0x7c] sm:$0xf] %vm5500, %v5275
        %5533 = vst.msk [vmem:[%s265 + $0x80] sm:$0xf] %vm5500, %v5276
        %5534 = vst.msk [vmem:[%s265 + $0x84] sm:$0xf] %vm5500, %v5277
        %5535 = vst.msk [vmem:[%s265 + $0x88] sm:$0xf] %vm5500, %v5278
        %5536 = vst.msk [vmem:[%s265 + $0x8c] sm:$0xf] %vm5500, %v5279
        %5537 = vst.msk [vmem:[%s265 + $0x90] sm:$0xf] %vm5500, %v5280
        %5538 = vst.msk [vmem:[%s265 + $0x94] sm:$0xf] %vm5500, %v5281
        %5539 = vst.msk [vmem:[%s265 + $0x98] sm:$0xf] %vm5500, %v5282
        %5540 = vst.msk [vmem:[%s265 + $0x9c] sm:$0xf] %vm5500, %v5283
        %5541 = vst.msk [vmem:[%s265 + $0xa0] sm:$0xf] %vm5500, %v5284
        %5542 = vst.msk [vmem:[%s265 + $0xa4] sm:$0xf] %vm5500, %v5285
        %5543 = vst.msk [vmem:[%s265 + $0xa8] sm:$0xf] %vm5500, %v5286
        %5544 = vst.msk [vmem:[%s265 + $0xac] sm:$0xf] %vm5500, %v5287
        %5545 = vst.msk [vmem:[%s265 + $0xb0] sm:$0xf] %vm5500, %v5288
        %5546 = vst.msk [vmem:[%s265 + $0xb4] sm:$0xf] %vm5500, %v5289
        %5547 = vst.msk [vmem:[%s265 + $0xb8] sm:$0xf] %vm5500, %v5290
        %5548 = vst.msk [vmem:[%s265 + $0xbc] sm:$0xf] %vm5500, %v5291
        %5549 = vst.msk [vmem:[%s265 + $0xc0] sm:$0xf] %vm5500, %v5292
        %5550 = vst.msk [vmem:[%s265 + $0xc4] sm:$0xf] %vm5500, %v5293
        %5551 = vst.msk [vmem:[%s265 + $0xc8] sm:$0xf] %vm5500, %v5294
        %5552 = vst.msk [vmem:[%s265 + $0xcc] sm:$0xf] %vm5500, %v5295
        %5553 = vst.msk [vmem:[%s265 + $0xd0] sm:$0xf] %vm5500, %v5296
        %5554 = vst.msk [vmem:[%s265 + $0xd4] sm:$0xf] %vm5500, %v5297
        %5555 = vst.msk [vmem:[%s265 + $0xd8] sm:$0xf] %vm5500, %v5298
        %5556 = vst.msk [vmem:[%s265 + $0xdc] sm:$0xf] %vm5500, %v5299
        %5557 = vst.msk [vmem:[%s265 + $0xe0] sm:$0xf] %vm5500, %v5300
        %5558 = vst.msk [vmem:[%s265 + $0xe4] sm:$0xf] %vm5500, %v5301
        %5559 = vst.msk [vmem:[%s265 + $0xe8] sm:$0xf] %vm5500, %v5302
        %5560 = vst.msk [vmem:[%s265 + $0xec] sm:$0xf] %vm5500, %v5303
        %5561 = vst.msk [vmem:[%s265 + $0xf0] sm:$0xf] %vm5500, %v5304
        %5562 = vst.msk [vmem:[%s265 + $0xf4] sm:$0xf] %vm5500, %v5305
        %5563 = vst.msk [vmem:[%s265 + $0xf8] sm:$0xf] %vm5500, %v5306
        %5564 = vst.msk [vmem:[%s265 + $0xfc] sm:$0xf] %vm5500, %v5307
        %5565 = vst.msk [vmem:[%s265 + $0x100] sm:$0xf] %vm5500, %v5308
        %5566 = vst.msk [vmem:[%s265 + $0x104] sm:$0xf] %vm5500, %v5309
        %5567 = vst.msk [vmem:[%s265 + $0x108] sm:$0xf] %vm5500, %v5310
        %5568 = vst.msk [vmem:[%s265 + $0x10c] sm:$0xf] %vm5500, %v5311
        %5569 = vst.msk [vmem:[%s265 + $0x110] sm:$0xf] %vm5500, %v5312
        %5570 = vst.msk [vmem:[%s265 + $0x114] sm:$0xf] %vm5500, %v5313
        %5571 = vst.msk [vmem:[%s265 + $0x118] sm:$0xf] %vm5500, %v5314
        %5572 = vst.msk [vmem:[%s265 + $0x11c] sm:$0xf] %vm5500, %v5315
        %5573 = vst.msk [vmem:[%s265 + $0x120] sm:$0xf] %vm5500, %v5316
        %5574 = vst.msk [vmem:[%s265 + $0x124] sm:$0xf] %vm5500, %v5317
        %5575 = vst.msk [vmem:[%s265 + $0x128] sm:$0xf] %vm5500, %v5318
        %5576 = vst.msk [vmem:[%s265 + $0x12c] sm:$0xf] %vm5500, %v5319
        %5577 = vst.msk [vmem:[%s265 + $0x130] sm:$0xf] %vm5500, %v5320
        %5578 = vst.msk [vmem:[%s265 + $0x134] sm:$0xf] %vm5500, %v5321
        %5579 = vst.msk [vmem:[%s265 + $0x138] sm:$0xf] %vm5500, %v5322
        %5580 = vst.msk [vmem:[%s265 + $0x13c] sm:$0xf] %vm5500, %v5323
        %5581 = vst.msk [vmem:[%s265 + $0x140] sm:$0xf] %vm5500, %v5324
        %5582 = vst.msk [vmem:[%s265 + $0x144] sm:$0xf] %vm5500, %v5325
        %5583 = vst.msk [vmem:[%s265 + $0x148] sm:$0xf] %vm5500, %v5326
        %5584 = vst.msk [vmem:[%s265 + $0x14c] sm:$0xf] %vm5500, %v5327
        %5585 = vst.msk [vmem:[%s265 + $0x150] sm:$0xf] %vm5500, %v5328
        %5586 = vst.msk [vmem:[%s265 + $0x154] sm:$0xf] %vm5500, %v5329
        %5587 = vst.msk [vmem:[%s265 + $0x158] sm:$0xf] %vm5500, %v5330
        %5588 = vst.msk [vmem:[%s265 + $0x15c] sm:$0xf] %vm5500, %v5331
        %5589 = vst.msk [vmem:[%s265 + $0x160] sm:$0xf] %vm5500, %v5332
        %5590 = vst.msk [vmem:[%s265 + $0x164] sm:$0xf] %vm5500, %v5333
        %5591 = vst.msk [vmem:[%s265 + $0x168] sm:$0xf] %vm5500, %v5334
        %5592 = vst.msk [vmem:[%s265 + $0x16c] sm:$0xf] %vm5500, %v5335
        %5593 = vst.msk [vmem:[%s265 + $0x170] sm:$0xf] %vm5500, %v5336
        %5594 = vst.msk [vmem:[%s265 + $0x174] sm:$0xf] %vm5500, %v5337
        %5595 = vst.msk [vmem:[%s265 + $0x178] sm:$0xf] %vm5500, %v5338
        %5596 = vst.msk [vmem:[%s265 + $0x17c] sm:$0xf] %vm5500, %v5339
        %5597 = vst.msk [vmem:[%s265 + $0x180] sm:$0xf] %vm5500, %v5340
        %5598 = vst.msk [vmem:[%s265 + $0x184] sm:$0xf] %vm5500, %v5341
        %5599 = vst.msk [vmem:[%s265 + $0x188] sm:$0xf] %vm5500, %v5342
        %5600 = vst.msk [vmem:[%s265 + $0x18c] sm:$0xf] %vm5500, %v5343
        %5601 = vst.msk [vmem:[%s265 + $0x190] sm:$0xf] %vm5500, %v5344
        %5602 = vst.msk [vmem:[%s265 + $0x194] sm:$0xf] %vm5500, %v5345
        %5603 = vst.msk [vmem:[%s265 + $0x198] sm:$0xf] %vm5500, %v5346
        %5604 = vst.msk [vmem:[%s265 + $0x19c] sm:$0xf] %vm5500, %v5347
        %5605 = vst.msk [vmem:[%s265 + $0x1a0] sm:$0xf] %vm5500, %v5348
        %5606 = vst.msk [vmem:[%s265 + $0x1a4] sm:$0xf] %vm5500, %v5349
        %5607 = vst.msk [vmem:[%s265 + $0x1a8] sm:$0xf] %vm5500, %v5350
        %5608 = vst.msk [vmem:[%s265 + $0x1ac] sm:$0xf] %vm5500, %v5351
        %5609 = vst.msk [vmem:[%s265 + $0x1b0] sm:$0xf] %vm5500, %v5352
        %5610 = vst.msk [vmem:[%s265 + $0x1b4] sm:$0xf] %vm5500, %v5353
        %5611 = vst.msk [vmem:[%s265 + $0x1b8] sm:$0xf] %vm5500, %v5354
        %5612 = vst.msk [vmem:[%s265 + $0x1bc] sm:$0xf] %vm5500, %v5355
        %5613 = vst.msk [vmem:[%s265 + $0x1c0] sm:$0xf] %vm5500, %v5356
        %5614 = vst.msk [vmem:[%s265 + $0x1c4] sm:$0xf] %vm5500, %v5357
        %5615 = vst.msk [vmem:[%s265 + $0x1c8] sm:$0xf] %vm5500, %v5358
        %5616 = vst.msk [vmem:[%s265 + $0x1cc] sm:$0xf] %vm5500, %v5359
        %5617 = vst.msk [vmem:[%s265 + $0x1d0] sm:$0xf] %vm5500, %v5360
        %5618 = vst.msk [vmem:[%s265 + $0x1d4] sm:$0xf] %vm5500, %v5361
        %5619 = vst.msk [vmem:[%s265 + $0x1d8] sm:$0xf] %vm5500, %v5362
        %5620 = vst.msk [vmem:[%s265 + $0x1dc] sm:$0xf] %vm5500, %v5363
        %5621 = vst.msk [vmem:[%s265 + $0x1e0] sm:$0xf] %vm5500, %v5364
        %5622 = vst.msk [vmem:[%s265 + $0x1e4] sm:$0xf] %vm5500, %v5365
        %5623 = vst.msk [vmem:[%s265 + $0x1e8] sm:$0xf] %vm5500, %v5366
        %5624 = vst.msk [vmem:[%s265 + $0x1ec] sm:$0xf] %vm5500, %v5367
        %5625 = vst.msk [vmem:[%s265 + $0x1f0] sm:$0xf] %vm5500, %v5368
        %5626 = vst.msk [vmem:[%s265 + $0x1f4] sm:$0xf] %vm5500, %v5369
        %5627 = vst.msk [vmem:[%s265 + $0x1f8] sm:$0xf] %vm5500, %v5370
        %5628 = vst.msk [vmem:[%s265 + $0x1fc] sm:$0xf] %vm5500, %v5371
        %5629 = vst.msk [vmem:[%s265 + $0x200] sm:$0xf] %vm5500, %v5372
        %5630 = vst.msk [vmem:[%s265 + $0x204] sm:$0xf] %vm5500, %v5373
        %5631 = vst.msk [vmem:[%s265 + $0x208] sm:$0xf] %vm5500, %v5374
        %5632 = vst.msk [vmem:[%s265 + $0x20c] sm:$0xf] %vm5500, %v5375
        %5633 = vst.msk [vmem:[%s265 + $0x210] sm:$0xf] %vm5500, %v5376
        %5634 = vst.msk [vmem:[%s265 + $0x214] sm:$0xf] %vm5500, %v5377
        %5635 = vst.msk [vmem:[%s265 + $0x218] sm:$0xf] %vm5500, %v5378
        %5636 = vst.msk [vmem:[%s265 + $0x21c] sm:$0xf] %vm5500, %v5379
        %5637 = vst.msk [vmem:[%s265 + $0x220] sm:$0xf] %vm5500, %v5380
        %5638 = vst.msk [vmem:[%s265 + $0x224] sm:$0xf] %vm5500, %v5381
        %5639 = vst.msk [vmem:[%s265 + $0x228] sm:$0xf] %vm5500, %v5382
        %5640 = vst.msk [vmem:[%s265 + $0x22c] sm:$0xf] %vm5500, %v5383
        %5641 = vst.msk [vmem:[%s265 + $0x230] sm:$0xf] %vm5500, %v5384
        %5642 = vst.msk [vmem:[%s265 + $0x234] sm:$0xf] %vm5500, %v5385
        %5643 = vst.msk [vmem:[%s265 + $0x238] sm:$0xf] %vm5500, %v5386
        %5644 = vst.msk [vmem:[%s265 + $0x23c] sm:$0xf] %vm5500, %v5387
        %5645 = vst.msk [vmem:[%s265 + $0x240] sm:$0xf] %vm5500, %v5388
        %5646 = vst.msk [vmem:[%s265 + $0x244] sm:$0xf] %vm5500, %v5389
        %5647 = vst.msk [vmem:[%s265 + $0x248] sm:$0xf] %vm5500, %v5390
        %5648 = vst.msk [vmem:[%s265 + $0x24c] sm:$0xf] %vm5500, %v5391
        %5649 = vst.msk [vmem:[%s265 + $0x250] sm:$0xf] %vm5500, %v5392
        %5650 = vst.msk [vmem:[%s265 + $0x254] sm:$0xf] %vm5500, %v5393
        %5651 = vst.msk [vmem:[%s265 + $0x258] sm:$0xf] %vm5500, %v5394
        %5652 = vst.msk [vmem:[%s265 + $0x25c] sm:$0xf] %vm5500, %v5395
        %5653 = vst.msk [vmem:[%s265 + $0x260] sm:$0xf] %vm5500, %v5396
        %5654 = vst.msk [vmem:[%s265 + $0x264] sm:$0xf] %vm5500, %v5397
        %5655 = vst.msk [vmem:[%s265 + $0x268] sm:$0xf] %vm5500, %v5398
        %5656 = vst.msk [vmem:[%s265 + $0x26c] sm:$0xf] %vm5500, %v5399
        %5657 = vst.msk [vmem:[%s265 + $0x270] sm:$0xf] %vm5500, %v5400
        %5658 = vst.msk [vmem:[%s265 + $0x274] sm:$0xf] %vm5500, %v5401
        %5659 = vst.msk [vmem:[%s265 + $0x278] sm:$0xf] %vm5500, %v5402
        %5660 = vst.msk [vmem:[%s265 + $0x27c] sm:$0xf] %vm5500, %v5403
        %5661 = vst.msk [vmem:[%s265 + $0x280] sm:$0xf] %vm5500, %v5404
        %5662 = vst.msk [vmem:[%s265 + $0x284] sm:$0xf] %vm5500, %v5405
        %5663 = vst.msk [vmem:[%s265 + $0x288] sm:$0xf] %vm5500, %v5406
        %5664 = vst.msk [vmem:[%s265 + $0x28c] sm:$0xf] %vm5500, %v5407
        %5665 = vst.msk [vmem:[%s265 + $0x290] sm:$0xf] %vm5500, %v5408
        %5666 = vst.msk [vmem:[%s265 + $0x294] sm:$0xf] %vm5500, %v5409
        %5667 = vst.msk [vmem:[%s265 + $0x298] sm:$0xf] %vm5500, %v5410
        %5668 = vst.msk [vmem:[%s265 + $0x29c] sm:$0xf] %vm5500, %v5411
        %5669 = vst.msk [vmem:[%s265 + $0x2a0] sm:$0xf] %vm5500, %v5412
        %5670 = vst.msk [vmem:[%s265 + $0x2a4] sm:$0xf] %vm5500, %v5413
        %5671 = vst.msk [vmem:[%s265 + $0x2a8] sm:$0xf] %vm5500, %v5414
        %5672 = vst.msk [vmem:[%s265 + $0x2ac] sm:$0xf] %vm5500, %v5415
        %5673 = vst.msk [vmem:[%s265 + $0x2b0] sm:$0xf] %vm5500, %v5416
        %5674 = vst.msk [vmem:[%s265 + $0x2b4] sm:$0xf] %vm5500, %v5417
        %5675 = vst.msk [vmem:[%s265 + $0x2b8] sm:$0xf] %vm5500, %v5418
        %5676 = vst.msk [vmem:[%s265 + $0x2bc] sm:$0xf] %vm5500, %v5419
        %5677 = vst.msk [vmem:[%s265 + $0x2c0] sm:$0xf] %vm5500, %v5420
        %5678 = vst.msk [vmem:[%s265 + $0x2c4] sm:$0xf] %vm5500, %v5421
        %5679 = vst.msk [vmem:[%s265 + $0x2c8] sm:$0xf] %vm5500, %v5422
        %5680 = vst.msk [vmem:[%s265 + $0x2cc] sm:$0xf] %vm5500, %v5423
        %5681 = vst.msk [vmem:[%s265 + $0x2d0] sm:$0xf] %vm5500, %v5424
        %5682 = vst.msk [vmem:[%s265 + $0x2d4] sm:$0xf] %vm5500, %v5425
        %5683 = vst.msk [vmem:[%s265 + $0x2d8] sm:$0xf] %vm5500, %v5426
        %5684 = vst.msk [vmem:[%s265 + $0x2dc] sm:$0xf] %vm5500, %v5427
        %5685 = vst.msk [vmem:[%s265 + $0x2e0] sm:$0xf] %vm5500, %v5428
        %5686 = vst.msk [vmem:[%s265 + $0x2e4] sm:$0xf] %vm5500, %v5429
        %5687 = vst.msk [vmem:[%s265 + $0x2e8] sm:$0xf] %vm5500, %v5430
        %5688 = vst.msk [vmem:[%s265 + $0x2ec] sm:$0xf] %vm5500, %v5431
        %5689 = vst.msk [vmem:[%s265 + $0x2f0] sm:$0xf] %vm5500, %v5432
        %5690 = vst.msk [vmem:[%s265 + $0x2f4] sm:$0xf] %vm5500, %v5433
        %5691 = vst.msk [vmem:[%s265 + $0x2f8] sm:$0xf] %vm5500, %v5434
        %5692 = vst.msk [vmem:[%s265 + $0x2fc] sm:$0xf] %vm5500, %v5435
        %5693 = vst.msk [vmem:[%s265 + $0x300] sm:$0xf] %vm5500, %v5436
        %5694 = vst.msk [vmem:[%s265 + $0x304] sm:$0xf] %vm5500, %v5437
        %5695 = vst.msk [vmem:[%s265 + $0x308] sm:$0xf] %vm5500, %v5438
        %5696 = vst.msk [vmem:[%s265 + $0x30c] sm:$0xf] %vm5500, %v5439
        %5697 = vst.msk [vmem:[%s265 + $0x310] sm:$0xf] %vm5500, %v5440
        %5698 = vst.msk [vmem:[%s265 + $0x314] sm:$0xf] %vm5500, %v5441
        %5699 = vst.msk [vmem:[%s265 + $0x318] sm:$0xf] %vm5500, %v5442
        %5700 = vst.msk [vmem:[%s265 + $0x31c] sm:$0xf] %vm5500, %v5443
        %5701 = vst.msk [vmem:[%s265 + $0x320] sm:$0xf] %vm5500, %v5444
        %5702 = vst.msk [vmem:[%s265 + $0x324] sm:$0xf] %vm5500, %v5445
        %5703 = vst.msk [vmem:[%s265 + $0x328] sm:$0xf] %vm5500, %v5446
        %5704 = vst.msk [vmem:[%s265 + $0x32c] sm:$0xf] %vm5500, %v5447
        %5705 = vst.msk [vmem:[%s265 + $0x330] sm:$0xf] %vm5500, %v5448
        %5706 = vst.msk [vmem:[%s265 + $0x334] sm:$0xf] %vm5500, %v5449
        %5707 = vst.msk [vmem:[%s265 + $0x338] sm:$0xf] %vm5500, %v5450
        %5708 = vst.msk [vmem:[%s265 + $0x33c] sm:$0xf] %vm5500, %v5451
        %5709 = vst.msk [vmem:[%s265 + $0x340] sm:$0xf] %vm5500, %v5452
        %5710 = vst.msk [vmem:[%s265 + $0x344] sm:$0xf] %vm5500, %v5453
        %5711 = vst.msk [vmem:[%s265 + $0x348] sm:$0xf] %vm5500, %v5454
        %5712 = vst.msk [vmem:[%s265 + $0x34c] sm:$0xf] %vm5500, %v5455
        %5713 = vst.msk [vmem:[%s265 + $0x350] sm:$0xf] %vm5500, %v5456
        %5714 = vst.msk [vmem:[%s265 + $0x354] sm:$0xf] %vm5500, %v5457
        %5715 = vst.msk [vmem:[%s265 + $0x358] sm:$0xf] %vm5500, %v5458
        %5716 = vst.msk [vmem:[%s265 + $0x35c] sm:$0xf] %vm5500, %v5459
        %5717 = vst.msk [vmem:[%s265 + $0x360] sm:$0xf] %vm5500, %v5460
        %5718 = vst.msk [vmem:[%s265 + $0x364] sm:$0xf] %vm5500, %v5461
        %5719 = vst.msk [vmem:[%s265 + $0x368] sm:$0xf] %vm5500, %v5462
        %5720 = vst.msk [vmem:[%s265 + $0x36c] sm:$0xf] %vm5500, %v5463
        %5721 = vst.msk [vmem:[%s265 + $0x370] sm:$0xf] %vm5500, %v5464
        %5722 = vst.msk [vmem:[%s265 + $0x374] sm:$0xf] %vm5500, %v5465
        %5723 = vst.msk [vmem:[%s265 + $0x378] sm:$0xf] %vm5500, %v5466
        %5724 = vst.msk [vmem:[%s265 + $0x37c] sm:$0xf] %vm5500, %v5467
        %5725 = vst.msk [vmem:[%s265 + $0x380] sm:$0xf] %vm5500, %v5468
        %5726 = vst.msk [vmem:[%s265 + $0x384] sm:$0xf] %vm5500, %v5469
        %5727 = vst.msk [vmem:[%s265 + $0x388] sm:$0xf] %vm5500, %v5470
        %5728 = vst.msk [vmem:[%s265 + $0x38c] sm:$0xf] %vm5500, %v5471
        %5729 = vst.msk [vmem:[%s265 + $0x390] sm:$0xf] %vm5500, %v5472
        %5730 = vst.msk [vmem:[%s265 + $0x394] sm:$0xf] %vm5500, %v5473
        %5731 = vst.msk [vmem:[%s265 + $0x398] sm:$0xf] %vm5500, %v5474
        %5732 = vst.msk [vmem:[%s265 + $0x39c] sm:$0xf] %vm5500, %v5475
        %5733 = vst.msk [vmem:[%s265 + $0x3a0] sm:$0xf] %vm5500, %v5476
        %5734 = vst.msk [vmem:[%s265 + $0x3a4] sm:$0xf] %vm5500, %v5477
        %5735 = vst.msk [vmem:[%s265 + $0x3a8] sm:$0xf] %vm5500, %v5478
        %5736 = vst.msk [vmem:[%s265 + $0x3ac] sm:$0xf] %vm5500, %v5479
        %5737 = vst.msk [vmem:[%s265 + $0x3b0] sm:$0xf] %vm5500, %v5480
        %5738 = vst.msk [vmem:[%s265 + $0x3b4] sm:$0xf] %vm5500, %v5481
        %5739 = vst.msk [vmem:[%s265 + $0x3b8] sm:$0xf] %vm5500, %v5482
        %5740 = vst.msk [vmem:[%s265 + $0x3bc] sm:$0xf] %vm5500, %v5483
        %5741 = vst.msk [vmem:[%s265 + $0x3c0] sm:$0xf] %vm5500, %v5484
        %5742 = vst.msk [vmem:[%s265 + $0x3c4] sm:$0xf] %vm5500, %v5485
        %5743 = vst.msk [vmem:[%s265 + $0x3c8] sm:$0xf] %vm5500, %v5486
        %5744 = vst.msk [vmem:[%s265 + $0x3cc] sm:$0xf] %vm5500, %v5487
        %5745 = vst.msk [vmem:[%s265 + $0x3d0] sm:$0xf] %vm5500, %v5488
        %5746 = vst.msk [vmem:[%s265 + $0x3d4] sm:$0xf] %vm5500, %v5489
        %5747 = vst.msk [vmem:[%s265 + $0x3d8] sm:$0xf] %vm5500, %v5490
        %5748 = vst.msk [vmem:[%s265 + $0x3dc] sm:$0xf] %vm5500, %v5491
        %5749 = vst.msk [vmem:[%s265 + $0x3e0] sm:$0xf] %vm5500, %v5492
        %5750 = vst.msk [vmem:[%s265 + $0x3e4] sm:$0xf] %vm5500, %v5493
        %5751 = vst.msk [vmem:[%s265 + $0x3e8] sm:$0xf] %vm5500, %v5494
        %5752 = vst.msk [vmem:[%s265 + $0x3ec] sm:$0xf] %vm5500, %v5495
        %5753 = vst.msk [vmem:[%s265 + $0x3f0] sm:$0xf] %vm5500, %v5496
        %5754 = vst.msk [vmem:[%s265 + $0x3f4] sm:$0xf] %vm5500, %v5497
        %5755 = vst.msk [vmem:[%s265 + $0x3f8] sm:$0xf] %vm5500, %v5498
        %5756 = vst.msk [vmem:[%s265 + $0x3fc] sm:$0xf] %vm5500, %v5499
      $region40: #{fused_matmul.1} parent=31 // pred_fallthru
        _
      %s5757 = smul.u32 256, %s19
      %p5758 = scmp.lt.s32.totalorder %s5757, 4095
      %s5759 = scalar_select %p5758, %s5757, 4095
      %p5760 = scmp.lt.s32.totalorder %s20, 0
      %s5761 = scalar_select %p5760, %s20, 0
      %s5762 = sadd.s32 %s5761, %s5759
      %s5763 = smul.addr %s5762, 4
      %s5764 = scalar_lea.vmem %s3, %s5763
      // Predicated region
      $region41: #{fused_matmul.1} parent=31 // pred_check
        %p5765 = pneg %p135
      $region42: #{fused_matmul.1} parent=31 // pred_check_branch
        %5767 = sbr.rel (%p5765) target = $region44
      $region43: #{fused_matmul.1} parent=31 // pred_region
        %s5768 = smul.u32 256, %s19
      $region44: #{fused_matmul.1} parent=31 // pred_fallthru
        _
    $region32: #{fused_matmul.1} parent=5 // pred_fallthru
      _
    %p5769 = scmp.le.s32.totalorder 2, %s9
    // Predicated region
    $region45: #{fused_matmul.1} parent=5 // pred_check
      %p5770 = pneg %p5769
    $region46: #{fused_matmul.1} parent=5 // pred_check_branch
      %5772 = sbr.rel (%p5770) target = $region48
    $region47: #{fused_matmul.1} parent=5 // pred_region
      %s5773 = ssub.s32 %s9, 2
      // Predicated region
      $region49: #{fused_matmul.1} parent=47 // pred_check
        %p5774 = pneg %p141
      $region50: #{fused_matmul.1} parent=47 // pred_check_branch
        %5776 = sbr.rel (%p5774) target = $region52
      $region51: #{fused_matmul.1} parent=47 // pred_region
        %s5777 = smul.u32 256, %s22
        %p5778 = scmp.lt.s32.totalorder %s5777, 4095
        %s5779 = scalar_select %p5778, %s5777, 4095
        %p5780 = scmp.lt.s32.totalorder %s23, 0
        %s5781 = scalar_select %p5780, %s23, 0
        %s5782 = sadd.s32 %s5781, %s5779
        %s5783 = smul.addr %s5782, 4
        %s5784 = scalar_lea.vmem %s3, %s5783
      $region52: #{fused_matmul.1} parent=47 // pred_fallthru
        _
    $region48: #{fused_matmul.1} parent=5 // pred_fallthru
      _
  $region6: #{fused_matmul.1} parent=0 // loop_footer
    %s13 = sadd.s32 1, %s9
  $region7: #{fused_matmul.1} parent=0 // loop_footer_branch
    %8 = sbr.rel target = $region3
  $region8: #{fused_matmul.1} parent=0 // loop_exit
    _

</llo_original>
